<compile_context>
chip_gen: v7x
topology: tpu7x:2x2x1
jax: 0.10.0
libtpu: 0.0.40
codegen_flags: <defaults>
</compile_context>

<pallas_src>
import functools

import jax
import jax.numpy as jnp
from jax import lax
from jax.experimental import pallas as pl
from jax.experimental.pallas import tpu as pltpu

F32 = jnp.float32
BF16 = jnp.bfloat16


# ----------------------------------------------------------------------------
# helpers
# ----------------------------------------------------------------------------
def _dot(a, b):
    return jnp.dot(a, b, preferred_element_type=jnp.float32)


def _dot_t(a, b):
    # a^T @ b as a transposed contraction (no materialized transpose, MXU-native).
    return lax.dot_general(a, b, (((0,), (0,)), ((), ())),
                           preferred_element_type=jnp.float32)


def _block_index_map(nd, g):
    return (g,) + (0,) * (nd - 1)


def _shared_index_map(nd, g):
    return (0,) * nd


def _block_spec(block_shape):
    """Row-blocked slab: block index (g, 0, ...)."""
    return pl.BlockSpec(tuple(block_shape),
                        functools.partial(_block_index_map, len(block_shape)))


def _shared_spec(shape):
    """Whole-array block, same block every grid step (weights stay resident)."""
    return pl.BlockSpec(tuple(shape),
                        functools.partial(_shared_index_map, len(shape)))


# ----------------------------------------------------------------------------
# fused kernel: one grid step == Bt graphs, end-to-end
# ----------------------------------------------------------------------------
def _flowgat_kernel(x_ref, ea_ref, gsrc_ref, gdst_ref, pool_ref,
                    expand_ref, hmean_ref, *rest, num_layers):
    out_ref = rest[-1]
    hw1_ref, hb1_ref, hw2_ref, hb2_ref = rest[-5:-1]
    lrefs = rest[:-5]                      # 5 refs per layer: w, was, wad, wea, b

    gsrc = gsrc_ref[...]                   # [Eb, Nb] bf16 one-hot gather of source node
    gdst = gdst_ref[...]                   # [Eb, Nb] bf16 one-hot gather of destination node
    expand = expand_ref[...]               # [H, H*C] bf16: repeat head coeff across its C lanes
    hmean = hmean_ref[...]                 # [H*C, C] bf16: mean over heads (concat=False)
    eab = ea_ref[...].astype(BF16)         # [Eb, edge_dim] edge_attr * edge_weight
    x = x_ref[...]                         # [Nb, in_dim] f32 node features (Bt graphs stacked)

    for l in range(num_layers):
        w_ref, was_ref, wad_ref, wea_ref, b_ref = lrefs[5 * l: 5 * l + 5]
        xb = x.astype(BF16)
        h = _dot(xb, w_ref[...])                              # [Nb, H*C] projected nodes
        a_s = _dot(xb, was_ref[...])                          # [Nb, H] (= lin(x)*att_src, folded)
        a_d = _dot(xb, wad_ref[...])                          # [Nb, H] (= lin(x)*att_dst, folded)
        a_e = _dot(eab, wea_ref[...])                         # [Eb, H] (= lin_edge(ea)*att_edge)
        alpha = (_dot(gsrc, a_s.astype(BF16)) +               # alpha_src[j]
                 _dot(gdst, a_d.astype(BF16)) + a_e)          # + alpha_dst[i] + alpha_edge
        alpha = jnp.where(alpha > 0.0, alpha, 0.2 * alpha)    # LeakyReLU(0.2)

        # softmax over incoming edges per destination node (per head), shifted by the
        # per-head block-global max (shift-invariant).
        # TODO(synk): use a per-destination segment max if real logit ranges cause underflow.
        m = jnp.max(alpha, axis=0, keepdims=True)             # [1, H]
        p = jnp.exp(alpha - m)                                # [Eb, H]  (f32)
        denom_n = _dot_t(gdst, p.astype(BF16))                # [Nb, H]  gdst^T @ p (segment-sum)
        denom_e = _dot(gdst, denom_n.astype(BF16)) + 1e-16    # [Eb, H]  gathered per edge
        coeff = p / denom_e                                   # exact f32 divide (review item)

        hs = _dot(gsrc, h.astype(BF16))                       # [Eb, H*C] gathered source features
        msg = hs * _dot(coeff.astype(BF16), expand)           # [Eb, H*C] per-edge message
        agg = _dot_t(gdst, msg.astype(BF16))                  # [Nb, H*C] scatter-add by destination
        conv = _dot(agg.astype(BF16), hmean) + b_ref[...]     # mean over heads + bias -> [Nb, C]
        x = jnp.maximum(conv, 0.0)                            # F.relu; dropout = eval no-op

    # readout 'mean': per-graph mean pooling of the Bt stacked graphs (host-built weights)
    g = _dot(pool_ref[...], x)                                # [Bt, C]

    # mlps: Linear -> LeakyReLU(0.01) -> Linear -> log_softmax
    hid = _dot(g, hw1_ref[...]) + hb1_ref[...]
    hid = jnp.where(hid > 0.0, hid, 0.01 * hid)
    logits = _dot(hid, hw2_ref[...]) + hb2_ref[...]           # [Bt, out_dim]
    zmax = jnp.max(logits, axis=-1, keepdims=True)
    z = logits - zmax
    lse = jnp.log(jnp.sum(jnp.exp(z), axis=-1, keepdims=True))
    out_ref[...] = (z - lse).astype(out_ref.dtype)


# ----------------------------------------------------------------------------
# parameters (deterministic synthetic init; attention vectors folded on the host)
# ----------------------------------------------------------------------------
def _blockdiag_att(att):
    """att: [H, C] -> block-diagonal [H*C, H]: (h @ M)[:, k] = sum_c h[:, k*C+c]*att[k, c]."""
    H, C = att.shape
    m = jnp.zeros((H * C, H), F32)
    for h in range(H):
        m = m.at[h * C:(h + 1) * C, h].set(att[h])
    return m


def init_params(key, in_dim, hidden, edge_dim, out_dim, num_layers, heads, scale=0.1):
    H, C = heads, hidden
    keys = iter(jax.random.split(key, 8 * num_layers + 8))

    layers = []
    cur = in_dim
    for _ in range(num_layers):
        w = scale * jax.random.normal(next(keys), (cur, H * C), F32)        # lin (no bias)
        we = scale * jax.random.normal(next(keys), (edge_dim, H * C), F32)  # lin_edge (no bias)
        att_src = scale * jax.random.normal(next(keys), (H, C), F32)
        att_dst = scale * jax.random.normal(next(keys), (H, C), F32)
        att_edge = scale * jax.random.normal(next(keys), (H, C), F32)
        b = scale * jax.random.normal(next(keys), (1, C), F32)              # conv bias (concat=False)
        # fold attention vectors into the matmul weights (exact, associativity):
        was = w @ _blockdiag_att(att_src)                                   # [cur, H]
        wad = w @ _blockdiag_att(att_dst)                                   # [cur, H]
        wea = we @ _blockdiag_att(att_edge)                                 # [edge_dim, H]
        layers.append({"w": w.astype(BF16), "was": was.astype(BF16),
                       "wad": wad.astype(BF16), "wea": wea.astype(BF16), "b": b})
        cur = C

    params = {"layers": layers}
    # head-structure matmuls (constants): expand coeff [E,H]->[E,H*C]; mean over heads -> [C]
    params["expand"] = jnp.kron(jnp.eye(H, dtype=F32),
                                jnp.ones((1, C), F32)).astype(BF16)          # [H, H*C]
    params["head_mean"] = (jnp.tile(jnp.eye(C, dtype=F32), (H, 1)) /
                           float(H)).astype(BF16)                            # [H*C, C]
    # mlps head (tiny; kept f32)
    params["hw1"] = scale * jax.random.normal(next(keys), (C, C), F32)
    params["hb1"] = scale * jax.random.normal(next(keys), (1, C), F32)
    params["hw2"] = scale * jax.random.normal(next(keys), (C, out_dim), F32)
    params["hb2"] = scale * jax.random.normal(next(keys), (1, out_dim), F32)
    return params


# ----------------------------------------------------------------------------
# forward (FLOWGAT.forward, eval mode, readout='mean', graph_regression=False)
# ----------------------------------------------------------------------------
def flowgat_forward(params, x, edge_index, edge_attr, edge_weight, batch, *,
                    num_graphs, graphs_per_step):
    N, in_dim = x.shape
    E = edge_index.shape[1]
    B = num_graphs
    Bt = graphs_per_step
    assert B % Bt == 0 and N % B == 0 and E % B == 0, "synthetic batch assumes equal-size graphs"
    n_per = N // B
    e_per = E // B
    nb = Bt * n_per              # node rows per grid step (>= 128 fills the MXU sublanes)
    eb = Bt * e_per              # edge rows per grid step
    edge_dim = edge_attr.shape[1]
    out_dim = params["hw2"].shape[1]

    # GNNBase passes edge_attr * edge_weight[:, None] to each conv
    ea = (edge_attr * edge_weight[:, None]).astype(F32)

    # One-hot gather matrices with node indices LOCAL to each Bt-graph block.  Nodes and
    # edges are sorted by graph and message passing never crosses graphs, so the (eb, nb)
    # blocks are block-diagonal and stacking Bt graphs per step is exact.  Scatter-add uses
    # the SAME gdst via a transposed contraction inside the kernel (no sdst input).
    eblock = jnp.arange(E, dtype=jnp.int32) // eb
    src_local = edge_index[0].astype(jnp.int32) - eblock * nb
    dst_local = edge_index[1].astype(jnp.int32) - eblock * nb
    gsrc = jax.nn.one_hot(src_local, nb, dtype=BF16)      # [E, nb] (0/1 exact in bf16)
    gdst = jax.nn.one_hot(dst_local, nb, dtype=BF16)      # [E, nb]

    # per-graph mean-pool weights for the Bt graphs of one block (grid-invariant constant)
    pool = jnp.kron(jnp.eye(Bt, dtype=F32), jnp.full((1, n_per), 1.0 / n_per, F32))

    layer_flat = []
    for lp in params["layers"]:
        layer_flat += [lp["w"], lp["was"], lp["wad"], lp["wea"], lp["b"]]
    blocked_arrays = [x.astype(F32), ea, gsrc, gdst]
    blocked_shapes = [(nb, in_dim), (eb, edge_dim), (eb, nb), (eb, nb)]
    shared = ([pool, params["expand"], params["head_mean"]] + layer_flat +
              [params["hw1"], params["hb1"], params["hw2"], params["hb2"]])

    in_specs = ([_block_spec(bs) for bs in blocked_shapes] +
                [_shared_spec(a.shape) for a in shared])
    out_specs = _block_spec((Bt, out_dim))                 # sublane-dense (Bt rows) output slab

    kern = functools.partial(_flowgat_kernel, num_layers=len(params["layers"]))
    out = pl.pallas_call(
        kern,
        grid=(B // Bt,),
        in_specs=in_specs,
        out_specs=out_specs,
        out_shape=jax.ShapeDtypeStruct((B, out_dim), F32),
        compiler_params=pltpu.CompilerParams(
            dimension_semantics=("parallel",),             # v7x: shard Bt-graph blocks over 2 TCs
            vmem_limit_bytes=32 << 20),                    # explicit VMEM budget (tiny here;
                                                           # re-derive for large graphs on v7x)
    )(*blocked_arrays, *shared)
    return out


# ----------------------------------------------------------------------------
# pure-JAX reference (f32, exact per-destination softmax) for a numerical sanity check
# ----------------------------------------------------------------------------
def flowgat_reference(params, x, edge_index, edge_attr, edge_weight, *, num_graphs):
    ea = edge_attr * edge_weight[:, None]
    src, dst = edge_index[0], edge_index[1]
    N = x.shape[0]
    h = x.astype(F32)
    for lp in params["layers"]:
        w, was, wad, wea = (lp["w"].astype(F32), lp["was"].astype(F32),
                            lp["wad"].astype(F32), lp["wea"].astype(F32))
        H = was.shape[1]
        C = w.shape[1] // H
        proj = h @ w
        alpha = (h @ was)[src] + (h @ wad)[dst] + ea @ wea
        alpha = jnp.where(alpha > 0.0, alpha, 0.2 * alpha)
        m = jnp.full((N, H), -1e30, F32).at[dst].max(alpha)
        p = jnp.exp(alpha - m[dst])
        denom = jnp.zeros((N, H), F32).at[dst].add(p)
        coeff = p / denom[dst]
        msg = proj.reshape(N, H, C)[src] * coeff[:, :, None]
        agg = jnp.zeros((N, H, C), F32).at[dst].add(msg)
        h = jax.nn.relu(agg.mean(axis=1) + lp["b"])
    g = h.reshape(num_graphs, -1, h.shape[-1]).mean(axis=1)
    hid = g @ params["hw1"] + params["hb1"]
    hid = jnp.where(hid > 0.0, hid, 0.01 * hid)
    logits = hid @ params["hw2"] + params["hb2"]
    return jax.nn.log_softmax(logits, axis=-1)


# ----------------------------------------------------------------------------
# main
# ----------------------------------------------------------------------------
if __name__ == "__main__":
    B = 16           # graphs in batch
    Bt = 8           # graphs per grid step (sublane-stacked): 128 node rows / 256 edge rows
    n_per = 16       # nodes per graph (equal-size graphs)
    e_per = 32       # edges per graph
    N = B * n_per
    E = B * e_per
    in_dim = 4
    hidden = 32
    edge_dim = 3
    out_dim = 5
    num_layers = 2
    heads = 4        # model_params['heads']  (heads*hidden = 128 -> lane-dense MXU ops)

    root = jax.random.PRNGKey(0)
    kx, ksrc, kdst, kea, kparams = jax.random.split(root, 5)

    x = jax.random.normal(kx, (N, in_dim), F32)
    src = jax.random.randint(ksrc, (E,), 0, n_per)
    dst = jax.random.randint(kdst, (E,), 0, n_per)
    goff = jnp.repeat(jnp.arange(B, dtype=jnp.int32), e_per) * n_per
    edge_index = jnp.stack([src + goff, dst + goff], axis=0)     # [2, E] (sorted by graph)
    edge_attr = jax.random.normal(kea, (E, edge_dim), F32)
    edge_weight = jnp.ones((E,), F32)                            # GNNBase default
    batch = jnp.repeat(jnp.arange(B, dtype=jnp.int32), n_per)    # [N]

    params = init_params(kparams, in_dim, hidden, edge_dim, out_dim, num_layers, heads)

    out = flowgat_forward(params, x, edge_index, edge_attr, edge_weight, batch,
                          num_graphs=B, graphs_per_step=Bt)
    out = jax.block_until_ready(out)
    assert out.shape == (B, out_dim)
    assert bool(jnp.isfinite(out).all())

    ref = flowgat_reference(params, x, edge_index, edge_attr, edge_weight, num_graphs=B)
    assert bool(jnp.allclose(out, ref, atol=3e-2, rtol=3e-2)), "kernel vs f32 reference mismatch"

    print("KERNEL_OK")
</pallas_src>

<mosaic_0001>
module attributes {stable_mosaic.version = 11 : i64} {
  func.func @_flowgat_kernel(%arg0: i32, %arg1: memref<128x4xf32, #tpu.memory_space<vmem>>, %arg2: memref<256x3xf32, #tpu.memory_space<vmem>>, %arg3: memref<256x128xbf16, #tpu.memory_space<vmem>>, %arg4: memref<256x128xbf16, #tpu.memory_space<vmem>>, %arg5: memref<8x128xf32, #tpu.memory_space<vmem>>, %arg6: memref<4x128xbf16, #tpu.memory_space<vmem>>, %arg7: memref<128x32xbf16, #tpu.memory_space<vmem>>, %arg8: memref<4x128xbf16, #tpu.memory_space<vmem>>, %arg9: memref<4x4xbf16, #tpu.memory_space<vmem>>, %arg10: memref<4x4xbf16, #tpu.memory_space<vmem>>, %arg11: memref<3x4xbf16, #tpu.memory_space<vmem>>, %arg12: memref<1x32xf32, #tpu.memory_space<vmem>>, %arg13: memref<32x128xbf16, #tpu.memory_space<vmem>>, %arg14: memref<32x4xbf16, #tpu.memory_space<vmem>>, %arg15: memref<32x4xbf16, #tpu.memory_space<vmem>>, %arg16: memref<3x4xbf16, #tpu.memory_space<vmem>>, %arg17: memref<1x32xf32, #tpu.memory_space<vmem>>, %arg18: memref<32x32xf32, #tpu.memory_space<vmem>>, %arg19: memref<1x32xf32, #tpu.memory_space<vmem>>, %arg20: memref<32x5xf32, #tpu.memory_space<vmem>>, %arg21: memref<1x5xf32, #tpu.memory_space<vmem>>, %arg22: memref<8x5xf32, #tpu.memory_space<vmem>>) attributes {dimension_semantics = [#tpu.dimension_semantics<parallel>], iteration_bounds = array<i64: 2>, scalar_prefetch = 0 : i64, scratch_operands = 0 : i64, tpu.core_type = #tpu.core_type<tc>, window_params = [{transform_indices = @transform_0, window_bounds = array<i64: 128, 4>}, {transform_indices = @transform_1, window_bounds = array<i64: 256, 3>}, {transform_indices = @transform_2, window_bounds = array<i64: 256, 128>}, {transform_indices = @transform_3, window_bounds = array<i64: 256, 128>}, {pipeline_mode = #tpu.pipeline_mode<synchronous>, transform_indices = @transform_4, window_bounds = array<i64: 8, 128>}, {pipeline_mode = #tpu.pipeline_mode<synchronous>, transform_indices = @transform_5, window_bounds = array<i64: 4, 128>}, {pipeline_mode = #tpu.pipeline_mode<synchronous>, transform_indices = @transform_6, window_bounds = array<i64: 128, 32>}, {pipeline_mode = #tpu.pipeline_mode<synchronous>, transform_indices = @transform_7, window_bounds = array<i64: 4, 128>}, {pipeline_mode = #tpu.pipeline_mode<synchronous>, transform_indices = @transform_8, window_bounds = array<i64: 4, 4>}, {pipeline_mode = #tpu.pipeline_mode<synchronous>, transform_indices = @transform_9, window_bounds = array<i64: 4, 4>}, {pipeline_mode = #tpu.pipeline_mode<synchronous>, transform_indices = @transform_10, window_bounds = array<i64: 3, 4>}, {pipeline_mode = #tpu.pipeline_mode<synchronous>, transform_indices = @transform_11, window_bounds = array<i64: 1, 32>}, {pipeline_mode = #tpu.pipeline_mode<synchronous>, transform_indices = @transform_12, window_bounds = array<i64: 32, 128>}, {pipeline_mode = #tpu.pipeline_mode<synchronous>, transform_indices = @transform_13, window_bounds = array<i64: 32, 4>}, {pipeline_mode = #tpu.pipeline_mode<synchronous>, transform_indices = @transform_14, window_bounds = array<i64: 32, 4>}, {pipeline_mode = #tpu.pipeline_mode<synchronous>, transform_indices = @transform_15, window_bounds = array<i64: 3, 4>}, {pipeline_mode = #tpu.pipeline_mode<synchronous>, transform_indices = @transform_16, window_bounds = array<i64: 1, 32>}, {pipeline_mode = #tpu.pipeline_mode<synchronous>, transform_indices = @transform_17, window_bounds = array<i64: 32, 32>}, {pipeline_mode = #tpu.pipeline_mode<synchronous>, transform_indices = @transform_18, window_bounds = array<i64: 1, 32>}, {pipeline_mode = #tpu.pipeline_mode<synchronous>, transform_indices = @transform_19, window_bounds = array<i64: 32, 5>}, {pipeline_mode = #tpu.pipeline_mode<synchronous>, transform_indices = @transform_20, window_bounds = array<i64: 1, 5>}, {transform_indices = @transform_21, window_bounds = array<i64: 8, 5>}]} {
    %c0 = arith.constant 0 : index
    %c0_0 = arith.constant 0 : index
    %0 = vector.load %arg3[%c0, %c0_0] : memref<256x128xbf16, #tpu.memory_space<vmem>>, vector<256x128xbf16>
    %c0_1 = arith.constant 0 : index
    %c0_2 = arith.constant 0 : index
    %1 = vector.load %arg4[%c0_1, %c0_2] : memref<256x128xbf16, #tpu.memory_space<vmem>>, vector<256x128xbf16>
    %c0_3 = arith.constant 0 : index
    %c0_4 = arith.constant 0 : index
    %2 = vector.load %arg6[%c0_3, %c0_4] : memref<4x128xbf16, #tpu.memory_space<vmem>>, vector<4x128xbf16>
    %c0_5 = arith.constant 0 : index
    %c0_6 = arith.constant 0 : index
    %3 = vector.load %arg7[%c0_5, %c0_6] : memref<128x32xbf16, #tpu.memory_space<vmem>>, vector<128x32xbf16>
    %c0_7 = arith.constant 0 : index
    %c0_8 = arith.constant 0 : index
    %4 = vector.load %arg2[%c0_7, %c0_8] : memref<256x3xf32, #tpu.memory_space<vmem>>, vector<256x3xf32>
    %5 = arith.truncf %4 : vector<256x3xf32> to vector<256x3xbf16>
    %c0_9 = arith.constant 0 : index
    %c0_10 = arith.constant 0 : index
    %6 = vector.load %arg1[%c0_9, %c0_10] : memref<128x4xf32, #tpu.memory_space<vmem>>, vector<128x4xf32>
    %7 = arith.truncf %6 : vector<128x4xf32> to vector<128x4xbf16>
    %c0_11 = arith.constant 0 : index
    %c0_12 = arith.constant 0 : index
    %8 = vector.load %arg8[%c0_11, %c0_12] : memref<4x128xbf16, #tpu.memory_space<vmem>>, vector<4x128xbf16>
    %cst = arith.constant dense<0.000000e+00> : vector<128x128xf32>
    %9 = tpu.matmul %7, %8, %cst {dimension_numbers = #tpu.dot_dimension_numbers<[1], [0], [0], [1], [0, 0, 1, 1], [], []>} : vector<128x4xbf16>, vector<4x128xbf16>, vector<128x128xf32> -> vector<128x128xf32>
    %c0_13 = arith.constant 0 : index
    %c0_14 = arith.constant 0 : index
    %10 = vector.load %arg9[%c0_13, %c0_14] : memref<4x4xbf16, #tpu.memory_space<vmem>>, vector<4x4xbf16>
    %cst_15 = arith.constant dense<0.000000e+00> : vector<128x4xf32>
    %11 = tpu.matmul %7, %10, %cst_15 {dimension_numbers = #tpu.dot_dimension_numbers<[1], [0], [0], [1], [0, 0, 1, 1], [], []>} : vector<128x4xbf16>, vector<4x4xbf16>, vector<128x4xf32> -> vector<128x4xf32>
    %c0_16 = arith.constant 0 : index
    %c0_17 = arith.constant 0 : index
    %12 = vector.load %arg10[%c0_16, %c0_17] : memref<4x4xbf16, #tpu.memory_space<vmem>>, vector<4x4xbf16>
    %cst_18 = arith.constant dense<0.000000e+00> : vector<128x4xf32>
    %13 = tpu.matmul %7, %12, %cst_18 {dimension_numbers = #tpu.dot_dimension_numbers<[1], [0], [0], [1], [0, 0, 1, 1], [], []>} : vector<128x4xbf16>, vector<4x4xbf16>, vector<128x4xf32> -> vector<128x4xf32>
    %c0_19 = arith.constant 0 : index
    %c0_20 = arith.constant 0 : index
    %14 = vector.load %arg11[%c0_19, %c0_20] : memref<3x4xbf16, #tpu.memory_space<vmem>>, vector<3x4xbf16>
    %cst_21 = arith.constant dense<0.000000e+00> : vector<256x4xf32>
    %15 = tpu.matmul %5, %14, %cst_21 {dimension_numbers = #tpu.dot_dimension_numbers<[1], [0], [0], [1], [0, 0, 1, 1], [], []>} : vector<256x3xbf16>, vector<3x4xbf16>, vector<256x4xf32> -> vector<256x4xf32>
    %16 = arith.truncf %11 : vector<128x4xf32> to vector<128x4xbf16>
    %cst_22 = arith.constant dense<0.000000e+00> : vector<256x4xf32>
    %17 = tpu.matmul %0, %16, %cst_22 {dimension_numbers = #tpu.dot_dimension_numbers<[1], [0], [0], [1], [0, 0, 1, 1], [], []>} : vector<256x128xbf16>, vector<128x4xbf16>, vector<256x4xf32> -> vector<256x4xf32>
    %18 = arith.truncf %13 : vector<128x4xf32> to vector<128x4xbf16>
    %cst_23 = arith.constant dense<0.000000e+00> : vector<256x4xf32>
    %19 = tpu.matmul %1, %18, %cst_23 {dimension_numbers = #tpu.dot_dimension_numbers<[1], [0], [0], [1], [0, 0, 1, 1], [], []>} : vector<256x128xbf16>, vector<128x4xbf16>, vector<256x4xf32> -> vector<256x4xf32>
    %20 = arith.addf %17, %19 : vector<256x4xf32>
    %21 = arith.addf %20, %15 : vector<256x4xf32>
    %cst_24 = arith.constant 0.000000e+00 : f32
    %22 = vector.broadcast %cst_24 : f32 to vector<256x4xf32>
    %23 = arith.cmpf ogt, %21, %22 : vector<256x4xf32>
    %cst_25 = arith.constant 2.000000e-01 : f32
    %24 = vector.broadcast %cst_25 : f32 to vector<256x4xf32>
    %25 = arith.mulf %24, %21 : vector<256x4xf32>
    %26 = arith.select %23, %21, %25 : vector<256x4xi1>, vector<256x4xf32>
    %cst_26 = arith.constant dense<0xFF800000> : vector<4xf32>
    %27 = vector.multi_reduction <maximumf>, %26, %cst_26 [0] : vector<256x4xf32> to vector<4xf32>
    %28 = vector.shape_cast %27 : vector<4xf32> to vector<1x4xf32>
    %29 = vector.broadcast %28 : vector<1x4xf32> to vector<256x4xf32>
    %30 = arith.subf %26, %29 : vector<256x4xf32>
    %31 = math.exp %30 : vector<256x4xf32>
    %32 = arith.truncf %31 : vector<256x4xf32> to vector<256x4xbf16>
    %cst_27 = arith.constant dense<0.000000e+00> : vector<128x4xf32>
    %33 = tpu.matmul %1, %32, %cst_27 {dimension_numbers = #tpu.dot_dimension_numbers<[0], [0], [1], [1], [0, 1, 1, 1], [], []>} : vector<256x128xbf16>, vector<256x4xbf16>, vector<128x4xf32> -> vector<128x4xf32>
    %34 = arith.truncf %33 : vector<128x4xf32> to vector<128x4xbf16>
    %cst_28 = arith.constant dense<0.000000e+00> : vector<256x4xf32>
    %35 = tpu.matmul %1, %34, %cst_28 {dimension_numbers = #tpu.dot_dimension_numbers<[1], [0], [0], [1], [0, 0, 1, 1], [], []>} : vector<256x128xbf16>, vector<128x4xbf16>, vector<256x4xf32> -> vector<256x4xf32>
    %cst_29 = arith.constant 1.000000e-16 : f32
    %36 = vector.broadcast %cst_29 : f32 to vector<256x4xf32>
    %37 = arith.addf %35, %36 : vector<256x4xf32>
    %38 = arith.divf %31, %37 : vector<256x4xf32>
    %39 = arith.truncf %9 : vector<128x128xf32> to vector<128x128xbf16>
    %cst_30 = arith.constant dense<0.000000e+00> : vector<256x128xf32>
    %40 = tpu.matmul %0, %39, %cst_30 {dimension_numbers = #tpu.dot_dimension_numbers<[1], [0], [0], [1], [0, 0, 1, 1], [], []>} : vector<256x128xbf16>, vector<128x128xbf16>, vector<256x128xf32> -> vector<256x128xf32>
    %41 = arith.truncf %38 : vector<256x4xf32> to vector<256x4xbf16>
    %cst_31 = arith.constant dense<0.000000e+00> : vector<256x128xf32>
    %42 = tpu.matmul %41, %2, %cst_31 {dimension_numbers = #tpu.dot_dimension_numbers<[1], [0], [0], [1], [0, 0, 1, 1], [], []>} : vector<256x4xbf16>, vector<4x128xbf16>, vector<256x128xf32> -> vector<256x128xf32>
    %43 = arith.mulf %40, %42 : vector<256x128xf32>
    %44 = arith.truncf %43 : vector<256x128xf32> to vector<256x128xbf16>
    %cst_32 = arith.constant dense<0.000000e+00> : vector<128x128xf32>
    %45 = tpu.matmul %1, %44, %cst_32 {dimension_numbers = #tpu.dot_dimension_numbers<[0], [0], [1], [1], [0, 1, 1, 1], [], []>} : vector<256x128xbf16>, vector<256x128xbf16>, vector<128x128xf32> -> vector<128x128xf32>
    %46 = arith.truncf %45 : vector<128x128xf32> to vector<128x128xbf16>
    %cst_33 = arith.constant dense<0.000000e+00> : vector<128x32xf32>
    %47 = tpu.matmul %46, %3, %cst_33 {dimension_numbers = #tpu.dot_dimension_numbers<[1], [0], [0], [1], [0, 0, 1, 1], [], []>} : vector<128x128xbf16>, vector<128x32xbf16>, vector<128x32xf32> -> vector<128x32xf32>
    %c0_34 = arith.constant 0 : index
    %c0_35 = arith.constant 0 : index
    %48 = vector.load %arg12[%c0_34, %c0_35] : memref<1x32xf32, #tpu.memory_space<vmem>>, vector<1x32xf32>
    %49 = vector.broadcast %48 : vector<1x32xf32> to vector<128x32xf32>
    %50 = arith.addf %47, %49 : vector<128x32xf32>
    %cst_36 = arith.constant 0.000000e+00 : f32
    %51 = vector.broadcast %cst_36 : f32 to vector<128x32xf32>
    %52 = arith.maximumf %50, %51 : vector<128x32xf32>
    %53 = arith.truncf %52 : vector<128x32xf32> to vector<128x32xbf16>
    %c0_37 = arith.constant 0 : index
    %c0_38 = arith.constant 0 : index
    %54 = vector.load %arg13[%c0_37, %c0_38] : memref<32x128xbf16, #tpu.memory_space<vmem>>, vector<32x128xbf16>
    %cst_39 = arith.constant dense<0.000000e+00> : vector<128x128xf32>
    %55 = tpu.matmul %53, %54, %cst_39 {dimension_numbers = #tpu.dot_dimension_numbers<[1], [0], [0], [1], [0, 0, 1, 1], [], []>} : vector<128x32xbf16>, vector<32x128xbf16>, vector<128x128xf32> -> vector<128x128xf32>
    %c0_40 = arith.constant 0 : index
    %c0_41 = arith.constant 0 : index
    %56 = vector.load %arg14[%c0_40, %c0_41] : memref<32x4xbf16, #tpu.memory_space<vmem>>, vector<32x4xbf16>
    %cst_42 = arith.constant dense<0.000000e+00> : vector<128x4xf32>
    %57 = tpu.matmul %53, %56, %cst_42 {dimension_numbers = #tpu.dot_dimension_numbers<[1], [0], [0], [1], [0, 0, 1, 1], [], []>} : vector<128x32xbf16>, vector<32x4xbf16>, vector<128x4xf32> -> vector<128x4xf32>
    %c0_43 = arith.constant 0 : index
    %c0_44 = arith.constant 0 : index
    %58 = vector.load %arg15[%c0_43, %c0_44] : memref<32x4xbf16, #tpu.memory_space<vmem>>, vector<32x4xbf16>
    %cst_45 = arith.constant dense<0.000000e+00> : vector<128x4xf32>
    %59 = tpu.matmul %53, %58, %cst_45 {dimension_numbers = #tpu.dot_dimension_numbers<[1], [0], [0], [1], [0, 0, 1, 1], [], []>} : vector<128x32xbf16>, vector<32x4xbf16>, vector<128x4xf32> -> vector<128x4xf32>
    %c0_46 = arith.constant 0 : index
    %c0_47 = arith.constant 0 : index
    %60 = vector.load %arg16[%c0_46, %c0_47] : memref<3x4xbf16, #tpu.memory_space<vmem>>, vector<3x4xbf16>
    %cst_48 = arith.constant dense<0.000000e+00> : vector<256x4xf32>
    %61 = tpu.matmul %5, %60, %cst_48 {dimension_numbers = #tpu.dot_dimension_numbers<[1], [0], [0], [1], [0, 0, 1, 1], [], []>} : vector<256x3xbf16>, vector<3x4xbf16>, vector<256x4xf32> -> vector<256x4xf32>
    %62 = arith.truncf %57 : vector<128x4xf32> to vector<128x4xbf16>
    %cst_49 = arith.constant dense<0.000000e+00> : vector<256x4xf32>
    %63 = tpu.matmul %0, %62, %cst_49 {dimension_numbers = #tpu.dot_dimension_numbers<[1], [0], [0], [1], [0, 0, 1, 1], [], []>} : vector<256x128xbf16>, vector<128x4xbf16>, vector<256x4xf32> -> vector<256x4xf32>
    %64 = arith.truncf %59 : vector<128x4xf32> to vector<128x4xbf16>
    %cst_50 = arith.constant dense<0.000000e+00> : vector<256x4xf32>
    %65 = tpu.matmul %1, %64, %cst_50 {dimension_numbers = #tpu.dot_dimension_numbers<[1], [0], [0], [1], [0, 0, 1, 1], [], []>} : vector<256x128xbf16>, vector<128x4xbf16>, vector<256x4xf32> -> vector<256x4xf32>
    %66 = arith.addf %63, %65 : vector<256x4xf32>
    %67 = arith.addf %66, %61 : vector<256x4xf32>
    %cst_51 = arith.constant 0.000000e+00 : f32
    %68 = vector.broadcast %cst_51 : f32 to vector<256x4xf32>
    %69 = arith.cmpf ogt, %67, %68 : vector<256x4xf32>
    %cst_52 = arith.constant 2.000000e-01 : f32
    %70 = vector.broadcast %cst_52 : f32 to vector<256x4xf32>
    %71 = arith.mulf %70, %67 : vector<256x4xf32>
    %72 = arith.select %69, %67, %71 : vector<256x4xi1>, vector<256x4xf32>
    %cst_53 = arith.constant dense<0xFF800000> : vector<4xf32>
    %73 = vector.multi_reduction <maximumf>, %72, %cst_53 [0] : vector<256x4xf32> to vector<4xf32>
    %74 = vector.shape_cast %73 : vector<4xf32> to vector<1x4xf32>
    %75 = vector.broadcast %74 : vector<1x4xf32> to vector<256x4xf32>
    %76 = arith.subf %72, %75 : vector<256x4xf32>
    %77 = math.exp %76 : vector<256x4xf32>
    %78 = arith.truncf %77 : vector<256x4xf32> to vector<256x4xbf16>
    %cst_54 = arith.constant dense<0.000000e+00> : vector<128x4xf32>
    %79 = tpu.matmul %1, %78, %cst_54 {dimension_numbers = #tpu.dot_dimension_numbers<[0], [0], [1], [1], [0, 1, 1, 1], [], []>} : vector<256x128xbf16>, vector<256x4xbf16>, vector<128x4xf32> -> vector<128x4xf32>
    %80 = arith.truncf %79 : vector<128x4xf32> to vector<128x4xbf16>
    %cst_55 = arith.constant dense<0.000000e+00> : vector<256x4xf32>
    %81 = tpu.matmul %1, %80, %cst_55 {dimension_numbers = #tpu.dot_dimension_numbers<[1], [0], [0], [1], [0, 0, 1, 1], [], []>} : vector<256x128xbf16>, vector<128x4xbf16>, vector<256x4xf32> -> vector<256x4xf32>
    %cst_56 = arith.constant 1.000000e-16 : f32
    %82 = vector.broadcast %cst_56 : f32 to vector<256x4xf32>
    %83 = arith.addf %81, %82 : vector<256x4xf32>
    %84 = arith.divf %77, %83 : vector<256x4xf32>
    %85 = arith.truncf %55 : vector<128x128xf32> to vector<128x128xbf16>
    %cst_57 = arith.constant dense<0.000000e+00> : vector<256x128xf32>
    %86 = tpu.matmul %0, %85, %cst_57 {dimension_numbers = #tpu.dot_dimension_numbers<[1], [0], [0], [1], [0, 0, 1, 1], [], []>} : vector<256x128xbf16>, vector<128x128xbf16>, vector<256x128xf32> -> vector<256x128xf32>
    %87 = arith.truncf %84 : vector<256x4xf32> to vector<256x4xbf16>
    %cst_58 = arith.constant dense<0.000000e+00> : vector<256x128xf32>
    %88 = tpu.matmul %87, %2, %cst_58 {dimension_numbers = #tpu.dot_dimension_numbers<[1], [0], [0], [1], [0, 0, 1, 1], [], []>} : vector<256x4xbf16>, vector<4x128xbf16>, vector<256x128xf32> -> vector<256x128xf32>
    %89 = arith.mulf %86, %88 : vector<256x128xf32>
    %90 = arith.truncf %89 : vector<256x128xf32> to vector<256x128xbf16>
    %cst_59 = arith.constant dense<0.000000e+00> : vector<128x128xf32>
    %91 = tpu.matmul %1, %90, %cst_59 {dimension_numbers = #tpu.dot_dimension_numbers<[0], [0], [1], [1], [0, 1, 1, 1], [], []>} : vector<256x128xbf16>, vector<256x128xbf16>, vector<128x128xf32> -> vector<128x128xf32>
    %92 = arith.truncf %91 : vector<128x128xf32> to vector<128x128xbf16>
    %cst_60 = arith.constant dense<0.000000e+00> : vector<128x32xf32>
    %93 = tpu.matmul %92, %3, %cst_60 {dimension_numbers = #tpu.dot_dimension_numbers<[1], [0], [0], [1], [0, 0, 1, 1], [], []>} : vector<128x128xbf16>, vector<128x32xbf16>, vector<128x32xf32> -> vector<128x32xf32>
    %c0_61 = arith.constant 0 : index
    %c0_62 = arith.constant 0 : index
    %94 = vector.load %arg17[%c0_61, %c0_62] : memref<1x32xf32, #tpu.memory_space<vmem>>, vector<1x32xf32>
    %95 = vector.broadcast %94 : vector<1x32xf32> to vector<128x32xf32>
    %96 = arith.addf %93, %95 : vector<128x32xf32>
    %cst_63 = arith.constant 0.000000e+00 : f32
    %97 = vector.broadcast %cst_63 : f32 to vector<128x32xf32>
    %98 = arith.maximumf %96, %97 : vector<128x32xf32>
    %c0_64 = arith.constant 0 : index
    %c0_65 = arith.constant 0 : index
    %99 = vector.load %arg5[%c0_64, %c0_65] : memref<8x128xf32, #tpu.memory_space<vmem>>, vector<8x128xf32>
    %cst_66 = arith.constant dense<0.000000e+00> : vector<8x32xf32>
    %100 = tpu.matmul %99, %98, %cst_66 {dimension_numbers = #tpu.dot_dimension_numbers<[1], [0], [0], [1], [0, 0, 1, 1], [], []>} : vector<8x128xf32>, vector<128x32xf32>, vector<8x32xf32> -> vector<8x32xf32>
    %c0_67 = arith.constant 0 : index
    %c0_68 = arith.constant 0 : index
    %101 = vector.load %arg18[%c0_67, %c0_68] : memref<32x32xf32, #tpu.memory_space<vmem>>, vector<32x32xf32>
    %cst_69 = arith.constant dense<0.000000e+00> : vector<8x32xf32>
    %102 = tpu.matmul %100, %101, %cst_69 {dimension_numbers = #tpu.dot_dimension_numbers<[1], [0], [0], [1], [0, 0, 1, 1], [], []>} : vector<8x32xf32>, vector<32x32xf32>, vector<8x32xf32> -> vector<8x32xf32>
    %c0_70 = arith.constant 0 : index
    %c0_71 = arith.constant 0 : index
    %103 = vector.load %arg19[%c0_70, %c0_71] : memref<1x32xf32, #tpu.memory_space<vmem>>, vector<1x32xf32>
    %104 = vector.broadcast %103 : vector<1x32xf32> to vector<8x32xf32>
    %105 = arith.addf %102, %104 : vector<8x32xf32>
    %cst_72 = arith.constant 0.000000e+00 : f32
    %106 = vector.broadcast %cst_72 : f32 to vector<8x32xf32>
    %107 = arith.cmpf ogt, %105, %106 : vector<8x32xf32>
    %cst_73 = arith.constant 0.00999999977 : f32
    %108 = vector.broadcast %cst_73 : f32 to vector<8x32xf32>
    %109 = arith.mulf %108, %105 : vector<8x32xf32>
    %110 = arith.select %107, %105, %109 : vector<8x32xi1>, vector<8x32xf32>
    %c0_74 = arith.constant 0 : index
    %c0_75 = arith.constant 0 : index
    %111 = vector.load %arg20[%c0_74, %c0_75] : memref<32x5xf32, #tpu.memory_space<vmem>>, vector<32x5xf32>
    %cst_76 = arith.constant dense<0.000000e+00> : vector<8x5xf32>
    %112 = tpu.matmul %110, %111, %cst_76 {dimension_numbers = #tpu.dot_dimension_numbers<[1], [0], [0], [1], [0, 0, 1, 1], [], []>} : vector<8x32xf32>, vector<32x5xf32>, vector<8x5xf32> -> vector<8x5xf32>
    %c0_77 = arith.constant 0 : index
    %c0_78 = arith.constant 0 : index
    %113 = vector.load %arg21[%c0_77, %c0_78] : memref<1x5xf32, #tpu.memory_space<vmem>>, vector<1x5xf32>
    %114 = vector.broadcast %113 : vector<1x5xf32> to vector<8x5xf32>
    %115 = arith.addf %112, %114 : vector<8x5xf32>
    %cst_79 = arith.constant dense<0xFF800000> : vector<8xf32>
    %116 = vector.multi_reduction <maximumf>, %115, %cst_79 [1] : vector<8x5xf32> to vector<8xf32>
    %117 = vector.shape_cast %116 : vector<8xf32> to vector<8x1xf32>
    %118 = vector.broadcast %117 : vector<8x1xf32> to vector<8x5xf32>
    %119 = arith.subf %115, %118 : vector<8x5xf32>
    %120 = math.exp %119 : vector<8x5xf32>
    %cst_80 = arith.constant dense<0.000000e+00> : vector<8xf32>
    %121 = vector.multi_reduction <add>, %120, %cst_80 [1] : vector<8x5xf32> to vector<8xf32>
    %122 = vector.shape_cast %121 : vector<8xf32> to vector<8x1xf32>
    %123 = math.log %122 : vector<8x1xf32>
    %124 = vector.broadcast %123 : vector<8x1xf32> to vector<8x5xf32>
    %125 = arith.subf %119, %124 : vector<8x5xf32>
    %c0_81 = arith.constant 0 : index
    %c0_82 = arith.constant 0 : index
    %126 = vector.load %arg22[%c0_81, %c0_82] : memref<8x5xf32, #tpu.memory_space<vmem>>, vector<8x5xf32>
    tpu.vector_store %arg22[%c0_81, %c0_82], %125 {strides = array<i32>} : memref<8x5xf32, #tpu.memory_space<vmem>>, vector<8x5xf32>,
    return
  }
  func.func @transform_0(%arg0: i32) -> (i32, i32) {
    %c0_i32 = arith.constant 0 : i32
    %c0_i32_0 = arith.constant 0 : i32
    return %arg0, %c0_i32 : i32, i32
  }
  func.func @transform_1(%arg0: i32) -> (i32, i32) {
    %c0_i32 = arith.constant 0 : i32
    %c0_i32_0 = arith.constant 0 : i32
    return %arg0, %c0_i32 : i32, i32
  }
  func.func @transform_2(%arg0: i32) -> (i32, i32) {
    %c0_i32 = arith.constant 0 : i32
    %c0_i32_0 = arith.constant 0 : i32
    return %arg0, %c0_i32 : i32, i32
  }
  func.func @transform_3(%arg0: i32) -> (i32, i32) {
    %c0_i32 = arith.constant 0 : i32
    %c0_i32_0 = arith.constant 0 : i32
    return %arg0, %c0_i32 : i32, i32
  }
  func.func @transform_4(%arg0: i32) -> (i32, i32) {
    %c0_i32 = arith.constant 0 : i32
    %c0_i32_0 = arith.constant 0 : i32
    %c0_i32_1 = arith.constant 0 : i32
    return %c0_i32, %c0_i32_0 : i32, i32
  }
  func.func @transform_5(%arg0: i32) -> (i32, i32) {
    %c0_i32 = arith.constant 0 : i32
    %c0_i32_0 = arith.constant 0 : i32
    %c0_i32_1 = arith.constant 0 : i32
    return %c0_i32, %c0_i32_0 : i32, i32
  }
  func.func @transform_6(%arg0: i32) -> (i32, i32) {
    %c0_i32 = arith.constant 0 : i32
    %c0_i32_0 = arith.constant 0 : i32
    %c0_i32_1 = arith.constant 0 : i32
    return %c0_i32, %c0_i32_0 : i32, i32
  }
  func.func @transform_7(%arg0: i32) -> (i32, i32) {
    %c0_i32 = arith.constant 0 : i32
    %c0_i32_0 = arith.constant 0 : i32
    %c0_i32_1 = arith.constant 0 : i32
    return %c0_i32, %c0_i32_0 : i32, i32
  }
  func.func @transform_8(%arg0: i32) -> (i32, i32) {
    %c0_i32 = arith.constant 0 : i32
    %c0_i32_0 = arith.constant 0 : i32
    %c0_i32_1 = arith.constant 0 : i32
    return %c0_i32, %c0_i32_0 : i32, i32
  }
  func.func @transform_9(%arg0: i32) -> (i32, i32) {
    %c0_i32 = arith.constant 0 : i32
    %c0_i32_0 = arith.constant 0 : i32
    %c0_i32_1 = arith.constant 0 : i32
    return %c0_i32, %c0_i32_0 : i32, i32
  }
  func.func @transform_10(%arg0: i32) -> (i32, i32) {
    %c0_i32 = arith.constant 0 : i32
    %c0_i32_0 = arith.constant 0 : i32
    %c0_i32_1 = arith.constant 0 : i32
    return %c0_i32, %c0_i32_0 : i32, i32
  }
  func.func @transform_11(%arg0: i32) -> (i32, i32) {
    %c0_i32 = arith.constant 0 : i32
    %c0_i32_0 = arith.constant 0 : i32
    %c0_i32_1 = arith.constant 0 : i32
    return %c0_i32, %c0_i32_0 : i32, i32
  }
  func.func @transform_12(%arg0: i32) -> (i32, i32) {
    %c0_i32 = arith.constant 0 : i32
    %c0_i32_0 = arith.constant 0 : i32
    %c0_i32_1 = arith.constant 0 : i32
    return %c0_i32, %c0_i32_0 : i32, i32
  }
  func.func @transform_13(%arg0: i32) -> (i32, i32) {
    %c0_i32 = arith.constant 0 : i32
    %c0_i32_0 = arith.constant 0 : i32
    %c0_i32_1 = arith.constant 0 : i32
    return %c0_i32, %c0_i32_0 : i32, i32
  }
  func.func @transform_14(%arg0: i32) -> (i32, i32) {
    %c0_i32 = arith.constant 0 : i32
    %c0_i32_0 = arith.constant 0 : i32
    %c0_i32_1 = arith.constant 0 : i32
    return %c0_i32, %c0_i32_0 : i32, i32
  }
  func.func @transform_15(%arg0: i32) -> (i32, i32) {
    %c0_i32 = arith.constant 0 : i32
    %c0_i32_0 = arith.constant 0 : i32
    %c0_i32_1 = arith.constant 0 : i32
    return %c0_i32, %c0_i32_0 : i32, i32
  }
  func.func @transform_16(%arg0: i32) -> (i32, i32) {
    %c0_i32 = arith.constant 0 : i32
    %c0_i32_0 = arith.constant 0 : i32
    %c0_i32_1 = arith.constant 0 : i32
    return %c0_i32, %c0_i32_0 : i32, i32
  }
  func.func @transform_17(%arg0: i32) -> (i32, i32) {
    %c0_i32 = arith.constant 0 : i32
    %c0_i32_0 = arith.constant 0 : i32
    %c0_i32_1 = arith.constant 0 : i32
    return %c0_i32, %c0_i32_0 : i32, i32
  }
  func.func @transform_18(%arg0: i32) -> (i32, i32) {
    %c0_i32 = arith.constant 0 : i32
    %c0_i32_0 = arith.constant 0 : i32
    %c0_i32_1 = arith.constant 0 : i32
    return %c0_i32, %c0_i32_0 : i32, i32
  }
  func.func @transform_19(%arg0: i32) -> (i32, i32) {
    %c0_i32 = arith.constant 0 : i32
    %c0_i32_0 = arith.constant 0 : i32
    %c0_i32_1 = arith.constant 0 : i32
    return %c0_i32, %c0_i32_0 : i32, i32
  }
  func.func @transform_20(%arg0: i32) -> (i32, i32) {
    %c0_i32 = arith.constant 0 : i32
    %c0_i32_0 = arith.constant 0 : i32
    %c0_i32_1 = arith.constant 0 : i32
    return %c0_i32, %c0_i32_0 : i32, i32
  }
  func.func @transform_21(%arg0: i32) -> (i32, i32) {
    %c0_i32 = arith.constant 0 : i32
    %c0_i32_0 = arith.constant 0 : i32
    return %arg0, %c0_i32 : i32, i32
  }
}

</mosaic_0001>

<llo_original>
// kernel: tpu_custom_call.1
$region0: #{tpu_custom_call.1}
  #allocation0 [shape = 'u32[]', space=smem, size = 0x4, offset = 0x4, fixed_abs, tag = 'smem constant byte address 0x4 - core index']
  #allocation1 [shape = 'u32[144,128]{1,0:T(1,128)}', space=vmem, size = 0x12000, scoped, tag = 'internal scratch']
  %s0 = inlined_call_operand.vmem [shape: f32[256,4], index: 0, kind: input, shape index: {}]
  %s1 = inlined_call_operand.vmem [shape: f32[512,3], index: 1, kind: input, shape index: {}]
  %s2 = inlined_call_operand.vmem [shape: bf16[512,128], index: 2, kind: input, shape index: {}]
  %s3 = inlined_call_operand.vmem [shape: bf16[512,128], index: 3, kind: input, shape index: {}]
  %s4 = inlined_call_operand.vmem [shape: f32[8,128], index: 4, kind: input, shape index: {}]
  %s5 = inlined_call_operand.vmem [shape: bf16[4,128], index: 5, kind: input, shape index: {}]
  %s6 = inlined_call_operand.vmem [shape: bf16[128,32], index: 6, kind: input, shape index: {}]
  %s7 = inlined_call_operand.vmem [shape: bf16[4,128], index: 7, kind: input, shape index: {}]
  %s8 = inlined_call_operand.vmem [shape: bf16[4,4], index: 8, kind: input, shape index: {}]
  %s9 = inlined_call_operand.vmem [shape: bf16[4,4], index: 9, kind: input, shape index: {}]
  %s10 = inlined_call_operand.vmem [shape: bf16[3,4], index: 10, kind: input, shape index: {}]
  %s11 = inlined_call_operand.vmem [shape: f32[1,32], index: 11, kind: input, shape index: {}]
  %s12 = inlined_call_operand.vmem [shape: bf16[32,128], index: 12, kind: input, shape index: {}]
  %s13 = inlined_call_operand.vmem [shape: bf16[32,4], index: 13, kind: input, shape index: {}]
  %s14 = inlined_call_operand.vmem [shape: bf16[32,4], index: 14, kind: input, shape index: {}]
  %s15 = inlined_call_operand.vmem [shape: bf16[3,4], index: 15, kind: input, shape index: {}]
  %s16 = inlined_call_operand.vmem [shape: f32[1,32], index: 16, kind: input, shape index: {}]
  %s17 = inlined_call_operand.vmem [shape: f32[32,32], index: 17, kind: input, shape index: {}]
  %s18 = inlined_call_operand.vmem [shape: f32[1,32], index: 18, kind: input, shape index: {}]
  %s19 = inlined_call_operand.vmem [shape: f32[32,5], index: 19, kind: input, shape index: {}]
  %s20 = inlined_call_operand.vmem [shape: f32[1,5], index: 20, kind: input, shape index: {}]
  %s21 = inlined_call_operand.vmem [shape: f32[16,5], index: 21, kind: output, shape index: {}]
  %s22 = sld [smem:[#allocation0]]
  $region117: #{tpu_custom_call.1} parent=0
    _
  %s24 = ssub.s32 1, %s22
  %s25 = scalar_select 0, %s24, %s22
  loop: start=0, step=1, limit=4
  $region2: #{tpu_custom_call.1} parent=0 // loop_pre_header
    _
  $region3: #{tpu_custom_call.1} parent=0 // loop_header
    %s27 = sphi 0, %s31
    %p28 = scmp.ge.s32.totalorder %s27, 4
    %s37 = sphi 0, %s39
    %s40 = sphi 0, %s37
    %s41 = sphi 0, %s40
    %s57 = sphi 0, %s41
    %s63 = sphi 0, %s65
    %s66 = sphi 0, %s63
    %s67 = sphi 0, %s66
    %s83 = sphi 0, %s67
    %s89 = sphi 0, %s91
    %s92 = sphi 0, %s89
    %s93 = sphi 0, %s92
    %s109 = sphi 0, %s93
    %s115 = sphi 0, %s117
    %s118 = sphi 0, %s115
    %s119 = sphi 0, %s118
    %s135 = sphi 0, %s119
    %s139 = sphi 0, %s139
    %s141 = sphi 0, %s139
    %s142 = sphi 0, %s141
    %s156 = sphi 0, %s142
    %s160 = sphi 0, %s160
    %s162 = sphi 0, %s160
    %s163 = sphi 0, %s162
    %s177 = sphi 0, %s163
    %s181 = sphi 0, %s181
    %s183 = sphi 0, %s181
    %s184 = sphi 0, %s183
    %s198 = sphi 0, %s184
    %s202 = sphi 0, %s202
    %s204 = sphi 0, %s202
    %s205 = sphi 0, %s204
    %s219 = sphi 0, %s205
    %s223 = sphi 0, %s223
    %s225 = sphi 0, %s223
    %s226 = sphi 0, %s225
    %s240 = sphi 0, %s226
    %s244 = sphi 0, %s244
    %s246 = sphi 0, %s244
    %s247 = sphi 0, %s246
    %s261 = sphi 0, %s247
    %s265 = sphi 0, %s265
    %s267 = sphi 0, %s265
    %s268 = sphi 0, %s267
    %s282 = sphi 0, %s268
    %s286 = sphi 0, %s286
    %s288 = sphi 0, %s286
    %s289 = sphi 0, %s288
    %s303 = sphi 0, %s289
    %s307 = sphi 0, %s307
    %s309 = sphi 0, %s307
    %s310 = sphi 0, %s309
    %s324 = sphi 0, %s310
    %s328 = sphi 0, %s328
    %s330 = sphi 0, %s328
    %s331 = sphi 0, %s330
    %s345 = sphi 0, %s331
    %s349 = sphi 0, %s349
    %s351 = sphi 0, %s349
    %s352 = sphi 0, %s351
    %s366 = sphi 0, %s352
    %s370 = sphi 0, %s370
    %s372 = sphi 0, %s370
    %s373 = sphi 0, %s372
    %s387 = sphi 0, %s373
    %s391 = sphi 0, %s391
    %s393 = sphi 0, %s391
    %s394 = sphi 0, %s393
    %s408 = sphi 0, %s394
    %s412 = sphi 0, %s412
    %s414 = sphi 0, %s412
    %s415 = sphi 0, %s414
    %s429 = sphi 0, %s415
    %s433 = sphi 0, %s433
    %s435 = sphi 0, %s433
    %s436 = sphi 0, %s435
    %s450 = sphi 0, %s436
    %s454 = sphi 0, %s454
    %s456 = sphi 0, %s454
    %s457 = sphi 0, %s456
    %s471 = sphi 0, %s457
    %s475 = sphi 0, %s475
    %s477 = sphi 0, %s475
    %s478 = sphi 0, %s477
    %s492 = sphi 0, %s478
    %s498 = sphi 0, %s500
    %s501 = sphi 0, %s498
    %s502 = sphi 0, %s501
    %s518 = sphi 0, %s502
  $region4: #{tpu_custom_call.1} parent=0 // loop_header_branch
    %30 = sbr.rel (%p28) target = $region8
  $region5: #{tpu_custom_call.1} parent=0 // loop_body
    %s32 = ssub.s32 %s27, 1
    %s33 = ssub.s32 %s27, 2
    %s34 = sadd.s32 %s27, 1
    %s35 = ssub.s32 %s27, %s34
    %p36 = scmp.eq.s32.totalorder %s35, 0
    %s38 = sadd.s32 %s37, 1
    %s39 = scalar_select %p36, %s37, %s38
    %p42 = pneg %p36
    %p43 = scmp.eq.s32.totalorder %s27, 1
    %p44 = por %p42, %p43
    %p45 = scmp.ne.s32.totalorder %s37, %s40
    %p46 = scmp.eq.s32.totalorder %s27, 0
    %p47 = por %p45, %p46
    %p48 = scmp.ne.s32.totalorder %s37, %s40
    %p49 = scmp.eq.s32.totalorder %s32, 1
    %p50 = por %p48, %p49
    %p51 = scmp.ne.s32.totalorder %s40, %s41
    %p52 = scmp.eq.s32.totalorder %s32, 0
    %p53 = por %p51, %p52
    %p54 = scmp.ne.s32.totalorder %s40, %s41
    %p55 = scmp.eq.s32.totalorder %s33, 1
    %p56 = por %p54, %p55
    %p58 = scmp.ne.s32.totalorder %s41, %s57
    %p59 = scmp.eq.s32.totalorder %s33, 0
    %p60 = por %p58, %p59
    %s61 = ssub.s32 %s27, %s34
    %p62 = scmp.eq.s32.totalorder %s61, 0
    %s64 = sadd.s32 %s63, 1
    %s65 = scalar_select %p62, %s63, %s64
    %p68 = pneg %p62
    %p69 = scmp.eq.s32.totalorder %s27, 1
    %p70 = por %p68, %p69
    %p71 = scmp.ne.s32.totalorder %s63, %s66
    %p72 = scmp.eq.s32.totalorder %s27, 0
    %p73 = por %p71, %p72
    %p74 = scmp.ne.s32.totalorder %s63, %s66
    %p75 = scmp.eq.s32.totalorder %s32, 1
    %p76 = por %p74, %p75
    %p77 = scmp.ne.s32.totalorder %s66, %s67
    %p78 = scmp.eq.s32.totalorder %s32, 0
    %p79 = por %p77, %p78
    %p80 = scmp.ne.s32.totalorder %s66, %s67
    %p81 = scmp.eq.s32.totalorder %s33, 1
    %p82 = por %p80, %p81
    %p84 = scmp.ne.s32.totalorder %s67, %s83
    %p85 = scmp.eq.s32.totalorder %s33, 0
    %p86 = por %p84, %p85
    %s87 = ssub.s32 %s27, %s34
    %p88 = scmp.eq.s32.totalorder %s87, 0
    %s90 = sadd.s32 %s89, 1
    %s91 = scalar_select %p88, %s89, %s90
    %p94 = pneg %p88
    %p95 = scmp.eq.s32.totalorder %s27, 1
    %p96 = por %p94, %p95
    %p97 = scmp.ne.s32.totalorder %s89, %s92
    %p98 = scmp.eq.s32.totalorder %s27, 0
    %p99 = por %p97, %p98
    %p100 = scmp.ne.s32.totalorder %s89, %s92
    %p101 = scmp.eq.s32.totalorder %s32, 1
    %p102 = por %p100, %p101
    %p103 = scmp.ne.s32.totalorder %s92, %s93
    %p104 = scmp.eq.s32.totalorder %s32, 0
    %p105 = por %p103, %p104
    %p106 = scmp.ne.s32.totalorder %s92, %s93
    %p107 = scmp.eq.s32.totalorder %s33, 1
    %p108 = por %p106, %p107
    %p110 = scmp.ne.s32.totalorder %s93, %s109
    %p111 = scmp.eq.s32.totalorder %s33, 0
    %p112 = por %p110, %p111
    %s113 = ssub.s32 %s27, %s34
    %p114 = scmp.eq.s32.totalorder %s113, 0
    %s116 = sadd.s32 %s115, 1
    %s117 = scalar_select %p114, %s115, %s116
    %p120 = pneg %p114
    %p121 = scmp.eq.s32.totalorder %s27, 1
    %p122 = por %p120, %p121
    %p123 = scmp.ne.s32.totalorder %s115, %s118
    %p124 = scmp.eq.s32.totalorder %s27, 0
    %p125 = por %p123, %p124
    %p126 = scmp.ne.s32.totalorder %s115, %s118
    %p127 = scmp.eq.s32.totalorder %s32, 1
    %p128 = por %p126, %p127
    %p129 = scmp.ne.s32.totalorder %s118, %s119
    %p130 = scmp.eq.s32.totalorder %s32, 0
    %p131 = por %p129, %p130
    %p132 = scmp.ne.s32.totalorder %s118, %s119
    %p133 = scmp.eq.s32.totalorder %s33, 1
    %p134 = por %p132, %p133
    %p136 = scmp.ne.s32.totalorder %s119, %s135
    %p137 = scmp.eq.s32.totalorder %s33, 0
    %p138 = por %p136, %p137
    %s140 = sadd.s32 %s139, 1
    %p143 = scmp.eq.s32.totalorder %s27, 1
    %p144 = scmp.ne.s32.totalorder %s139, %s141
    %p145 = scmp.eq.s32.totalorder %s27, 0
    %p146 = por %p144, %p145
    %p147 = scmp.ne.s32.totalorder %s139, %s141
    %p148 = scmp.eq.s32.totalorder %s32, 1
    %p149 = por %p147, %p148
    %p150 = scmp.ne.s32.totalorder %s141, %s142
    %p151 = scmp.eq.s32.totalorder %s32, 0
    %p152 = por %p150, %p151
    %p153 = scmp.ne.s32.totalorder %s141, %s142
    %p154 = scmp.eq.s32.totalorder %s33, 1
    %p155 = por %p153, %p154
    %p157 = scmp.ne.s32.totalorder %s142, %s156
    %p158 = scmp.eq.s32.totalorder %s33, 0
    %p159 = por %p157, %p158
    %s161 = sadd.s32 %s160, 1
    %p164 = scmp.eq.s32.totalorder %s27, 1
    %p165 = scmp.ne.s32.totalorder %s160, %s162
    %p166 = scmp.eq.s32.totalorder %s27, 0
    %p167 = por %p165, %p166
    %p168 = scmp.ne.s32.totalorder %s160, %s162
    %p169 = scmp.eq.s32.totalorder %s32, 1
    %p170 = por %p168, %p169
    %p171 = scmp.ne.s32.totalorder %s162, %s163
    %p172 = scmp.eq.s32.totalorder %s32, 0
    %p173 = por %p171, %p172
    %p174 = scmp.ne.s32.totalorder %s162, %s163
    %p175 = scmp.eq.s32.totalorder %s33, 1
    %p176 = por %p174, %p175
    %p178 = scmp.ne.s32.totalorder %s163, %s177
    %p179 = scmp.eq.s32.totalorder %s33, 0
    %p180 = por %p178, %p179
    %s182 = sadd.s32 %s181, 1
    %p185 = scmp.eq.s32.totalorder %s27, 1
    %p186 = scmp.ne.s32.totalorder %s181, %s183
    %p187 = scmp.eq.s32.totalorder %s27, 0
    %p188 = por %p186, %p187
    %p189 = scmp.ne.s32.totalorder %s181, %s183
    %p190 = scmp.eq.s32.totalorder %s32, 1
    %p191 = por %p189, %p190
    %p192 = scmp.ne.s32.totalorder %s183, %s184
    %p193 = scmp.eq.s32.totalorder %s32, 0
    %p194 = por %p192, %p193
    %p195 = scmp.ne.s32.totalorder %s183, %s184
    %p196 = scmp.eq.s32.totalorder %s33, 1
    %p197 = por %p195, %p196
    %p199 = scmp.ne.s32.totalorder %s184, %s198
    %p200 = scmp.eq.s32.totalorder %s33, 0
    %p201 = por %p199, %p200
    %s203 = sadd.s32 %s202, 1
    %p206 = scmp.eq.s32.totalorder %s27, 1
    %p207 = scmp.ne.s32.totalorder %s202, %s204
    %p208 = scmp.eq.s32.totalorder %s27, 0
    %p209 = por %p207, %p208
    %p210 = scmp.ne.s32.totalorder %s202, %s204
    %p211 = scmp.eq.s32.totalorder %s32, 1
    %p212 = por %p210, %p211
    %p213 = scmp.ne.s32.totalorder %s204, %s205
    %p214 = scmp.eq.s32.totalorder %s32, 0
    %p215 = por %p213, %p214
    %p216 = scmp.ne.s32.totalorder %s204, %s205
    %p217 = scmp.eq.s32.totalorder %s33, 1
    %p218 = por %p216, %p217
    %p220 = scmp.ne.s32.totalorder %s205, %s219
    %p221 = scmp.eq.s32.totalorder %s33, 0
    %p222 = por %p220, %p221
    %s224 = sadd.s32 %s223, 1
    %p227 = scmp.eq.s32.totalorder %s27, 1
    %p228 = scmp.ne.s32.totalorder %s223, %s225
    %p229 = scmp.eq.s32.totalorder %s27, 0
    %p230 = por %p228, %p229
    %p231 = scmp.ne.s32.totalorder %s223, %s225
    %p232 = scmp.eq.s32.totalorder %s32, 1
    %p233 = por %p231, %p232
    %p234 = scmp.ne.s32.totalorder %s225, %s226
    %p235 = scmp.eq.s32.totalorder %s32, 0
    %p236 = por %p234, %p235
    %p237 = scmp.ne.s32.totalorder %s225, %s226
    %p238 = scmp.eq.s32.totalorder %s33, 1
    %p239 = por %p237, %p238
    %p241 = scmp.ne.s32.totalorder %s226, %s240
    %p242 = scmp.eq.s32.totalorder %s33, 0
    %p243 = por %p241, %p242
    %s245 = sadd.s32 %s244, 1
    %p248 = scmp.eq.s32.totalorder %s27, 1
    %p249 = scmp.ne.s32.totalorder %s244, %s246
    %p250 = scmp.eq.s32.totalorder %s27, 0
    %p251 = por %p249, %p250
    %p252 = scmp.ne.s32.totalorder %s244, %s246
    %p253 = scmp.eq.s32.totalorder %s32, 1
    %p254 = por %p252, %p253
    %p255 = scmp.ne.s32.totalorder %s246, %s247
    %p256 = scmp.eq.s32.totalorder %s32, 0
    %p257 = por %p255, %p256
    %p258 = scmp.ne.s32.totalorder %s246, %s247
    %p259 = scmp.eq.s32.totalorder %s33, 1
    %p260 = por %p258, %p259
    %p262 = scmp.ne.s32.totalorder %s247, %s261
    %p263 = scmp.eq.s32.totalorder %s33, 0
    %p264 = por %p262, %p263
    %s266 = sadd.s32 %s265, 1
    %p269 = scmp.eq.s32.totalorder %s27, 1
    %p270 = scmp.ne.s32.totalorder %s265, %s267
    %p271 = scmp.eq.s32.totalorder %s27, 0
    %p272 = por %p270, %p271
    %p273 = scmp.ne.s32.totalorder %s265, %s267
    %p274 = scmp.eq.s32.totalorder %s32, 1
    %p275 = por %p273, %p274
    %p276 = scmp.ne.s32.totalorder %s267, %s268
    %p277 = scmp.eq.s32.totalorder %s32, 0
    %p278 = por %p276, %p277
    %p279 = scmp.ne.s32.totalorder %s267, %s268
    %p280 = scmp.eq.s32.totalorder %s33, 1
    %p281 = por %p279, %p280
    %p283 = scmp.ne.s32.totalorder %s268, %s282
    %p284 = scmp.eq.s32.totalorder %s33, 0
    %p285 = por %p283, %p284
    %s287 = sadd.s32 %s286, 1
    %p290 = scmp.eq.s32.totalorder %s27, 1
    %p291 = scmp.ne.s32.totalorder %s286, %s288
    %p292 = scmp.eq.s32.totalorder %s27, 0
    %p293 = por %p291, %p292
    %p294 = scmp.ne.s32.totalorder %s286, %s288
    %p295 = scmp.eq.s32.totalorder %s32, 1
    %p296 = por %p294, %p295
    %p297 = scmp.ne.s32.totalorder %s288, %s289
    %p298 = scmp.eq.s32.totalorder %s32, 0
    %p299 = por %p297, %p298
    %p300 = scmp.ne.s32.totalorder %s288, %s289
    %p301 = scmp.eq.s32.totalorder %s33, 1
    %p302 = por %p300, %p301
    %p304 = scmp.ne.s32.totalorder %s289, %s303
    %p305 = scmp.eq.s32.totalorder %s33, 0
    %p306 = por %p304, %p305
    %s308 = sadd.s32 %s307, 1
    %p311 = scmp.eq.s32.totalorder %s27, 1
    %p312 = scmp.ne.s32.totalorder %s307, %s309
    %p313 = scmp.eq.s32.totalorder %s27, 0
    %p314 = por %p312, %p313
    %p315 = scmp.ne.s32.totalorder %s307, %s309
    %p316 = scmp.eq.s32.totalorder %s32, 1
    %p317 = por %p315, %p316
    %p318 = scmp.ne.s32.totalorder %s309, %s310
    %p319 = scmp.eq.s32.totalorder %s32, 0
    %p320 = por %p318, %p319
    %p321 = scmp.ne.s32.totalorder %s309, %s310
    %p322 = scmp.eq.s32.totalorder %s33, 1
    %p323 = por %p321, %p322
    %p325 = scmp.ne.s32.totalorder %s310, %s324
    %p326 = scmp.eq.s32.totalorder %s33, 0
    %p327 = por %p325, %p326
    %s329 = sadd.s32 %s328, 1
    %p332 = scmp.eq.s32.totalorder %s27, 1
    %p333 = scmp.ne.s32.totalorder %s328, %s330
    %p334 = scmp.eq.s32.totalorder %s27, 0
    %p335 = por %p333, %p334
    %p336 = scmp.ne.s32.totalorder %s328, %s330
    %p337 = scmp.eq.s32.totalorder %s32, 1
    %p338 = por %p336, %p337
    %p339 = scmp.ne.s32.totalorder %s330, %s331
    %p340 = scmp.eq.s32.totalorder %s32, 0
    %p341 = por %p339, %p340
    %p342 = scmp.ne.s32.totalorder %s330, %s331
    %p343 = scmp.eq.s32.totalorder %s33, 1
    %p344 = por %p342, %p343
    %p346 = scmp.ne.s32.totalorder %s331, %s345
    %p347 = scmp.eq.s32.totalorder %s33, 0
    %p348 = por %p346, %p347
    %s350 = sadd.s32 %s349, 1
    %p353 = scmp.eq.s32.totalorder %s27, 1
    %p354 = scmp.ne.s32.totalorder %s349, %s351
    %p355 = scmp.eq.s32.totalorder %s27, 0
    %p356 = por %p354, %p355
    %p357 = scmp.ne.s32.totalorder %s349, %s351
    %p358 = scmp.eq.s32.totalorder %s32, 1
    %p359 = por %p357, %p358
    %p360 = scmp.ne.s32.totalorder %s351, %s352
    %p361 = scmp.eq.s32.totalorder %s32, 0
    %p362 = por %p360, %p361
    %p363 = scmp.ne.s32.totalorder %s351, %s352
    %p364 = scmp.eq.s32.totalorder %s33, 1
    %p365 = por %p363, %p364
    %p367 = scmp.ne.s32.totalorder %s352, %s366
    %p368 = scmp.eq.s32.totalorder %s33, 0
    %p369 = por %p367, %p368
    %s371 = sadd.s32 %s370, 1
    %p374 = scmp.eq.s32.totalorder %s27, 1
    %p375 = scmp.ne.s32.totalorder %s370, %s372
    %p376 = scmp.eq.s32.totalorder %s27, 0
    %p377 = por %p375, %p376
    %p378 = scmp.ne.s32.totalorder %s370, %s372
    %p379 = scmp.eq.s32.totalorder %s32, 1
    %p380 = por %p378, %p379
    %p381 = scmp.ne.s32.totalorder %s372, %s373
    %p382 = scmp.eq.s32.totalorder %s32, 0
    %p383 = por %p381, %p382
    %p384 = scmp.ne.s32.totalorder %s372, %s373
    %p385 = scmp.eq.s32.totalorder %s33, 1
    %p386 = por %p384, %p385
    %p388 = scmp.ne.s32.totalorder %s373, %s387
    %p389 = scmp.eq.s32.totalorder %s33, 0
    %p390 = por %p388, %p389
    %s392 = sadd.s32 %s391, 1
    %p395 = scmp.eq.s32.totalorder %s27, 1
    %p396 = scmp.ne.s32.totalorder %s391, %s393
    %p397 = scmp.eq.s32.totalorder %s27, 0
    %p398 = por %p396, %p397
    %p399 = scmp.ne.s32.totalorder %s391, %s393
    %p400 = scmp.eq.s32.totalorder %s32, 1
    %p401 = por %p399, %p400
    %p402 = scmp.ne.s32.totalorder %s393, %s394
    %p403 = scmp.eq.s32.totalorder %s32, 0
    %p404 = por %p402, %p403
    %p405 = scmp.ne.s32.totalorder %s393, %s394
    %p406 = scmp.eq.s32.totalorder %s33, 1
    %p407 = por %p405, %p406
    %p409 = scmp.ne.s32.totalorder %s394, %s408
    %p410 = scmp.eq.s32.totalorder %s33, 0
    %p411 = por %p409, %p410
    %s413 = sadd.s32 %s412, 1
    %p416 = scmp.eq.s32.totalorder %s27, 1
    %p417 = scmp.ne.s32.totalorder %s412, %s414
    %p418 = scmp.eq.s32.totalorder %s27, 0
    %p419 = por %p417, %p418
    %p420 = scmp.ne.s32.totalorder %s412, %s414
    %p421 = scmp.eq.s32.totalorder %s32, 1
    %p422 = por %p420, %p421
    %p423 = scmp.ne.s32.totalorder %s414, %s415
    %p424 = scmp.eq.s32.totalorder %s32, 0
    %p425 = por %p423, %p424
    %p426 = scmp.ne.s32.totalorder %s414, %s415
    %p427 = scmp.eq.s32.totalorder %s33, 1
    %p428 = por %p426, %p427
    %p430 = scmp.ne.s32.totalorder %s415, %s429
    %p431 = scmp.eq.s32.totalorder %s33, 0
    %p432 = por %p430, %p431
    %s434 = sadd.s32 %s433, 1
    %p437 = scmp.eq.s32.totalorder %s27, 1
    %p438 = scmp.ne.s32.totalorder %s433, %s435
    %p439 = scmp.eq.s32.totalorder %s27, 0
    %p440 = por %p438, %p439
    %p441 = scmp.ne.s32.totalorder %s433, %s435
    %p442 = scmp.eq.s32.totalorder %s32, 1
    %p443 = por %p441, %p442
    %p444 = scmp.ne.s32.totalorder %s435, %s436
    %p445 = scmp.eq.s32.totalorder %s32, 0
    %p446 = por %p444, %p445
    %p447 = scmp.ne.s32.totalorder %s435, %s436
    %p448 = scmp.eq.s32.totalorder %s33, 1
    %p449 = por %p447, %p448
    %p451 = scmp.ne.s32.totalorder %s436, %s450
    %p452 = scmp.eq.s32.totalorder %s33, 0
    %p453 = por %p451, %p452
    %s455 = sadd.s32 %s454, 1
    %p458 = scmp.eq.s32.totalorder %s27, 1
    %p459 = scmp.ne.s32.totalorder %s454, %s456
    %p460 = scmp.eq.s32.totalorder %s27, 0
    %p461 = por %p459, %p460
    %p462 = scmp.ne.s32.totalorder %s454, %s456
    %p463 = scmp.eq.s32.totalorder %s32, 1
    %p464 = por %p462, %p463
    %p465 = scmp.ne.s32.totalorder %s456, %s457
    %p466 = scmp.eq.s32.totalorder %s32, 0
    %p467 = por %p465, %p466
    %p468 = scmp.ne.s32.totalorder %s456, %s457
    %p469 = scmp.eq.s32.totalorder %s33, 1
    %p470 = por %p468, %p469
    %p472 = scmp.ne.s32.totalorder %s457, %s471
    %p473 = scmp.eq.s32.totalorder %s33, 0
    %p474 = por %p472, %p473
    %s476 = sadd.s32 %s475, 1
    %p479 = scmp.eq.s32.totalorder %s27, 1
    %p480 = scmp.ne.s32.totalorder %s475, %s477
    %p481 = scmp.eq.s32.totalorder %s27, 0
    %p482 = por %p480, %p481
    %p483 = scmp.ne.s32.totalorder %s475, %s477
    %p484 = scmp.eq.s32.totalorder %s32, 1
    %p485 = por %p483, %p484
    %p486 = scmp.ne.s32.totalorder %s477, %s478
    %p487 = scmp.eq.s32.totalorder %s32, 0
    %p488 = por %p486, %p487
    %p489 = scmp.ne.s32.totalorder %s477, %s478
    %p490 = scmp.eq.s32.totalorder %s33, 1
    %p491 = por %p489, %p490
    %p493 = scmp.ne.s32.totalorder %s478, %s492
    %p494 = scmp.eq.s32.totalorder %s33, 0
    %p495 = por %p493, %p494
    %s496 = ssub.s32 %s27, %s34
    %p497 = scmp.eq.s32.totalorder %s496, 0
    %s499 = sadd.s32 %s498, 1
    %s500 = scalar_select %p497, %s498, %s499
    %p503 = pneg %p497
    %p504 = scmp.eq.s32.totalorder %s27, 1
    %p505 = por %p503, %p504
    %p506 = scmp.ne.s32.totalorder %s498, %s501
    %p507 = scmp.eq.s32.totalorder %s27, 0
    %p508 = por %p506, %p507
    %p509 = scmp.ne.s32.totalorder %s498, %s501
    %p510 = scmp.eq.s32.totalorder %s32, 1
    %p511 = por %p509, %p510
    %p512 = scmp.ne.s32.totalorder %s501, %s502
    %p513 = scmp.eq.s32.totalorder %s32, 0
    %p514 = por %p512, %p513
    %p515 = scmp.ne.s32.totalorder %s501, %s502
    %p516 = scmp.eq.s32.totalorder %s33, 1
    %p517 = por %p515, %p516
    %p519 = scmp.ne.s32.totalorder %s502, %s518
    %p520 = scmp.eq.s32.totalorder %s33, 0
    %p521 = por %p519, %p520
    %p522 = scmp.le.s32.totalorder 1, %s27
    %p523 = scmp.lt.s32.totalorder %s27, 3
    %p524 = pnand %p522, %p523
    %p525 = pneg %p524
    // Predicated region
    $region9: #{tpu_custom_call.1} parent=5 // pred_check
      _
    $region10: #{tpu_custom_call.1} parent=5 // pred_check_branch
      %527 = sbr.rel (%p524) target = $region12
    $region11: #{tpu_custom_call.1} parent=5 // pred_region
      %s528 = ssub.s32 %s27, 1
      // Predicated region
      $region13: #{tpu_custom_call.1} parent=11 // pred_check
        %p529 = pneg %p152
      $region14: #{tpu_custom_call.1} parent=11 // pred_check_branch
        %531 = sbr.rel (%p529) target = $region16
      $region15: #{tpu_custom_call.1} parent=11 // pred_region
        _
      $region16: #{tpu_custom_call.1} parent=11 // pred_fallthru
        _
      // Predicated region
      $region17: #{tpu_custom_call.1} parent=11 // pred_check
        %p532 = pneg %p173
      $region18: #{tpu_custom_call.1} parent=11 // pred_check_branch
        %534 = sbr.rel (%p532) target = $region20
      $region19: #{tpu_custom_call.1} parent=11 // pred_region
        _
      $region20: #{tpu_custom_call.1} parent=11 // pred_fallthru
        _
      // Predicated region
      $region21: #{tpu_custom_call.1} parent=11 // pred_check
        %p535 = pneg %p194
      $region22: #{tpu_custom_call.1} parent=11 // pred_check_branch
        %537 = sbr.rel (%p535) target = $region24
      $region23: #{tpu_custom_call.1} parent=11 // pred_region
        _
      $region24: #{tpu_custom_call.1} parent=11 // pred_fallthru
        _
      // Predicated region
      $region25: #{tpu_custom_call.1} parent=11 // pred_check
        %p538 = pneg %p215
      $region26: #{tpu_custom_call.1} parent=11 // pred_check_branch
        %540 = sbr.rel (%p538) target = $region28
      $region27: #{tpu_custom_call.1} parent=11 // pred_region
        _
      $region28: #{tpu_custom_call.1} parent=11 // pred_fallthru
        _
      // Predicated region
      $region29: #{tpu_custom_call.1} parent=11 // pred_check
        %p541 = pneg %p236
      $region30: #{tpu_custom_call.1} parent=11 // pred_check_branch
        %543 = sbr.rel (%p541) target = $region32
      $region31: #{tpu_custom_call.1} parent=11 // pred_region
        _
      $region32: #{tpu_custom_call.1} parent=11 // pred_fallthru
        _
      // Predicated region
      $region33: #{tpu_custom_call.1} parent=11 // pred_check
        %p544 = pneg %p257
      $region34: #{tpu_custom_call.1} parent=11 // pred_check_branch
        %546 = sbr.rel (%p544) target = $region36
      $region35: #{tpu_custom_call.1} parent=11 // pred_region
        _
      $region36: #{tpu_custom_call.1} parent=11 // pred_fallthru
        _
      // Predicated region
      $region37: #{tpu_custom_call.1} parent=11 // pred_check
        %p547 = pneg %p278
      $region38: #{tpu_custom_call.1} parent=11 // pred_check_branch
        %549 = sbr.rel (%p547) target = $region40
      $region39: #{tpu_custom_call.1} parent=11 // pred_region
        _
      $region40: #{tpu_custom_call.1} parent=11 // pred_fallthru
        _
      // Predicated region
      $region41: #{tpu_custom_call.1} parent=11 // pred_check
        %p550 = pneg %p299
      $region42: #{tpu_custom_call.1} parent=11 // pred_check_branch
        %552 = sbr.rel (%p550) target = $region44
      $region43: #{tpu_custom_call.1} parent=11 // pred_region
        _
      $region44: #{tpu_custom_call.1} parent=11 // pred_fallthru
        _
      // Predicated region
      $region45: #{tpu_custom_call.1} parent=11 // pred_check
        %p553 = pneg %p320
      $region46: #{tpu_custom_call.1} parent=11 // pred_check_branch
        %555 = sbr.rel (%p553) target = $region48
      $region47: #{tpu_custom_call.1} parent=11 // pred_region
        _
      $region48: #{tpu_custom_call.1} parent=11 // pred_fallthru
        _
      // Predicated region
      $region49: #{tpu_custom_call.1} parent=11 // pred_check
        %p556 = pneg %p341
      $region50: #{tpu_custom_call.1} parent=11 // pred_check_branch
        %558 = sbr.rel (%p556) target = $region52
      $region51: #{tpu_custom_call.1} parent=11 // pred_region
        _
      $region52: #{tpu_custom_call.1} parent=11 // pred_fallthru
        _
      // Predicated region
      $region53: #{tpu_custom_call.1} parent=11 // pred_check
        %p559 = pneg %p362
      $region54: #{tpu_custom_call.1} parent=11 // pred_check_branch
        %561 = sbr.rel (%p559) target = $region56
      $region55: #{tpu_custom_call.1} parent=11 // pred_region
        _
      $region56: #{tpu_custom_call.1} parent=11 // pred_fallthru
        _
      // Predicated region
      $region57: #{tpu_custom_call.1} parent=11 // pred_check
        %p562 = pneg %p383
      $region58: #{tpu_custom_call.1} parent=11 // pred_check_branch
        %564 = sbr.rel (%p562) target = $region60
      $region59: #{tpu_custom_call.1} parent=11 // pred_region
        _
      $region60: #{tpu_custom_call.1} parent=11 // pred_fallthru
        _
      // Predicated region
      $region61: #{tpu_custom_call.1} parent=11 // pred_check
        %p565 = pneg %p404
      $region62: #{tpu_custom_call.1} parent=11 // pred_check_branch
        %567 = sbr.rel (%p565) target = $region64
      $region63: #{tpu_custom_call.1} parent=11 // pred_region
        _
      $region64: #{tpu_custom_call.1} parent=11 // pred_fallthru
        _
      // Predicated region
      $region65: #{tpu_custom_call.1} parent=11 // pred_check
        %p568 = pneg %p425
      $region66: #{tpu_custom_call.1} parent=11 // pred_check_branch
        %570 = sbr.rel (%p568) target = $region68
      $region67: #{tpu_custom_call.1} parent=11 // pred_region
        _
      $region68: #{tpu_custom_call.1} parent=11 // pred_fallthru
        _
      // Predicated region
      $region69: #{tpu_custom_call.1} parent=11 // pred_check
        %p571 = pneg %p446
      $region70: #{tpu_custom_call.1} parent=11 // pred_check_branch
        %573 = sbr.rel (%p571) target = $region72
      $region71: #{tpu_custom_call.1} parent=11 // pred_region
        _
      $region72: #{tpu_custom_call.1} parent=11 // pred_fallthru
        _
      // Predicated region
      $region73: #{tpu_custom_call.1} parent=11 // pred_check
        %p574 = pneg %p467
      $region74: #{tpu_custom_call.1} parent=11 // pred_check_branch
        %576 = sbr.rel (%p574) target = $region76
      $region75: #{tpu_custom_call.1} parent=11 // pred_region
        _
      $region76: #{tpu_custom_call.1} parent=11 // pred_fallthru
        _
      // Predicated region
      $region77: #{tpu_custom_call.1} parent=11 // pred_check
        %p577 = pneg %p488
      $region78: #{tpu_custom_call.1} parent=11 // pred_check_branch
        %579 = sbr.rel (%p577) target = $region80
      $region79: #{tpu_custom_call.1} parent=11 // pred_region
        _
      $region80: #{tpu_custom_call.1} parent=11 // pred_fallthru
        _
    $region12: #{tpu_custom_call.1} parent=5 // pred_fallthru
      _
    %p580 = scmp.lt.s32.totalorder %s27, 2
    // Predicated region
    $region81: #{tpu_custom_call.1} parent=5 // pred_check
      %p581 = pneg %p580
    $region82: #{tpu_custom_call.1} parent=5 // pred_check_branch
      %583 = sbr.rel (%p581) target = $region84
    $region83: #{tpu_custom_call.1} parent=5 // pred_region
      // Predicated region
      $region85: #{tpu_custom_call.1} parent=83 // pred_check
        %p584 = pneg %p47
      $region86: #{tpu_custom_call.1} parent=83 // pred_check_branch
        %586 = sbr.rel (%p584) target = $region88
      $region87: #{tpu_custom_call.1} parent=83 // pred_region
        %s587 = smul.u32 16, %s27
        %p588 = scmp.lt.s32.totalorder %s587, 31
        %s589 = scalar_select %p588, %s587, 31
        %s590 = smul.addr %s589, 8
        %s591 = scalar_lea.vmem %s0, %s590
        %s592 = smul.u32 16, %s27
      $region88: #{tpu_custom_call.1} parent=83 // pred_fallthru
        _
      // Predicated region
      $region89: #{tpu_custom_call.1} parent=83 // pred_check
        %p593 = pneg %p73
      $region90: #{tpu_custom_call.1} parent=83 // pred_check_branch
        %595 = sbr.rel (%p593) target = $region92
      $region91: #{tpu_custom_call.1} parent=83 // pred_region
        %s596 = smul.u32 32, %s27
        %p597 = scmp.lt.s32.totalorder %s596, 63
        %s598 = scalar_select %p597, %s596, 63
        %s599 = smul.addr %s598, 8
        %s600 = scalar_lea.vmem %s1, %s599
        %s601 = smul.u32 32, %s27
      $region92: #{tpu_custom_call.1} parent=83 // pred_fallthru
        _
      // Predicated region
      $region93: #{tpu_custom_call.1} parent=83 // pred_check
        %p602 = pneg %p99
      $region94: #{tpu_custom_call.1} parent=83 // pred_check_branch
        %604 = sbr.rel (%p602) target = $region96
      $region95: #{tpu_custom_call.1} parent=83 // pred_region
        %s605 = smul.u32 32, %s27
        %p606 = scmp.lt.s32.totalorder %s605, 63
        %s607 = scalar_select %p606, %s605, 63
        %s608 = smul.addr %s607, 4
        %s609 = scalar_lea.vmem %s2, %s608
        %s610 = smul.u32 32, %s27
      $region96: #{tpu_custom_call.1} parent=83 // pred_fallthru
        _
      // Predicated region
      $region97: #{tpu_custom_call.1} parent=83 // pred_check
        %p611 = pneg %p125
      $region98: #{tpu_custom_call.1} parent=83 // pred_check_branch
        %613 = sbr.rel (%p611) target = $region100
      $region99: #{tpu_custom_call.1} parent=83 // pred_region
        %s614 = smul.u32 32, %s27
        %p615 = scmp.lt.s32.totalorder %s614, 63
        %s616 = scalar_select %p615, %s614, 63
        %s617 = smul.addr %s616, 4
        %s618 = scalar_lea.vmem %s3, %s617
        %s619 = smul.u32 32, %s27
      $region100: #{tpu_custom_call.1} parent=83 // pred_fallthru
        _
    $region84: #{tpu_custom_call.1} parent=5 // pred_fallthru
      _
    %p620 = scmp.le.s32.totalorder 1, %s27
    %p621 = scmp.lt.s32.totalorder %s27, 3
    %p622 = pnand %p620, %p621
    %p623 = pneg %p622
    // Predicated region
    $region101: #{tpu_custom_call.1} parent=5 // pred_check
      _
    $region102: #{tpu_custom_call.1} parent=5 // pred_check_branch
      %625 = sbr.rel (%p622) target = $region104
    $region103: #{tpu_custom_call.1} parent=5 // pred_region
      %s626 = ssub.s32 %s27, 1
      %s627 = smul.u32 16, %s32
      %p628 = scmp.lt.s32.totalorder %s627, 31
      %s629 = scalar_select %p628, %s627, 31
      %s630 = smul.addr %s629, 8
      %s631 = scalar_lea.vmem %s0, %s630
      %p632 = pneg %p53
      %p633 = pneg %p50
      %s634 = smul.u32 32, %s32
      %p635 = scmp.lt.s32.totalorder %s634, 63
      %s636 = scalar_select %p635, %s634, 63
      %s637 = smul.addr %s636, 8
      %s638 = scalar_lea.vmem %s1, %s637
      %p639 = pneg %p79
      %p640 = pneg %p76
      %s641 = smul.u32 32, %s32
      %p642 = scmp.lt.s32.totalorder %s641, 63
      %s643 = scalar_select %p642, %s641, 63
      %s644 = smul.addr %s643, 4
      %s645 = scalar_lea.vmem %s2, %s644
      %p646 = pneg %p105
      %p647 = pneg %p102
      %s648 = smul.u32 32, %s32
      %p649 = scmp.lt.s32.totalorder %s648, 63
      %s650 = scalar_select %p649, %s648, 63
      %s651 = smul.addr %s650, 4
      %s652 = scalar_lea.vmem %s3, %s651
      %p653 = pneg %p131
      %p654 = pneg %p128
      %p655 = pneg %p152
      %p656 = pneg %p149
      %p657 = pneg %p173
      %p658 = pneg %p170
      %p659 = pneg %p194
      %p660 = pneg %p191
      %p661 = pneg %p215
      %p662 = pneg %p212
      %p663 = pneg %p236
      %p664 = pneg %p233
      %p665 = pneg %p257
      %p666 = pneg %p254
      %p667 = pneg %p278
      %p668 = pneg %p275
      %p669 = pneg %p299
      %p670 = pneg %p296
      %p671 = pneg %p320
      %p672 = pneg %p317
      %p673 = pneg %p341
      %p674 = pneg %p338
      %p675 = pneg %p362
      %p676 = pneg %p359
      %p677 = pneg %p383
      %p678 = pneg %p380
      %p679 = pneg %p404
      %p680 = pneg %p401
      %p681 = pneg %p425
      %p682 = pneg %p422
      %p683 = pneg %p446
      %p684 = pneg %p443
      %p685 = pneg %p467
      %p686 = pneg %p464
      %p687 = pneg %p488
      %p688 = pneg %p485
      %p689 = pneg %p514
      %p690 = pneg %p511
      %p691 = scmp.lt.s32.totalorder %s32, 1
      %s692 = scalar_select %p691, %s32, 1
      %s693 = smul.addr %s692, 8
      %s694 = scalar_lea.vmem %s21, %s693
      %s695 = smul.u32 16, %s32
      %p696 = scmp.lt.s32.totalorder %s695, 31
      %s697 = scalar_select %p696, %s695, 31
      %s698 = smul.addr %s697, 8
      %s699 = scalar_lea.vmem %s0, %s698
      %s700 = smul.u32 16, %s32
      %s701 = smul.u32 32, %s32
      %p702 = scmp.lt.s32.totalorder %s701, 63
      %s703 = scalar_select %p702, %s701, 63
      %s704 = smul.addr %s703, 8
      %s705 = scalar_lea.vmem %s1, %s704
      %s706 = smul.u32 32, %s32
      %s707 = smul.u32 32, %s32
      %p708 = scmp.lt.s32.totalorder %s707, 63
      %s709 = scalar_select %p708, %s707, 63
      %s710 = smul.addr %s709, 4
      %s711 = scalar_lea.vmem %s2, %s710
      %s712 = smul.u32 32, %s32
      %s713 = smul.u32 32, %s32
      %p714 = scmp.lt.s32.totalorder %s713, 63
      %s715 = scalar_select %p714, %s713, 63
      %s716 = smul.addr %s715, 4
      %s717 = scalar_lea.vmem %s3, %s716
      %s718 = smul.u32 32, %s32
      %p719 = scmp.lt.s32.totalorder %s32, 1
      %s720 = scalar_select %p719, %s32, 1
      %s721 = smul.addr %s720, 8
      %s722 = scalar_lea.vmem %s21, %s721
      %v724 = vld [vmem:[%s711] sm:$0xf]
      %v725 = vld [vmem:[%s711 + $0x4] sm:$0xf]
      %v726 = vld [vmem:[%s711 + $0x8] sm:$0xf]
      %v727 = vld [vmem:[%s711 + $0xc] sm:$0xf]
      %v728 = vld [vmem:[%s711 + $0x10] sm:$0xf]
      %v729 = vld [vmem:[%s711 + $0x14] sm:$0xf]
      %v730 = vld [vmem:[%s711 + $0x18] sm:$0xf]
      %v731 = vld [vmem:[%s711 + $0x1c] sm:$0xf]
      %v732 = vld [vmem:[%s711 + $0x20] sm:$0xf]
      %v733 = vld [vmem:[%s711 + $0x24] sm:$0xf]
      %v734 = vld [vmem:[%s711 + $0x28] sm:$0xf]
      %v735 = vld [vmem:[%s711 + $0x2c] sm:$0xf]
      %v736 = vld [vmem:[%s711 + $0x30] sm:$0xf]
      %v737 = vld [vmem:[%s711 + $0x34] sm:$0xf]
      %v738 = vld [vmem:[%s711 + $0x38] sm:$0xf]
      %v739 = vld [vmem:[%s711 + $0x3c] sm:$0xf]
      %v740 = vld [vmem:[%s711 + $0x40] sm:$0xf]
      %v741 = vld [vmem:[%s711 + $0x44] sm:$0xf]
      %v742 = vld [vmem:[%s711 + $0x48] sm:$0xf]
      %v743 = vld [vmem:[%s711 + $0x4c] sm:$0xf]
      %v744 = vld [vmem:[%s711 + $0x50] sm:$0xf]
      %v745 = vld [vmem:[%s711 + $0x54] sm:$0xf]
      %v746 = vld [vmem:[%s711 + $0x58] sm:$0xf]
      %v747 = vld [vmem:[%s711 + $0x5c] sm:$0xf]
      %v748 = vld [vmem:[%s711 + $0x60] sm:$0xf]
      %v749 = vld [vmem:[%s711 + $0x64] sm:$0xf]
      %v750 = vld [vmem:[%s711 + $0x68] sm:$0xf]
      %v751 = vld [vmem:[%s711 + $0x6c] sm:$0xf]
      %v752 = vld [vmem:[%s711 + $0x70] sm:$0xf]
      %v753 = vld [vmem:[%s711 + $0x74] sm:$0xf]
      %v754 = vld [vmem:[%s711 + $0x78] sm:$0xf]
      %v755 = vld [vmem:[%s711 + $0x7c] sm:$0xf]
      %v756 = vld [vmem:[%s717] sm:$0xf]
      %v757 = vld [vmem:[%s717 + $0x4] sm:$0xf]
      %v758 = vld [vmem:[%s717 + $0x8] sm:$0xf]
      %v759 = vld [vmem:[%s717 + $0xc] sm:$0xf]
      %v760 = vld [vmem:[%s717 + $0x10] sm:$0xf]
      %v761 = vld [vmem:[%s717 + $0x14] sm:$0xf]
      %v762 = vld [vmem:[%s717 + $0x18] sm:$0xf]
      %v763 = vld [vmem:[%s717 + $0x1c] sm:$0xf]
      %v764 = vld [vmem:[%s717 + $0x20] sm:$0xf]
      %v765 = vld [vmem:[%s717 + $0x24] sm:$0xf]
      %v766 = vld [vmem:[%s717 + $0x28] sm:$0xf]
      %v767 = vld [vmem:[%s717 + $0x2c] sm:$0xf]
      %v768 = vld [vmem:[%s717 + $0x30] sm:$0xf]
      %v769 = vld [vmem:[%s717 + $0x34] sm:$0xf]
      %v770 = vld [vmem:[%s717 + $0x38] sm:$0xf]
      %v771 = vld [vmem:[%s717 + $0x3c] sm:$0xf]
      %v772 = vld [vmem:[%s717 + $0x40] sm:$0xf]
      %v773 = vld [vmem:[%s717 + $0x44] sm:$0xf]
      %v774 = vld [vmem:[%s717 + $0x48] sm:$0xf]
      %v775 = vld [vmem:[%s717 + $0x4c] sm:$0xf]
      %v776 = vld [vmem:[%s717 + $0x50] sm:$0xf]
      %v777 = vld [vmem:[%s717 + $0x54] sm:$0xf]
      %v778 = vld [vmem:[%s717 + $0x58] sm:$0xf]
      %v779 = vld [vmem:[%s717 + $0x5c] sm:$0xf]
      %v780 = vld [vmem:[%s717 + $0x60] sm:$0xf]
      %v781 = vld [vmem:[%s717 + $0x64] sm:$0xf]
      %v782 = vld [vmem:[%s717 + $0x68] sm:$0xf]
      %v783 = vld [vmem:[%s717 + $0x6c] sm:$0xf]
      %v784 = vld [vmem:[%s717 + $0x70] sm:$0xf]
      %v785 = vld [vmem:[%s717 + $0x74] sm:$0xf]
      %v786 = vld [vmem:[%s717 + $0x78] sm:$0xf]
      %v787 = vld [vmem:[%s717 + $0x7c] sm:$0xf]
      %v788 = vld [vmem:[%s5] sm:$0x3]
      %v789 = vld [vmem:[%s6] sm:$0xf]
      %v790 = vld [vmem:[%s6 + $0x4] sm:$0xf]
      %v791 = vld [vmem:[%s6 + $0x8] sm:$0xf]
      %v792 = vld [vmem:[%s6 + $0xc] sm:$0xf]
      %v793 = vld [vmem:[%s6 + $0x10] sm:$0xf]
      %v794 = vld [vmem:[%s6 + $0x14] sm:$0xf]
      %v795 = vld [vmem:[%s6 + $0x18] sm:$0xf]
      %v796 = vld [vmem:[%s6 + $0x1c] sm:$0xf]
      %v797 = vld [vmem:[%s6 + $0x20] sm:$0xf]
      %v798 = vld [vmem:[%s6 + $0x24] sm:$0xf]
      %v799 = vld [vmem:[%s6 + $0x28] sm:$0xf]
      %v800 = vld [vmem:[%s6 + $0x2c] sm:$0xf]
      %v801 = vld [vmem:[%s6 + $0x30] sm:$0xf]
      %v802 = vld [vmem:[%s6 + $0x34] sm:$0xf]
      %v803 = vld [vmem:[%s6 + $0x38] sm:$0xf]
      %v804 = vld [vmem:[%s6 + $0x3c] sm:$0xf]
      %v805 = vld [vmem:[%s705] sm:$0xff]
      %v806 = vld [vmem:[%s705 + $0x8] sm:$0xff]
      %v807 = vld [vmem:[%s705 + $0x10] sm:$0xff]
      %v808 = vld [vmem:[%s705 + $0x18] sm:$0xff]
      %v809 = vld [vmem:[%s705 + $0x20] sm:$0xff]
      %v810 = vld [vmem:[%s705 + $0x28] sm:$0xff]
      %v811 = vld [vmem:[%s705 + $0x30] sm:$0xff]
      %v812 = vld [vmem:[%s705 + $0x38] sm:$0xff]
      %v813 = vld [vmem:[%s705 + $0x40] sm:$0xff]
      %v814 = vld [vmem:[%s705 + $0x48] sm:$0xff]
      %v815 = vld [vmem:[%s705 + $0x50] sm:$0xff]
      %v816 = vld [vmem:[%s705 + $0x58] sm:$0xff]
      %v817 = vld [vmem:[%s705 + $0x60] sm:$0xff]
      %v818 = vld [vmem:[%s705 + $0x68] sm:$0xff]
      %v819 = vld [vmem:[%s705 + $0x70] sm:$0xff]
      %v820 = vld [vmem:[%s705 + $0x78] sm:$0xff]
      %v821 = vld [vmem:[%s705 + $0x80] sm:$0xff]
      %v822 = vld [vmem:[%s705 + $0x88] sm:$0xff]
      %v823 = vld [vmem:[%s705 + $0x90] sm:$0xff]
      %v824 = vld [vmem:[%s705 + $0x98] sm:$0xff]
      %v825 = vld [vmem:[%s705 + $0xa0] sm:$0xff]
      %v826 = vld [vmem:[%s705 + $0xa8] sm:$0xff]
      %v827 = vld [vmem:[%s705 + $0xb0] sm:$0xff]
      %v828 = vld [vmem:[%s705 + $0xb8] sm:$0xff]
      %v829 = vld [vmem:[%s705 + $0xc0] sm:$0xff]
      %v830 = vld [vmem:[%s705 + $0xc8] sm:$0xff]
      %v831 = vld [vmem:[%s705 + $0xd0] sm:$0xff]
      %v832 = vld [vmem:[%s705 + $0xd8] sm:$0xff]
      %v833 = vld [vmem:[%s705 + $0xe0] sm:$0xff]
      %v834 = vld [vmem:[%s705 + $0xe8] sm:$0xff]
      %v835 = vld [vmem:[%s705 + $0xf0] sm:$0xff]
      %v836 = vld [vmem:[%s705 + $0xf8] sm:$0xff]
      %v837 = vpack.c.bf16 %v806, %v805
      %v838 = vpack.c.bf16 %v808, %v807
      %v839 = vpack.c.bf16 %v810, %v809
      %v840 = vpack.c.bf16 %v812, %v811
      %v841 = vpack.c.bf16 %v814, %v813
      %v842 = vpack.c.bf16 %v816, %v815
      %v843 = vpack.c.bf16 %v818, %v817
      %v844 = vpack.c.bf16 %v820, %v819
      %v845 = vpack.c.bf16 %v822, %v821
      %v846 = vpack.c.bf16 %v824, %v823
      %v847 = vpack.c.bf16 %v826, %v825
      %v848 = vpack.c.bf16 %v828, %v827
      %v849 = vpack.c.bf16 %v830, %v829
      %v850 = vpack.c.bf16 %v832, %v831
      %v851 = vpack.c.bf16 %v834, %v833
      %v852 = vpack.c.bf16 %v836, %v835
      %v853 = vld [vmem:[%s699] sm:$0xff]
      %v854 = vld [vmem:[%s699 + $0x8] sm:$0xff]
      %v855 = vld [vmem:[%s699 + $0x10] sm:$0xff]
      %v856 = vld [vmem:[%s699 + $0x18] sm:$0xff]
      %v857 = vld [vmem:[%s699 + $0x20] sm:$0xff]
      %v858 = vld [vmem:[%s699 + $0x28] sm:$0xff]
      %v859 = vld [vmem:[%s699 + $0x30] sm:$0xff]
      %v860 = vld [vmem:[%s699 + $0x38] sm:$0xff]
      %v861 = vld [vmem:[%s699 + $0x40] sm:$0xff]
      %v862 = vld [vmem:[%s699 + $0x48] sm:$0xff]
      %v863 = vld [vmem:[%s699 + $0x50] sm:$0xff]
      %v864 = vld [vmem:[%s699 + $0x58] sm:$0xff]
      %v865 = vld [vmem:[%s699 + $0x60] sm:$0xff]
      %v866 = vld [vmem:[%s699 + $0x68] sm:$0xff]
      %v867 = vld [vmem:[%s699 + $0x70] sm:$0xff]
      %v868 = vld [vmem:[%s699 + $0x78] sm:$0xff]
      %v869 = vpack.c.bf16 %v854, %v853
      %v870 = vpack.c.bf16 %v856, %v855
      %v871 = vpack.c.bf16 %v858, %v857
      %v872 = vpack.c.bf16 %v860, %v859
      %v873 = vpack.c.bf16 %v862, %v861
      %v874 = vpack.c.bf16 %v864, %v863
      %v875 = vpack.c.bf16 %v866, %v865
      %v876 = vpack.c.bf16 %v868, %v867
      %v877 = vld [vmem:[%s7] sm:$0x3]
      %vm878 = vcmask 31744
      %v880 = vsel %vm878, %v869, 0
      %v883 = vsel %vm878, %v870, 0
      %v886 = vsel %vm878, %v871, 0
      %v889 = vsel %vm878, %v872, 0
      %v892 = vsel %vm878, %v873, 0
      %v895 = vsel %vm878, %v874, 0
      %v898 = vsel %vm878, %v875, 0
      %v901 = vsel %vm878, %v876, 0
      %vm903 = vcmask 1041408
      %v905 = vsel %vm903, %v877, 0
      %907 = vmatprep.subr.bf16.mxu0 0
      %908 = vmatpush1.bf16.msra.mxu0 %v905
      %909 = vmatprep.subr.bf16.mxu0 0
      %910 = vmatpush1.bf16.msra.mxu0 0
      %911 = vmatprep.subr.bf16.mxu0 0
      %912 = vmatpush1.bf16.msra.mxu0 0
      %913 = vmatprep.subr.bf16.mxu0 0
      %914 = vmatpush1.bf16.msra.mxu0 0
      %915 = vmatprep.subr.bf16.mxu0 0
      %916 = vmatpush1.bf16.msra.mxu0 0
      %917 = vmatprep.subr.bf16.mxu0 0
      %918 = vmatpush1.bf16.msra.mxu0 0
      %919 = vmatprep.subr.bf16.mxu0 0
      %920 = vmatpush1.bf16.msra.mxu0 0
      %921 = vmatprep.subr.bf16.mxu0 0
      %922 = vmatpush1.bf16.msra.mxu0 0
      %923 = vmatprep.subr.bf16.mxu0 0
      %924 = vmatpush1.bf16.msra.mxu0 0
      %925 = vmatprep.subr.bf16.mxu0 0
      %926 = vmatpush1.bf16.msra.mxu0 0
      %927 = vmatprep.subr.bf16.mxu0 0
      %928 = vmatpush1.bf16.msra.mxu0 0
      %929 = vmatprep.subr.bf16.mxu0 0
      %930 = vmatpush1.bf16.msra.mxu0 0
      %931 = vmatprep.subr.bf16.mxu0 0
      %932 = vmatpush1.bf16.msra.mxu0 0
      %933 = vmatprep.subr.bf16.mxu0 0
      %934 = vmatpush1.bf16.msra.mxu0 0
      %935 = vmatprep.subr.bf16.mxu0 0
      %936 = vmatpush1.bf16.msra.mxu0 0
      %937 = vmatprep.subr.bf16.mxu0 0
      %938 = vmatpush1.bf16.msra.mxu0 0
      %939 = vmatprep.mubr.bf16.mxu0 0
      %940 = vmatmul.mubr.bf16.gmra.mrb[0].mxu0 %v880
      %v941 = vpop.f32.mrb[0].mxu0
      %v942 = vadd.f32 0.0, %v941
      %v943 = vpop.f32.mrb[0].mxu0
      %v944 = vpop.f32.mrb[0].mxu0
      %v945 = vadd.f32 0.0, %v944
      %v946 = vpop.f32.mrb[0].mxu0
      %947 = vmatprep.mubr.bf16.mxu0 0
      %948 = vmatmul.mubr.bf16.gmra.mrb[0].mxu0 %v883
      %v949 = vpop.f32.mrb[0].mxu0
      %v950 = vadd.f32 0.0, %v949
      %v951 = vpop.f32.mrb[0].mxu0
      %v952 = vpop.f32.mrb[0].mxu0
      %v953 = vadd.f32 0.0, %v952
      %v954 = vpop.f32.mrb[0].mxu0
      %955 = vmatprep.mubr.bf16.mxu0 0
      %956 = vmatmul.mubr.bf16.gmra.mrb[0].mxu0 %v886
      %v957 = vpop.f32.mrb[0].mxu0
      %v958 = vadd.f32 0.0, %v957
      %v959 = vpop.f32.mrb[0].mxu0
      %v960 = vpop.f32.mrb[0].mxu0
      %v961 = vadd.f32 0.0, %v960
      %v962 = vpop.f32.mrb[0].mxu0
      %963 = vmatprep.mubr.bf16.mxu0 0
      %964 = vmatmul.mubr.bf16.gmra.mrb[0].mxu0 %v889
      %v965 = vpop.f32.mrb[0].mxu0
      %v966 = vadd.f32 0.0, %v965
      %v967 = vpop.f32.mrb[0].mxu0
      %v968 = vpop.f32.mrb[0].mxu0
      %v969 = vadd.f32 0.0, %v968
      %v970 = vpop.f32.mrb[0].mxu0
      %971 = vmatprep.mubr.bf16.mxu0 0
      %972 = vmatmul.mubr.bf16.gmra.mrb[0].mxu0 %v892
      %v973 = vpop.f32.mrb[0].mxu0
      %v974 = vadd.f32 0.0, %v973
      %v975 = vpop.f32.mrb[0].mxu0
      %v976 = vpop.f32.mrb[0].mxu0
      %v977 = vadd.f32 0.0, %v976
      %v978 = vpop.f32.mrb[0].mxu0
      %979 = vmatprep.mubr.bf16.mxu0 0
      %980 = vmatmul.mubr.bf16.gmra.mrb[0].mxu0 %v895
      %v981 = vpop.f32.mrb[0].mxu0
      %v982 = vadd.f32 0.0, %v981
      %v983 = vpop.f32.mrb[0].mxu0
      %v984 = vpop.f32.mrb[0].mxu0
      %v985 = vadd.f32 0.0, %v984
      %v986 = vpop.f32.mrb[0].mxu0
      %987 = vmatprep.mubr.bf16.mxu0 0
      %988 = vmatmul.mubr.bf16.gmra.mrb[0].mxu0 %v898
      %v989 = vpop.f32.mrb[0].mxu0
      %v990 = vadd.f32 0.0, %v989
      %v991 = vpop.f32.mrb[0].mxu0
      %v992 = vpop.f32.mrb[0].mxu0
      %v993 = vadd.f32 0.0, %v992
      %v994 = vpop.f32.mrb[0].mxu0
      %995 = vmatprep.mubr.bf16.mxu0 0
      %996 = vmatmul.mubr.bf16.gmra.mrb[0].mxu0 %v901
      %v997 = vpop.f32.mrb[0].mxu0
      %v998 = vadd.f32 0.0, %v997
      %v999 = vpop.f32.mrb[0].mxu0
      %v1000 = vpop.f32.mrb[0].mxu0
      %v1001 = vadd.f32 0.0, %v1000
      %v1002 = vpop.f32.mrb[0].mxu0
      %1003 = vdwg.mxu0
      %v1004 = vld [vmem:[%s8] sm:$0x3]
      %v1006 = vsel %vm903, %v1004, 0
      %1008 = vmatprep.subr.bf16.mxu0 0
      %1009 = vmatpush1.bf16.msra.mxu0 %v1006
      %1010 = vmatprep.subr.bf16.mxu0 0
      %1011 = vmatpush1.bf16.msra.mxu0 0
      %1012 = vmatprep.subr.bf16.mxu0 0
      %1013 = vmatpush1.bf16.msra.mxu0 0
      %1014 = vmatprep.subr.bf16.mxu0 0
      %1015 = vmatpush1.bf16.msra.mxu0 0
      %1016 = vmatprep.subr.bf16.mxu0 0
      %1017 = vmatpush1.bf16.msra.mxu0 0
      %1018 = vmatprep.subr.bf16.mxu0 0
      %1019 = vmatpush1.bf16.msra.mxu0 0
      %1020 = vmatprep.subr.bf16.mxu0 0
      %1021 = vmatpush1.bf16.msra.mxu0 0
      %1022 = vmatprep.subr.bf16.mxu0 0
      %1023 = vmatpush1.bf16.msra.mxu0 0
      %1024 = vmatprep.subr.bf16.mxu0 0
      %1025 = vmatpush1.bf16.msra.mxu0 0
      %1026 = vmatprep.subr.bf16.mxu0 0
      %1027 = vmatpush1.bf16.msra.mxu0 0
      %1028 = vmatprep.subr.bf16.mxu0 0
      %1029 = vmatpush1.bf16.msra.mxu0 0
      %1030 = vmatprep.subr.bf16.mxu0 0
      %1031 = vmatpush1.bf16.msra.mxu0 0
      %1032 = vmatprep.subr.bf16.mxu0 0
      %1033 = vmatpush1.bf16.msra.mxu0 0
      %1034 = vmatprep.subr.bf16.mxu0 0
      %1035 = vmatpush1.bf16.msra.mxu0 0
      %1036 = vmatprep.subr.bf16.mxu0 0
      %1037 = vmatpush1.bf16.msra.mxu0 0
      %1038 = vmatprep.subr.bf16.mxu0 0
      %1039 = vmatpush1.bf16.msra.mxu0 0
      %1040 = vmatprep.mubr.bf16.mxu0 0
      %1041 = vmatmul.mubr.bf16.gmra.mrb[0].mxu0 %v880
      %v1042 = vpop.f32.mrb[0].mxu0
      %v1043 = vadd.f32 0.0, %v1042
      %v1044 = vpop.f32.mrb[0].mxu0
      %v1045 = vpop.f32.mrb[0].mxu0
      %v1046 = vadd.f32 0.0, %v1045
      %v1047 = vpop.f32.mrb[0].mxu0
      %1048 = vmatprep.mubr.bf16.mxu0 0
      %1049 = vmatmul.mubr.bf16.gmra.mrb[0].mxu0 %v883
      %v1050 = vpop.f32.mrb[0].mxu0
      %v1051 = vadd.f32 0.0, %v1050
      %v1052 = vpop.f32.mrb[0].mxu0
      %v1053 = vpop.f32.mrb[0].mxu0
      %v1054 = vadd.f32 0.0, %v1053
      %v1055 = vpop.f32.mrb[0].mxu0
      %1056 = vmatprep.mubr.bf16.mxu0 0
      %1057 = vmatmul.mubr.bf16.gmra.mrb[0].mxu0 %v886
      %v1058 = vpop.f32.mrb[0].mxu0
      %v1059 = vadd.f32 0.0, %v1058
      %v1060 = vpop.f32.mrb[0].mxu0
      %v1061 = vpop.f32.mrb[0].mxu0
      %v1062 = vadd.f32 0.0, %v1061
      %v1063 = vpop.f32.mrb[0].mxu0
      %1064 = vmatprep.mubr.bf16.mxu0 0
      %1065 = vmatmul.mubr.bf16.gmra.mrb[0].mxu0 %v889
      %v1066 = vpop.f32.mrb[0].mxu0
      %v1067 = vadd.f32 0.0, %v1066
      %v1068 = vpop.f32.mrb[0].mxu0
      %v1069 = vpop.f32.mrb[0].mxu0
      %v1070 = vadd.f32 0.0, %v1069
      %v1071 = vpop.f32.mrb[0].mxu0
      %1072 = vmatprep.mubr.bf16.mxu0 0
      %1073 = vmatmul.mubr.bf16.gmra.mrb[0].mxu0 %v892
      %v1074 = vpop.f32.mrb[0].mxu0
      %v1075 = vadd.f32 0.0, %v1074
      %v1076 = vpop.f32.mrb[0].mxu0
      %v1077 = vpop.f32.mrb[0].mxu0
      %v1078 = vadd.f32 0.0, %v1077
      %v1079 = vpop.f32.mrb[0].mxu0
      %1080 = vmatprep.mubr.bf16.mxu0 0
      %1081 = vmatmul.mubr.bf16.gmra.mrb[0].mxu0 %v895
      %v1082 = vpop.f32.mrb[0].mxu0
      %v1083 = vadd.f32 0.0, %v1082
      %v1084 = vpop.f32.mrb[0].mxu0
      %v1085 = vpop.f32.mrb[0].mxu0
      %v1086 = vadd.f32 0.0, %v1085
      %v1087 = vpop.f32.mrb[0].mxu0
      %1088 = vmatprep.mubr.bf16.mxu0 0
      %1089 = vmatmul.mubr.bf16.gmra.mrb[0].mxu0 %v898
      %v1090 = vpop.f32.mrb[0].mxu0
      %v1091 = vadd.f32 0.0, %v1090
      %v1092 = vpop.f32.mrb[0].mxu0
      %v1093 = vpop.f32.mrb[0].mxu0
      %v1094 = vadd.f32 0.0, %v1093
      %v1095 = vpop.f32.mrb[0].mxu0
      %1096 = vmatprep.mubr.bf16.mxu0 0
      %1097 = vmatmul.mubr.bf16.gmra.mrb[0].mxu0 %v901
      %v1098 = vpop.f32.mrb[0].mxu0
      %v1099 = vadd.f32 0.0, %v1098
      %v1100 = vpop.f32.mrb[0].mxu0
      %v1101 = vpop.f32.mrb[0].mxu0
      %v1102 = vadd.f32 0.0, %v1101
      %v1103 = vpop.f32.mrb[0].mxu0
      %1104 = vdwg.mxu0
      %v1105 = vld [vmem:[%s9] sm:$0x3]
      %v1107 = vsel %vm903, %v1105, 0
      %1109 = vmatprep.subr.bf16.mxu0 0
      %1110 = vmatpush1.bf16.msra.mxu0 %v1107
      %1111 = vmatprep.subr.bf16.mxu0 0
      %1112 = vmatpush1.bf16.msra.mxu0 0
      %1113 = vmatprep.subr.bf16.mxu0 0
      %1114 = vmatpush1.bf16.msra.mxu0 0
      %1115 = vmatprep.subr.bf16.mxu0 0
      %1116 = vmatpush1.bf16.msra.mxu0 0
      %1117 = vmatprep.subr.bf16.mxu0 0
      %1118 = vmatpush1.bf16.msra.mxu0 0
      %1119 = vmatprep.subr.bf16.mxu0 0
      %1120 = vmatpush1.bf16.msra.mxu0 0
      %1121 = vmatprep.subr.bf16.mxu0 0
      %1122 = vmatpush1.bf16.msra.mxu0 0
      %1123 = vmatprep.subr.bf16.mxu0 0
      %1124 = vmatpush1.bf16.msra.mxu0 0
      %1125 = vmatprep.subr.bf16.mxu0 0
      %1126 = vmatpush1.bf16.msra.mxu0 0
      %1127 = vmatprep.subr.bf16.mxu0 0
      %1128 = vmatpush1.bf16.msra.mxu0 0
      %1129 = vmatprep.subr.bf16.mxu0 0
      %1130 = vmatpush1.bf16.msra.mxu0 0
      %1131 = vmatprep.subr.bf16.mxu0 0
      %1132 = vmatpush1.bf16.msra.mxu0 0
      %1133 = vmatprep.subr.bf16.mxu0 0
      %1134 = vmatpush1.bf16.msra.mxu0 0
      %1135 = vmatprep.subr.bf16.mxu0 0
      %1136 = vmatpush1.bf16.msra.mxu0 0
      %1137 = vmatprep.subr.bf16.mxu0 0
      %1138 = vmatpush1.bf16.msra.mxu0 0
      %1139 = vmatprep.subr.bf16.mxu0 0
      %1140 = vmatpush1.bf16.msra.mxu0 0
      %1141 = vmatprep.mubr.bf16.mxu0 0
      %1142 = vmatmul.mubr.bf16.gmra.mrb[0].mxu0 %v880
      %v1143 = vpop.f32.mrb[0].mxu0
      %v1144 = vadd.f32 0.0, %v1143
      %v1145 = vpop.f32.mrb[0].mxu0
      %v1146 = vpop.f32.mrb[0].mxu0
      %v1147 = vadd.f32 0.0, %v1146
      %v1148 = vpop.f32.mrb[0].mxu0
      %1149 = vmatprep.mubr.bf16.mxu0 0
      %1150 = vmatmul.mubr.bf16.gmra.mrb[0].mxu0 %v883
      %v1151 = vpop.f32.mrb[0].mxu0
      %v1152 = vadd.f32 0.0, %v1151
      %v1153 = vpop.f32.mrb[0].mxu0
      %v1154 = vpop.f32.mrb[0].mxu0
      %v1155 = vadd.f32 0.0, %v1154
      %v1156 = vpop.f32.mrb[0].mxu0
      %1157 = vmatprep.mubr.bf16.mxu0 0
      %1158 = vmatmul.mubr.bf16.gmra.mrb[0].mxu0 %v886
      %v1159 = vpop.f32.mrb[0].mxu0
      %v1160 = vadd.f32 0.0, %v1159
      %v1161 = vpop.f32.mrb[0].mxu0
      %v1162 = vpop.f32.mrb[0].mxu0
      %v1163 = vadd.f32 0.0, %v1162
      %v1164 = vpop.f32.mrb[0].mxu0
      %1165 = vmatprep.mubr.bf16.mxu0 0
      %1166 = vmatmul.mubr.bf16.gmra.mrb[0].mxu0 %v889
      %v1167 = vpop.f32.mrb[0].mxu0
      %v1168 = vadd.f32 0.0, %v1167
      %v1169 = vpop.f32.mrb[0].mxu0
      %v1170 = vpop.f32.mrb[0].mxu0
      %v1171 = vadd.f32 0.0, %v1170
      %v1172 = vpop.f32.mrb[0].mxu0
      %1173 = vmatprep.mubr.bf16.mxu0 0
      %1174 = vmatmul.mubr.bf16.gmra.mrb[0].mxu0 %v892
      %v1175 = vpop.f32.mrb[0].mxu0
      %v1176 = vadd.f32 0.0, %v1175
      %v1177 = vpop.f32.mrb[0].mxu0
      %v1178 = vpop.f32.mrb[0].mxu0
      %v1179 = vadd.f32 0.0, %v1178
      %v1180 = vpop.f32.mrb[0].mxu0
      %1181 = vmatprep.mubr.bf16.mxu0 0
      %1182 = vmatmul.mubr.bf16.gmra.mrb[0].mxu0 %v895
      %v1183 = vpop.f32.mrb[0].mxu0
      %v1184 = vadd.f32 0.0, %v1183
      %v1185 = vpop.f32.mrb[0].mxu0
      %v1186 = vpop.f32.mrb[0].mxu0
      %v1187 = vadd.f32 0.0, %v1186
      %v1188 = vpop.f32.mrb[0].mxu0
      %1189 = vmatprep.mubr.bf16.mxu0 0
      %1190 = vmatmul.mubr.bf16.gmra.mrb[0].mxu0 %v898
      %v1191 = vpop.f32.mrb[0].mxu0
      %v1192 = vadd.f32 0.0, %v1191
      %v1193 = vpop.f32.mrb[0].mxu0
      %v1194 = vpop.f32.mrb[0].mxu0
      %v1195 = vadd.f32 0.0, %v1194
      %v1196 = vpop.f32.mrb[0].mxu0
      %1197 = vmatprep.mubr.bf16.mxu0 0
      %1198 = vmatmul.mubr.bf16.gmra.mrb[0].mxu0 %v901
      %v1199 = vpop.f32.mrb[0].mxu0
      %v1200 = vadd.f32 0.0, %v1199
      %v1201 = vpop.f32.mrb[0].mxu0
      %v1202 = vpop.f32.mrb[0].mxu0
      %v1203 = vadd.f32 0.0, %v1202
      %v1204 = vpop.f32.mrb[0].mxu0
      %1205 = vdwg.mxu0
      %v1206 = vld [vmem:[%s10] sm:$0x3]
      %vm1207 = vcmask 23552
      %v1209 = vsel %vm1207, %v837, 0
      %v1212 = vsel %vm1207, %v838, 0
      %v1215 = vsel %vm1207, %v839, 0
      %v1218 = vsel %vm1207, %v840, 0
      %v1221 = vsel %vm1207, %v841, 0
      %v1224 = vsel %vm1207, %v842, 0
      %v1227 = vsel %vm1207, %v843, 0
      %v1230 = vsel %vm1207, %v844, 0
      %v1233 = vsel %vm1207, %v845, 0
      %v1236 = vsel %vm1207, %v846, 0
      %v1239 = vsel %vm1207, %v847, 0
      %v1242 = vsel %vm1207, %v848, 0
      %v1245 = vsel %vm1207, %v849, 0
      %v1248 = vsel %vm1207, %v850, 0
      %v1251 = vsel %vm1207, %v851, 0
      %v1254 = vsel %vm1207, %v852, 0
      %vm1256 = vcmask 1040384
      %v1257 = vsel %vm1256, 4294967295, 65535
      %v1258 = vsel %vm903, %v1257, 0
      %v1260 = vand.u32 %v1206, %v1258
      %1262 = vmatprep.subr.bf16.mxu0 0
      %1263 = vmatpush1.bf16.msra.mxu0 %v1260
      %1264 = vmatprep.subr.bf16.mxu0 0
      %1265 = vmatpush1.bf16.msra.mxu0 0
      %1266 = vmatprep.subr.bf16.mxu0 0
      %1267 = vmatpush1.bf16.msra.mxu0 0
      %1268 = vmatprep.subr.bf16.mxu0 0
      %1269 = vmatpush1.bf16.msra.mxu0 0
      %1270 = vmatprep.subr.bf16.mxu0 0
      %1271 = vmatpush1.bf16.msra.mxu0 0
      %1272 = vmatprep.subr.bf16.mxu0 0
      %1273 = vmatpush1.bf16.msra.mxu0 0
      %1274 = vmatprep.subr.bf16.mxu0 0
      %1275 = vmatpush1.bf16.msra.mxu0 0
      %1276 = vmatprep.subr.bf16.mxu0 0
      %1277 = vmatpush1.bf16.msra.mxu0 0
      %1278 = vmatprep.subr.bf16.mxu0 0
      %1279 = vmatpush1.bf16.msra.mxu0 0
      %1280 = vmatprep.subr.bf16.mxu0 0
      %1281 = vmatpush1.bf16.msra.mxu0 0
      %1282 = vmatprep.subr.bf16.mxu0 0
      %1283 = vmatpush1.bf16.msra.mxu0 0
      %1284 = vmatprep.subr.bf16.mxu0 0
      %1285 = vmatpush1.bf16.msra.mxu0 0
      %1286 = vmatprep.subr.bf16.mxu0 0
      %1287 = vmatpush1.bf16.msra.mxu0 0
      %1288 = vmatprep.subr.bf16.mxu0 0
      %1289 = vmatpush1.bf16.msra.mxu0 0
      %1290 = vmatprep.subr.bf16.mxu0 0
      %1291 = vmatpush1.bf16.msra.mxu0 0
      %1292 = vmatprep.subr.bf16.mxu0 0
      %1293 = vmatpush1.bf16.msra.mxu0 0
      %1294 = vmatprep.mubr.bf16.mxu0 0
      %1295 = vmatmul.mubr.bf16.gmra.mrb[0].mxu0 %v1209
      %v1296 = vpop.f32.mrb[0].mxu0
      %v1297 = vadd.f32 0.0, %v1296
      %v1298 = vpop.f32.mrb[0].mxu0
      %v1299 = vpop.f32.mrb[0].mxu0
      %v1300 = vadd.f32 0.0, %v1299
      %v1301 = vpop.f32.mrb[0].mxu0
      %1302 = vmatprep.mubr.bf16.mxu0 0
      %1303 = vmatmul.mubr.bf16.gmra.mrb[0].mxu0 %v1212
      %v1304 = vpop.f32.mrb[0].mxu0
      %v1305 = vadd.f32 0.0, %v1304
      %v1306 = vpop.f32.mrb[0].mxu0
      %v1307 = vpop.f32.mrb[0].mxu0
      %v1308 = vadd.f32 0.0, %v1307
      %v1309 = vpop.f32.mrb[0].mxu0
      %1310 = vmatprep.mubr.bf16.mxu0 0
      %1311 = vmatmul.mubr.bf16.gmra.mrb[0].mxu0 %v1215
      %v1312 = vpop.f32.mrb[0].mxu0
      %v1313 = vadd.f32 0.0, %v1312
      %v1314 = vpop.f32.mrb[0].mxu0
      %v1315 = vpop.f32.mrb[0].mxu0
      %v1316 = vadd.f32 0.0, %v1315
      %v1317 = vpop.f32.mrb[0].mxu0
      %1318 = vmatprep.mubr.bf16.mxu0 0
      %1319 = vmatmul.mubr.bf16.gmra.mrb[0].mxu0 %v1218
      %v1320 = vpop.f32.mrb[0].mxu0
      %v1321 = vadd.f32 0.0, %v1320
      %v1322 = vpop.f32.mrb[0].mxu0
      %v1323 = vpop.f32.mrb[0].mxu0
      %v1324 = vadd.f32 0.0, %v1323
      %v1325 = vpop.f32.mrb[0].mxu0
      %1326 = vmatprep.mubr.bf16.mxu0 0
      %1327 = vmatmul.mubr.bf16.gmra.mrb[0].mxu0 %v1221
      %v1328 = vpop.f32.mrb[0].mxu0
      %v1329 = vadd.f32 0.0, %v1328
      %v1330 = vpop.f32.mrb[0].mxu0
      %v1331 = vpop.f32.mrb[0].mxu0
      %v1332 = vadd.f32 0.0, %v1331
      %v1333 = vpop.f32.mrb[0].mxu0
      %1334 = vmatprep.mubr.bf16.mxu0 0
      %1335 = vmatmul.mubr.bf16.gmra.mrb[0].mxu0 %v1224
      %v1336 = vpop.f32.mrb[0].mxu0
      %v1337 = vadd.f32 0.0, %v1336
      %v1338 = vpop.f32.mrb[0].mxu0
      %v1339 = vpop.f32.mrb[0].mxu0
      %v1340 = vadd.f32 0.0, %v1339
      %v1341 = vpop.f32.mrb[0].mxu0
      %1342 = vmatprep.mubr.bf16.mxu0 0
      %1343 = vmatmul.mubr.bf16.gmra.mrb[0].mxu0 %v1227
      %v1344 = vpop.f32.mrb[0].mxu0
      %v1345 = vadd.f32 0.0, %v1344
      %v1346 = vpop.f32.mrb[0].mxu0
      %v1347 = vpop.f32.mrb[0].mxu0
      %v1348 = vadd.f32 0.0, %v1347
      %v1349 = vpop.f32.mrb[0].mxu0
      %1350 = vmatprep.mubr.bf16.mxu0 0
      %1351 = vmatmul.mubr.bf16.gmra.mrb[0].mxu0 %v1230
      %v1352 = vpop.f32.mrb[0].mxu0
      %v1353 = vadd.f32 0.0, %v1352
      %v1354 = vpop.f32.mrb[0].mxu0
      %v1355 = vpop.f32.mrb[0].mxu0
      %v1356 = vadd.f32 0.0, %v1355
      %v1357 = vpop.f32.mrb[0].mxu0
      %1358 = vmatprep.mubr.bf16.mxu0 0
      %1359 = vmatmul.mubr.bf16.gmra.mrb[0].mxu0 %v1233
      %v1360 = vpop.f32.mrb[0].mxu0
      %v1361 = vadd.f32 0.0, %v1360
      %v1362 = vpop.f32.mrb[0].mxu0
      %v1363 = vpop.f32.mrb[0].mxu0
      %v1364 = vadd.f32 0.0, %v1363
      %v1365 = vpop.f32.mrb[0].mxu0
      %1366 = vmatprep.mubr.bf16.mxu0 0
      %1367 = vmatmul.mubr.bf16.gmra.mrb[0].mxu0 %v1236
      %v1368 = vpop.f32.mrb[0].mxu0
      %v1369 = vadd.f32 0.0, %v1368
      %v1370 = vpop.f32.mrb[0].mxu0
      %v1371 = vpop.f32.mrb[0].mxu0
      %v1372 = vadd.f32 0.0, %v1371
      %v1373 = vpop.f32.mrb[0].mxu0
      %1374 = vmatprep.mubr.bf16.mxu0 0
      %1375 = vmatmul.mubr.bf16.gmra.mrb[0].mxu0 %v1239
      %v1376 = vpop.f32.mrb[0].mxu0
      %v1377 = vadd.f32 0.0, %v1376
      %v1378 = vpop.f32.mrb[0].mxu0
      %v1379 = vpop.f32.mrb[0].mxu0
      %v1380 = vadd.f32 0.0, %v1379
      %v1381 = vpop.f32.mrb[0].mxu0
      %1382 = vmatprep.mubr.bf16.mxu0 0
      %1383 = vmatmul.mubr.bf16.gmra.mrb[0].mxu0 %v1242
      %v1384 = vpop.f32.mrb[0].mxu0
      %v1385 = vadd.f32 0.0, %v1384
      %v1386 = vpop.f32.mrb[0].mxu0
      %v1387 = vpop.f32.mrb[0].mxu0
      %v1388 = vadd.f32 0.0, %v1387
      %v1389 = vpop.f32.mrb[0].mxu0
      %1390 = vmatprep.mubr.bf16.mxu0 0
      %1391 = vmatmul.mubr.bf16.gmra.mrb[0].mxu0 %v1245
      %v1392 = vpop.f32.mrb[0].mxu0
      %v1393 = vadd.f32 0.0, %v1392
      %v1394 = vpop.f32.mrb[0].mxu0
      %v1395 = vpop.f32.mrb[0].mxu0
      %v1396 = vadd.f32 0.0, %v1395
      %v1397 = vpop.f32.mrb[0].mxu0
      %1398 = vmatprep.mubr.bf16.mxu0 0
      %1399 = vmatmul.mubr.bf16.gmra.mrb[0].mxu0 %v1248
      %v1400 = vpop.f32.mrb[0].mxu0
      %v1401 = vadd.f32 0.0, %v1400
      %v1402 = vpop.f32.mrb[0].mxu0
      %v1403 = vpop.f32.mrb[0].mxu0
      %v1404 = vadd.f32 0.0, %v1403
      %v1405 = vpop.f32.mrb[0].mxu0
      %1406 = vmatprep.mubr.bf16.mxu0 0
      %1407 = vmatmul.mubr.bf16.gmra.mrb[0].mxu0 %v1251
      %v1408 = vpop.f32.mrb[0].mxu0
      %v1409 = vadd.f32 0.0, %v1408
      %v1410 = vpop.f32.mrb[0].mxu0
      %v1411 = vpop.f32.mrb[0].mxu0
      %v1412 = vadd.f32 0.0, %v1411
      %v1413 = vpop.f32.mrb[0].mxu0
      %1414 = vmatprep.mubr.bf16.mxu0 0
      %1415 = vmatmul.mubr.bf16.gmra.mrb[0].mxu0 %v1254
      %v1416 = vpop.f32.mrb[0].mxu0
      %v1417 = vadd.f32 0.0, %v1416
      %v1418 = vpop.f32.mrb[0].mxu0
      %v1419 = vpop.f32.mrb[0].mxu0
      %v1420 = vadd.f32 0.0, %v1419
      %v1421 = vpop.f32.mrb[0].mxu0
      %1422 = vdwg.mxu0
      %v1423 = vpack.c.bf16 %v1046, %v1043
      %v1424 = vpack.c.bf16 %v1054, %v1051
      %v1425 = vpack.c.bf16 %v1062, %v1059
      %v1426 = vpack.c.bf16 %v1070, %v1067
      %v1427 = vpack.c.bf16 %v1078, %v1075
      %v1428 = vpack.c.bf16 %v1086, %v1083
      %v1429 = vpack.c.bf16 %v1094, %v1091
      %v1430 = vpack.c.bf16 %v1102, %v1099
      %v1431 = vpack.c.bf16 %v1147, %v1144
      %v1432 = vpack.c.bf16 %v1155, %v1152
      %v1433 = vpack.c.bf16 %v1163, %v1160
      %v1434 = vpack.c.bf16 %v1171, %v1168
      %v1435 = vpack.c.bf16 %v1179, %v1176
      %v1436 = vpack.c.bf16 %v1187, %v1184
      %v1437 = vpack.c.bf16 %v1195, %v1192
      %v1438 = vpack.c.bf16 %v1203, %v1200
      %v1471 = vunpack.c.l.b16 %v756
      %v1472 = vunpack.c.l.b16 %v757
      %v1473 = vunpack.c.l.b16 %v758
      %v1474 = vunpack.c.l.b16 %v759
      %v1475 = vunpack.c.l.b16 %v760
      %v1476 = vunpack.c.l.b16 %v761
      %v1477 = vunpack.c.l.b16 %v762
      %v1478 = vunpack.c.l.b16 %v763
      %v1479 = vunpack.c.l.b16 %v764
      %v1480 = vunpack.c.l.b16 %v765
      %v1481 = vunpack.c.l.b16 %v766
      %v1482 = vunpack.c.l.b16 %v767
      %v1483 = vunpack.c.l.b16 %v768
      %v1484 = vunpack.c.l.b16 %v769
      %v1485 = vunpack.c.l.b16 %v770
      %v1486 = vunpack.c.l.b16 %v771
      %v1487 = vunpack.c.l.b16 %v772
      %v1488 = vunpack.c.l.b16 %v773
      %v1489 = vunpack.c.l.b16 %v774
      %v1490 = vunpack.c.l.b16 %v775
      %v1491 = vunpack.c.l.b16 %v776
      %v1492 = vunpack.c.l.b16 %v777
      %v1493 = vunpack.c.l.b16 %v778
      %v1494 = vunpack.c.l.b16 %v779
      %v1495 = vunpack.c.l.b16 %v780
      %v1496 = vunpack.c.l.b16 %v781
      %v1497 = vunpack.c.l.b16 %v782
      %v1498 = vunpack.c.l.b16 %v783
      %v1499 = vunpack.c.l.b16 %v784
      %v1500 = vunpack.c.l.b16 %v785
      %v1501 = vunpack.c.l.b16 %v786
      %v1502 = vunpack.c.l.b16 %v787
      %v1503 = vpack.c.b16 %v1472, %v1471
      %v1504 = vpack.c.b16 %v1474, %v1473
      %v1505 = vpack.c.b16 %v1476, %v1475
      %v1506 = vpack.c.b16 %v1478, %v1477
      %v1507 = vpack.c.b16 %v1480, %v1479
      %v1508 = vpack.c.b16 %v1482, %v1481
      %v1509 = vpack.c.b16 %v1484, %v1483
      %v1510 = vpack.c.b16 %v1486, %v1485
      %v1511 = vpack.c.b16 %v1488, %v1487
      %v1512 = vpack.c.b16 %v1490, %v1489
      %v1513 = vpack.c.b16 %v1492, %v1491
      %v1514 = vpack.c.b16 %v1494, %v1493
      %v1515 = vpack.c.b16 %v1496, %v1495
      %v1516 = vpack.c.b16 %v1498, %v1497
      %v1517 = vpack.c.b16 %v1500, %v1499
      %v1518 = vpack.c.b16 %v1502, %v1501
      %1535 = vmatprep.subr.bf16.mxu0 0
      %1536 = vmatpush1.bf16.msra.mxu0 %v1431
      %1537 = vmatprep.subr.bf16.mxu0 0
      %1538 = vmatpush1.bf16.msra.mxu0 %v1432
      %1539 = vmatprep.subr.bf16.mxu0 0
      %1540 = vmatpush1.bf16.msra.mxu0 %v1433
      %1541 = vmatprep.subr.bf16.mxu0 0
      %1542 = vmatpush1.bf16.msra.mxu0 %v1434
      %1543 = vmatprep.subr.bf16.mxu0 0
      %1544 = vmatpush1.bf16.msra.mxu0 %v1435
      %1545 = vmatprep.subr.bf16.mxu0 0
      %1546 = vmatpush1.bf16.msra.mxu0 %v1436
      %1547 = vmatprep.subr.bf16.mxu0 0
      %1548 = vmatpush1.bf16.msra.mxu0 %v1437
      %1549 = vmatprep.subr.bf16.mxu0 0
      %1550 = vmatpush1.bf16.msra.mxu0 %v1438
      %1551 = vmatprep.subr.bf16.mxu0 0
      %1552 = vmatpush1.bf16.msra.mxu0 0
      %1553 = vmatprep.subr.bf16.mxu0 0
      %1554 = vmatpush1.bf16.msra.mxu0 0
      %1555 = vmatprep.subr.bf16.mxu0 0
      %1556 = vmatpush1.bf16.msra.mxu0 0
      %1557 = vmatprep.subr.bf16.mxu0 0
      %1558 = vmatpush1.bf16.msra.mxu0 0
      %1559 = vmatprep.subr.bf16.mxu0 0
      %1560 = vmatpush1.bf16.msra.mxu0 0
      %1561 = vmatprep.subr.bf16.mxu0 0
      %1562 = vmatpush1.bf16.msra.mxu0 0
      %1563 = vmatprep.subr.bf16.mxu0 0
      %1564 = vmatpush1.bf16.msra.mxu0 0
      %1565 = vmatprep.subr.bf16.mxu0 0
      %1566 = vmatpush1.bf16.msra.mxu0 0
      %1567 = vmatprep.mubr.bf16.mxu0 0
      %1568 = vmatmul.mubr.bf16.gmra.mrb[0].mxu0 %v1503
      %v1569 = vpop.f32.mrb[0].mxu0
      %v1570 = vadd.f32 0.0, %v1569
      %v1571 = vpop.f32.mrb[0].mxu0
      %v1572 = vpop.f32.mrb[0].mxu0
      %v1573 = vadd.f32 0.0, %v1572
      %v1574 = vpop.f32.mrb[0].mxu0
      %1575 = vmatprep.mubr.bf16.mxu0 0
      %1576 = vmatmul.mubr.bf16.gmra.mrb[0].mxu0 %v1504
      %v1577 = vpop.f32.mrb[0].mxu0
      %v1578 = vadd.f32 0.0, %v1577
      %v1579 = vpop.f32.mrb[0].mxu0
      %v1580 = vpop.f32.mrb[0].mxu0
      %v1581 = vadd.f32 0.0, %v1580
      %v1582 = vpop.f32.mrb[0].mxu0
      %1583 = vmatprep.mubr.bf16.mxu0 0
      %1584 = vmatmul.mubr.bf16.gmra.mrb[0].mxu0 %v1505
      %v1585 = vpop.f32.mrb[0].mxu0
      %v1586 = vadd.f32 0.0, %v1585
      %v1587 = vpop.f32.mrb[0].mxu0
      %v1588 = vpop.f32.mrb[0].mxu0
      %v1589 = vadd.f32 0.0, %v1588
      %v1590 = vpop.f32.mrb[0].mxu0
      %1591 = vmatprep.mubr.bf16.mxu0 0
      %1592 = vmatmul.mubr.bf16.gmra.mrb[0].mxu0 %v1506
      %v1593 = vpop.f32.mrb[0].mxu0
      %v1594 = vadd.f32 0.0, %v1593
      %v1595 = vpop.f32.mrb[0].mxu0
      %v1596 = vpop.f32.mrb[0].mxu0
      %v1597 = vadd.f32 0.0, %v1596
      %v1598 = vpop.f32.mrb[0].mxu0
      %1599 = vmatprep.mubr.bf16.mxu0 0
      %1600 = vmatmul.mubr.bf16.gmra.mrb[0].mxu0 %v1507
      %v1601 = vpop.f32.mrb[0].mxu0
      %v1602 = vadd.f32 0.0, %v1601
      %v1603 = vpop.f32.mrb[0].mxu0
      %v1604 = vpop.f32.mrb[0].mxu0
      %v1605 = vadd.f32 0.0, %v1604
      %v1606 = vpop.f32.mrb[0].mxu0
      %1607 = vmatprep.mubr.bf16.mxu0 0
      %1608 = vmatmul.mubr.bf16.gmra.mrb[0].mxu0 %v1508
      %v1609 = vpop.f32.mrb[0].mxu0
      %v1610 = vadd.f32 0.0, %v1609
      %v1611 = vpop.f32.mrb[0].mxu0
      %v1612 = vpop.f32.mrb[0].mxu0
      %v1613 = vadd.f32 0.0, %v1612
      %v1614 = vpop.f32.mrb[0].mxu0
      %1615 = vmatprep.mubr.bf16.mxu0 0
      %1616 = vmatmul.mubr.bf16.gmra.mrb[0].mxu0 %v1509
      %v1617 = vpop.f32.mrb[0].mxu0
      %v1618 = vadd.f32 0.0, %v1617
      %v1619 = vpop.f32.mrb[0].mxu0
      %v1620 = vpop.f32.mrb[0].mxu0
      %v1621 = vadd.f32 0.0, %v1620
      %v1622 = vpop.f32.mrb[0].mxu0
      %1623 = vmatprep.mubr.bf16.mxu0 0
      %1624 = vmatmul.mubr.bf16.gmra.mrb[0].mxu0 %v1510
      %v1625 = vpop.f32.mrb[0].mxu0
      %v1626 = vadd.f32 0.0, %v1625
      %v1627 = vpop.f32.mrb[0].mxu0
      %v1628 = vpop.f32.mrb[0].mxu0
      %v1629 = vadd.f32 0.0, %v1628
      %v1630 = vpop.f32.mrb[0].mxu0
      %1631 = vmatprep.mubr.bf16.mxu0 0
      %1632 = vmatmul.mubr.bf16.gmra.mrb[0].mxu0 %v1511
      %v1633 = vpop.f32.mrb[0].mxu0
      %v1634 = vadd.f32 0.0, %v1633
      %v1635 = vpop.f32.mrb[0].mxu0
      %v1636 = vpop.f32.mrb[0].mxu0
      %v1637 = vadd.f32 0.0, %v1636
      %v1638 = vpop.f32.mrb[0].mxu0
      %1639 = vmatprep.mubr.bf16.mxu0 0
      %1640 = vmatmul.mubr.bf16.gmra.mrb[0].mxu0 %v1512
      %v1641 = vpop.f32.mrb[0].mxu0
      %v1642 = vadd.f32 0.0, %v1641
      %v1643 = vpop.f32.mrb[0].mxu0
      %v1644 = vpop.f32.mrb[0].mxu0
      %v1645 = vadd.f32 0.0, %v1644
      %v1646 = vpop.f32.mrb[0].mxu0
      %1647 = vmatprep.mubr.bf16.mxu0 0
      %1648 = vmatmul.mubr.bf16.gmra.mrb[0].mxu0 %v1513
      %v1649 = vpop.f32.mrb[0].mxu0
      %v1650 = vadd.f32 0.0, %v1649
      %v1651 = vpop.f32.mrb[0].mxu0
      %v1652 = vpop.f32.mrb[0].mxu0
      %v1653 = vadd.f32 0.0, %v1652
      %v1654 = vpop.f32.mrb[0].mxu0
      %1655 = vmatprep.mubr.bf16.mxu0 0
      %1656 = vmatmul.mubr.bf16.gmra.mrb[0].mxu0 %v1514
      %v1657 = vpop.f32.mrb[0].mxu0
      %v1658 = vadd.f32 0.0, %v1657
      %v1659 = vpop.f32.mrb[0].mxu0
      %v1660 = vpop.f32.mrb[0].mxu0
      %v1661 = vadd.f32 0.0, %v1660
      %v1662 = vpop.f32.mrb[0].mxu0
      %1663 = vmatprep.mubr.bf16.mxu0 0
      %1664 = vmatmul.mubr.bf16.gmra.mrb[0].mxu0 %v1515
      %v1665 = vpop.f32.mrb[0].mxu0
      %v1666 = vadd.f32 0.0, %v1665
      %v1667 = vpop.f32.mrb[0].mxu0
      %v1668 = vpop.f32.mrb[0].mxu0
      %v1669 = vadd.f32 0.0, %v1668
      %v1670 = vpop.f32.mrb[0].mxu0
      %1671 = vmatprep.mubr.bf16.mxu0 0
      %1672 = vmatmul.mubr.bf16.gmra.mrb[0].mxu0 %v1516
      %v1673 = vpop.f32.mrb[0].mxu0
      %v1674 = vadd.f32 0.0, %v1673
      %v1675 = vpop.f32.mrb[0].mxu0
      %v1676 = vpop.f32.mrb[0].mxu0
      %v1677 = vadd.f32 0.0, %v1676
      %v1678 = vpop.f32.mrb[0].mxu0
      %1679 = vmatprep.mubr.bf16.mxu0 0
      %1680 = vmatmul.mubr.bf16.gmra.mrb[0].mxu0 %v1517
      %v1681 = vpop.f32.mrb[0].mxu0
      %v1682 = vadd.f32 0.0, %v1681
      %v1683 = vpop.f32.mrb[0].mxu0
      %v1684 = vpop.f32.mrb[0].mxu0
      %v1685 = vadd.f32 0.0, %v1684
      %v1686 = vpop.f32.mrb[0].mxu0
      %1687 = vmatprep.mubr.bf16.mxu0 0
      %1688 = vmatmul.mubr.bf16.gmra.mrb[0].mxu0 %v1518
      %v1689 = vpop.f32.mrb[0].mxu0
      %v1690 = vadd.f32 0.0, %v1689
      %v1691 = vpop.f32.mrb[0].mxu0
      %v1692 = vpop.f32.mrb[0].mxu0
      %v1693 = vadd.f32 0.0, %v1692
      %v1694 = vpop.f32.mrb[0].mxu0
      %1695 = vdwg.mxu0
      %v1728 = vunpack.c.l.b16 %v724
      %v1729 = vunpack.c.l.b16 %v725
      %v1730 = vunpack.c.l.b16 %v726
      %v1731 = vunpack.c.l.b16 %v727
      %v1732 = vunpack.c.l.b16 %v728
      %v1733 = vunpack.c.l.b16 %v729
      %v1734 = vunpack.c.l.b16 %v730
      %v1735 = vunpack.c.l.b16 %v731
      %v1736 = vunpack.c.l.b16 %v732
      %v1737 = vunpack.c.l.b16 %v733
      %v1738 = vunpack.c.l.b16 %v734
      %v1739 = vunpack.c.l.b16 %v735
      %v1740 = vunpack.c.l.b16 %v736
      %v1741 = vunpack.c.l.b16 %v737
      %v1742 = vunpack.c.l.b16 %v738
      %v1743 = vunpack.c.l.b16 %v739
      %v1744 = vunpack.c.l.b16 %v740
      %v1745 = vunpack.c.l.b16 %v741
      %v1746 = vunpack.c.l.b16 %v742
      %v1747 = vunpack.c.l.b16 %v743
      %v1748 = vunpack.c.l.b16 %v744
      %v1749 = vunpack.c.l.b16 %v745
      %v1750 = vunpack.c.l.b16 %v746
      %v1751 = vunpack.c.l.b16 %v747
      %v1752 = vunpack.c.l.b16 %v748
      %v1753 = vunpack.c.l.b16 %v749
      %v1754 = vunpack.c.l.b16 %v750
      %v1755 = vunpack.c.l.b16 %v751
      %v1756 = vunpack.c.l.b16 %v752
      %v1757 = vunpack.c.l.b16 %v753
      %v1758 = vunpack.c.l.b16 %v754
      %v1759 = vunpack.c.l.b16 %v755
      %v1760 = vpack.c.b16 %v1729, %v1728
      %v1761 = vpack.c.b16 %v1731, %v1730
      %v1762 = vpack.c.b16 %v1733, %v1732
      %v1763 = vpack.c.b16 %v1735, %v1734
      %v1764 = vpack.c.b16 %v1737, %v1736
      %v1765 = vpack.c.b16 %v1739, %v1738
      %v1766 = vpack.c.b16 %v1741, %v1740
      %v1767 = vpack.c.b16 %v1743, %v1742
      %v1768 = vpack.c.b16 %v1745, %v1744
      %v1769 = vpack.c.b16 %v1747, %v1746
      %v1770 = vpack.c.b16 %v1749, %v1748
      %v1771 = vpack.c.b16 %v1751, %v1750
      %v1772 = vpack.c.b16 %v1753, %v1752
      %v1773 = vpack.c.b16 %v1755, %v1754
      %v1774 = vpack.c.b16 %v1757, %v1756
      %v1775 = vpack.c.b16 %v1759, %v1758
      %1792 = vmatprep.subr.bf16.mxu0 0
      %1793 = vmatpush1.bf16.msra.mxu0 %v1423
      %1794 = vmatprep.subr.bf16.mxu0 0
      %1795 = vmatpush1.bf16.msra.mxu0 %v1424
      %1796 = vmatprep.subr.bf16.mxu0 0
      %1797 = vmatpush1.bf16.msra.mxu0 %v1425
      %1798 = vmatprep.subr.bf16.mxu0 0
      %1799 = vmatpush1.bf16.msra.mxu0 %v1426
      %1800 = vmatprep.subr.bf16.mxu0 0
      %1801 = vmatpush1.bf16.msra.mxu0 %v1427
      %1802 = vmatprep.subr.bf16.mxu0 0
      %1803 = vmatpush1.bf16.msra.mxu0 %v1428
      %1804 = vmatprep.subr.bf16.mxu0 0
      %1805 = vmatpush1.bf16.msra.mxu0 %v1429
      %1806 = vmatprep.subr.bf16.mxu0 0
      %1807 = vmatpush1.bf16.msra.mxu0 %v1430
      %1808 = vmatprep.subr.bf16.mxu0 0
      %1809 = vmatpush1.bf16.msra.mxu0 0
      %1810 = vmatprep.subr.bf16.mxu0 0
      %1811 = vmatpush1.bf16.msra.mxu0 0
      %1812 = vmatprep.subr.bf16.mxu0 0
      %1813 = vmatpush1.bf16.msra.mxu0 0
      %1814 = vmatprep.subr.bf16.mxu0 0
      %1815 = vmatpush1.bf16.msra.mxu0 0
      %1816 = vmatprep.subr.bf16.mxu0 0
      %1817 = vmatpush1.bf16.msra.mxu0 0
      %1818 = vmatprep.subr.bf16.mxu0 0
      %1819 = vmatpush1.bf16.msra.mxu0 0
      %1820 = vmatprep.subr.bf16.mxu0 0
      %1821 = vmatpush1.bf16.msra.mxu0 0
      %1822 = vmatprep.subr.bf16.mxu0 0
      %1823 = vmatpush1.bf16.msra.mxu0 0
      %1824 = vmatprep.mubr.bf16.mxu0 0
      %1825 = vmatmul.mubr.bf16.gmra.mrb[0].mxu0 %v1760
      %v1826 = vpop.f32.mrb[0].mxu0
      %v1827 = vadd.f32 %v1570, %v1826
      %v1828 = vpop.f32.mrb[0].mxu0
      %v1829 = vpop.f32.mrb[0].mxu0
      %v1830 = vadd.f32 %v1573, %v1829
      %v1831 = vpop.f32.mrb[0].mxu0
      %1832 = vmatprep.mubr.bf16.mxu0 0
      %1833 = vmatmul.mubr.bf16.gmra.mrb[0].mxu0 %v1761
      %v1834 = vpop.f32.mrb[0].mxu0
      %v1835 = vadd.f32 %v1578, %v1834
      %v1836 = vpop.f32.mrb[0].mxu0
      %v1837 = vpop.f32.mrb[0].mxu0
      %v1838 = vadd.f32 %v1581, %v1837
      %v1839 = vpop.f32.mrb[0].mxu0
      %1840 = vmatprep.mubr.bf16.mxu0 0
      %1841 = vmatmul.mubr.bf16.gmra.mrb[0].mxu0 %v1762
      %v1842 = vpop.f32.mrb[0].mxu0
      %v1843 = vadd.f32 %v1586, %v1842
      %v1844 = vpop.f32.mrb[0].mxu0
      %v1845 = vpop.f32.mrb[0].mxu0
      %v1846 = vadd.f32 %v1589, %v1845
      %v1847 = vpop.f32.mrb[0].mxu0
      %1848 = vmatprep.mubr.bf16.mxu0 0
      %1849 = vmatmul.mubr.bf16.gmra.mrb[0].mxu0 %v1763
      %v1850 = vpop.f32.mrb[0].mxu0
      %v1851 = vadd.f32 %v1594, %v1850
      %v1852 = vpop.f32.mrb[0].mxu0
      %v1853 = vpop.f32.mrb[0].mxu0
      %v1854 = vadd.f32 %v1597, %v1853
      %v1855 = vpop.f32.mrb[0].mxu0
      %1856 = vmatprep.mubr.bf16.mxu0 0
      %1857 = vmatmul.mubr.bf16.gmra.mrb[0].mxu0 %v1764
      %v1858 = vpop.f32.mrb[0].mxu0
      %v1859 = vadd.f32 %v1602, %v1858
      %v1860 = vpop.f32.mrb[0].mxu0
      %v1861 = vpop.f32.mrb[0].mxu0
      %v1862 = vadd.f32 %v1605, %v1861
      %v1863 = vpop.f32.mrb[0].mxu0
      %1864 = vmatprep.mubr.bf16.mxu0 0
      %1865 = vmatmul.mubr.bf16.gmra.mrb[0].mxu0 %v1765
      %v1866 = vpop.f32.mrb[0].mxu0
      %v1867 = vadd.f32 %v1610, %v1866
      %v1868 = vpop.f32.mrb[0].mxu0
      %v1869 = vpop.f32.mrb[0].mxu0
      %v1870 = vadd.f32 %v1613, %v1869
      %v1871 = vpop.f32.mrb[0].mxu0
      %1872 = vmatprep.mubr.bf16.mxu0 0
      %1873 = vmatmul.mubr.bf16.gmra.mrb[0].mxu0 %v1766
      %v1874 = vpop.f32.mrb[0].mxu0
      %v1875 = vadd.f32 %v1618, %v1874
      %v1876 = vpop.f32.mrb[0].mxu0
      %v1877 = vpop.f32.mrb[0].mxu0
      %v1878 = vadd.f32 %v1621, %v1877
      %v1879 = vpop.f32.mrb[0].mxu0
      %1880 = vmatprep.mubr.bf16.mxu0 0
      %1881 = vmatmul.mubr.bf16.gmra.mrb[0].mxu0 %v1767
      %v1882 = vpop.f32.mrb[0].mxu0
      %v1883 = vadd.f32 %v1626, %v1882
      %v1884 = vpop.f32.mrb[0].mxu0
      %v1885 = vpop.f32.mrb[0].mxu0
      %v1886 = vadd.f32 %v1629, %v1885
      %v1887 = vpop.f32.mrb[0].mxu0
      %1888 = vmatprep.mubr.bf16.mxu0 0
      %1889 = vmatmul.mubr.bf16.gmra.mrb[0].mxu0 %v1768
      %v1890 = vpop.f32.mrb[0].mxu0
      %v1891 = vadd.f32 %v1634, %v1890
      %v1892 = vpop.f32.mrb[0].mxu0
      %v1893 = vpop.f32.mrb[0].mxu0
      %v1894 = vadd.f32 %v1637, %v1893
      %v1895 = vpop.f32.mrb[0].mxu0
      %1896 = vmatprep.mubr.bf16.mxu0 0
      %1897 = vmatmul.mubr.bf16.gmra.mrb[0].mxu0 %v1769
      %v1898 = vpop.f32.mrb[0].mxu0
      %v1899 = vadd.f32 %v1642, %v1898
      %v1900 = vpop.f32.mrb[0].mxu0
      %v1901 = vpop.f32.mrb[0].mxu0
      %v1902 = vadd.f32 %v1645, %v1901
      %v1903 = vpop.f32.mrb[0].mxu0
      %1904 = vmatprep.mubr.bf16.mxu0 0
      %1905 = vmatmul.mubr.bf16.gmra.mrb[0].mxu0 %v1770
      %v1906 = vpop.f32.mrb[0].mxu0
      %v1907 = vadd.f32 %v1650, %v1906
      %v1908 = vpop.f32.mrb[0].mxu0
      %v1909 = vpop.f32.mrb[0].mxu0
      %v1910 = vadd.f32 %v1653, %v1909
      %v1911 = vpop.f32.mrb[0].mxu0
      %1912 = vmatprep.mubr.bf16.mxu0 0
      %1913 = vmatmul.mubr.bf16.gmra.mrb[0].mxu0 %v1771
      %v1914 = vpop.f32.mrb[0].mxu0
      %v1915 = vadd.f32 %v1658, %v1914
      %v1916 = vpop.f32.mrb[0].mxu0
      %v1917 = vpop.f32.mrb[0].mxu0
      %v1918 = vadd.f32 %v1661, %v1917
      %v1919 = vpop.f32.mrb[0].mxu0
      %1920 = vmatprep.mubr.bf16.mxu0 0
      %1921 = vmatmul.mubr.bf16.gmra.mrb[0].mxu0 %v1772
      %v1922 = vpop.f32.mrb[0].mxu0
      %v1923 = vadd.f32 %v1666, %v1922
      %v1924 = vpop.f32.mrb[0].mxu0
      %v1925 = vpop.f32.mrb[0].mxu0
      %v1926 = vadd.f32 %v1669, %v1925
      %v1927 = vpop.f32.mrb[0].mxu0
      %1928 = vmatprep.mubr.bf16.mxu0 0
      %1929 = vmatmul.mubr.bf16.gmra.mrb[0].mxu0 %v1773
      %v1930 = vpop.f32.mrb[0].mxu0
      %v1931 = vadd.f32 %v1674, %v1930
      %v1932 = vpop.f32.mrb[0].mxu0
      %v1933 = vpop.f32.mrb[0].mxu0
      %v1934 = vadd.f32 %v1677, %v1933
      %v1935 = vpop.f32.mrb[0].mxu0
      %1936 = vmatprep.mubr.bf16.mxu0 0
      %1937 = vmatmul.mubr.bf16.gmra.mrb[0].mxu0 %v1774
      %v1938 = vpop.f32.mrb[0].mxu0
      %v1939 = vadd.f32 %v1682, %v1938
      %v1940 = vpop.f32.mrb[0].mxu0
      %v1941 = vpop.f32.mrb[0].mxu0
      %v1942 = vadd.f32 %v1685, %v1941
      %v1943 = vpop.f32.mrb[0].mxu0
      %1944 = vmatprep.mubr.bf16.mxu0 0
      %1945 = vmatmul.mubr.bf16.gmra.mrb[0].mxu0 %v1775
      %v1946 = vpop.f32.mrb[0].mxu0
      %v1947 = vadd.f32 %v1690, %v1946
      %v1948 = vpop.f32.mrb[0].mxu0
      %v1949 = vpop.f32.mrb[0].mxu0
      %v1950 = vadd.f32 %v1693, %v1949
      %v1951 = vpop.f32.mrb[0].mxu0
      %1952 = vdwg.mxu0
      %v1953 = vadd.f32 %v1827, %v1297
      %v1954 = vadd.f32 %v1830, %v1300
      %v1955 = vadd.f32 %v1835, %v1305
      %v1956 = vadd.f32 %v1838, %v1308
      %v1957 = vadd.f32 %v1843, %v1313
      %v1958 = vadd.f32 %v1846, %v1316
      %v1959 = vadd.f32 %v1851, %v1321
      %v1960 = vadd.f32 %v1854, %v1324
      %v1961 = vadd.f32 %v1859, %v1329
      %v1962 = vadd.f32 %v1862, %v1332
      %v1963 = vadd.f32 %v1867, %v1337
      %v1964 = vadd.f32 %v1870, %v1340
      %v1965 = vadd.f32 %v1875, %v1345
      %v1966 = vadd.f32 %v1878, %v1348
      %v1967 = vadd.f32 %v1883, %v1353
      %v1968 = vadd.f32 %v1886, %v1356
      %v1969 = vadd.f32 %v1891, %v1361
      %v1970 = vadd.f32 %v1894, %v1364
      %v1971 = vadd.f32 %v1899, %v1369
      %v1972 = vadd.f32 %v1902, %v1372
      %v1973 = vadd.f32 %v1907, %v1377
      %v1974 = vadd.f32 %v1910, %v1380
      %v1975 = vadd.f32 %v1915, %v1385
      %v1976 = vadd.f32 %v1918, %v1388
      %v1977 = vadd.f32 %v1923, %v1393
      %v1978 = vadd.f32 %v1926, %v1396
      %v1979 = vadd.f32 %v1931, %v1401
      %v1980 = vadd.f32 %v1934, %v1404
      %v1981 = vadd.f32 %v1939, %v1409
      %v1982 = vadd.f32 %v1942, %v1412
      %v1983 = vadd.f32 %v1947, %v1417
      %v1984 = vadd.f32 %v1950, %v1420
      %vm1985 = vcmp.gt.f32.partialorder %v1953, 0.0
      %vm1986 = vcmp.gt.f32.partialorder %v1954, 0.0
      %vm1987 = vcmp.gt.f32.partialorder %v1955, 0.0
      %vm1988 = vcmp.gt.f32.partialorder %v1956, 0.0
      %vm1989 = vcmp.gt.f32.partialorder %v1957, 0.0
      %vm1990 = vcmp.gt.f32.partialorder %v1958, 0.0
      %vm1991 = vcmp.gt.f32.partialorder %v1959, 0.0
      %vm1992 = vcmp.gt.f32.partialorder %v1960, 0.0
      %vm1993 = vcmp.gt.f32.partialorder %v1961, 0.0
      %vm1994 = vcmp.gt.f32.partialorder %v1962, 0.0
      %vm1995 = vcmp.gt.f32.partialorder %v1963, 0.0
      %vm1996 = vcmp.gt.f32.partialorder %v1964, 0.0
      %vm1997 = vcmp.gt.f32.partialorder %v1965, 0.0
      %vm1998 = vcmp.gt.f32.partialorder %v1966, 0.0
      %vm1999 = vcmp.gt.f32.partialorder %v1967, 0.0
      %vm2000 = vcmp.gt.f32.partialorder %v1968, 0.0
      %vm2001 = vcmp.gt.f32.partialorder %v1969, 0.0
      %vm2002 = vcmp.gt.f32.partialorder %v1970, 0.0
      %vm2003 = vcmp.gt.f32.partialorder %v1971, 0.0
      %vm2004 = vcmp.gt.f32.partialorder %v1972, 0.0
      %vm2005 = vcmp.gt.f32.partialorder %v1973, 0.0
      %vm2006 = vcmp.gt.f32.partialorder %v1974, 0.0
      %vm2007 = vcmp.gt.f32.partialorder %v1975, 0.0
      %vm2008 = vcmp.gt.f32.partialorder %v1976, 0.0
      %vm2009 = vcmp.gt.f32.partialorder %v1977, 0.0
      %vm2010 = vcmp.gt.f32.partialorder %v1978, 0.0
      %vm2011 = vcmp.gt.f32.partialorder %v1979, 0.0
      %vm2012 = vcmp.gt.f32.partialorder %v1980, 0.0
      %vm2013 = vcmp.gt.f32.partialorder %v1981, 0.0
      %vm2014 = vcmp.gt.f32.partialorder %v1982, 0.0
      %vm2015 = vcmp.gt.f32.partialorder %v1983, 0.0
      %vm2016 = vcmp.gt.f32.partialorder %v1984, 0.0
      %v2017 = vmul.f32 %v1953, 0.2
      %v2018 = vmul.f32 %v1954, 0.2
      %v2019 = vmul.f32 %v1955, 0.2
      %v2020 = vmul.f32 %v1956, 0.2
      %v2021 = vmul.f32 %v1957, 0.2
      %v2022 = vmul.f32 %v1958, 0.2
      %v2023 = vmul.f32 %v1959, 0.2
      %v2024 = vmul.f32 %v1960, 0.2
      %v2025 = vmul.f32 %v1961, 0.2
      %v2026 = vmul.f32 %v1962, 0.2
      %v2027 = vmul.f32 %v1963, 0.2
      %v2028 = vmul.f32 %v1964, 0.2
      %v2029 = vmul.f32 %v1965, 0.2
      %v2030 = vmul.f32 %v1966, 0.2
      %v2031 = vmul.f32 %v1967, 0.2
      %v2032 = vmul.f32 %v1968, 0.2
      %v2033 = vmul.f32 %v1969, 0.2
      %v2034 = vmul.f32 %v1970, 0.2
      %v2035 = vmul.f32 %v1971, 0.2
      %v2036 = vmul.f32 %v1972, 0.2
      %v2037 = vmul.f32 %v1973, 0.2
      %v2038 = vmul.f32 %v1974, 0.2
      %v2039 = vmul.f32 %v1975, 0.2
      %v2040 = vmul.f32 %v1976, 0.2
      %v2041 = vmul.f32 %v1977, 0.2
      %v2042 = vmul.f32 %v1978, 0.2
      %v2043 = vmul.f32 %v1979, 0.2
      %v2044 = vmul.f32 %v1980, 0.2
      %v2045 = vmul.f32 %v1981, 0.2
      %v2046 = vmul.f32 %v1982, 0.2
      %v2047 = vmul.f32 %v1983, 0.2
      %v2048 = vmul.f32 %v1984, 0.2
      %v2049 = vsel %vm1985, %v1953, %v2017
      %v2050 = vsel %vm1986, %v1954, %v2018
      %v2051 = vsel %vm1987, %v1955, %v2019
      %v2052 = vsel %vm1988, %v1956, %v2020
      %v2053 = vsel %vm1989, %v1957, %v2021
      %v2054 = vsel %vm1990, %v1958, %v2022
      %v2055 = vsel %vm1991, %v1959, %v2023
      %v2056 = vsel %vm1992, %v1960, %v2024
      %v2057 = vsel %vm1993, %v1961, %v2025
      %v2058 = vsel %vm1994, %v1962, %v2026
      %v2059 = vsel %vm1995, %v1963, %v2027
      %v2060 = vsel %vm1996, %v1964, %v2028
      %v2061 = vsel %vm1997, %v1965, %v2029
      %v2062 = vsel %vm1998, %v1966, %v2030
      %v2063 = vsel %vm1999, %v1967, %v2031
      %v2064 = vsel %vm2000, %v1968, %v2032
      %v2065 = vsel %vm2001, %v1969, %v2033
      %v2066 = vsel %vm2002, %v1970, %v2034
      %v2067 = vsel %vm2003, %v1971, %v2035
      %v2068 = vsel %vm2004, %v1972, %v2036
      %v2069 = vsel %vm2005, %v1973, %v2037
      %v2070 = vsel %vm2006, %v1974, %v2038
      %v2071 = vsel %vm2007, %v1975, %v2039
      %v2072 = vsel %vm2008, %v1976, %v2040
      %v2073 = vsel %vm2009, %v1977, %v2041
      %v2074 = vsel %vm2010, %v1978, %v2042
      %v2075 = vsel %vm2011, %v1979, %v2043
      %v2076 = vsel %vm2012, %v1980, %v2044
      %v2077 = vsel %vm2013, %v1981, %v2045
      %v2078 = vsel %vm2014, %v1982, %v2046
      %v2079 = vsel %vm2015, %v1983, %v2047
      %v2080 = vsel %vm2016, %v1984, %v2048
      %v2081 = vsel %vm878, %v2049, -inf
      %v2082 = vsel %vm878, %v2050, -inf
      %v2083 = vsel %vm878, %v2051, -inf
      %v2084 = vsel %vm878, %v2052, -inf
      %v2085 = vsel %vm878, %v2053, -inf
      %v2086 = vmax.f32 %v2081, %v2085
      %v2087 = vsel %vm878, %v2054, -inf
      %v2088 = vmax.f32 %v2082, %v2087
      %v2089 = vsel %vm878, %v2055, -inf
      %v2090 = vmax.f32 %v2083, %v2089
      %v2091 = vsel %vm878, %v2056, -inf
      %v2092 = vmax.f32 %v2084, %v2091
      %v2093 = vsel %vm878, %v2057, -inf
      %v2094 = vmax.f32 %v2086, %v2093
      %v2095 = vsel %vm878, %v2058, -inf
      %v2096 = vmax.f32 %v2088, %v2095
      %v2097 = vsel %vm878, %v2059, -inf
      %v2098 = vmax.f32 %v2090, %v2097
      %v2099 = vsel %vm878, %v2060, -inf
      %v2100 = vmax.f32 %v2092, %v2099
      %v2101 = vsel %vm878, %v2061, -inf
      %v2102 = vmax.f32 %v2094, %v2101
      %v2103 = vsel %vm878, %v2062, -inf
      %v2104 = vmax.f32 %v2096, %v2103
      %v2105 = vsel %vm878, %v2063, -inf
      %v2106 = vmax.f32 %v2098, %v2105
      %v2107 = vsel %vm878, %v2064, -inf
      %v2108 = vmax.f32 %v2100, %v2107
      %v2109 = vsel %vm878, %v2065, -inf
      %v2110 = vmax.f32 %v2102, %v2109
      %v2111 = vsel %vm878, %v2066, -inf
      %v2112 = vmax.f32 %v2104, %v2111
      %v2113 = vsel %vm878, %v2067, -inf
      %v2114 = vmax.f32 %v2106, %v2113
      %v2115 = vsel %vm878, %v2068, -inf
      %v2116 = vmax.f32 %v2108, %v2115
      %v2117 = vsel %vm878, %v2069, -inf
      %v2118 = vmax.f32 %v2110, %v2117
      %v2119 = vsel %vm878, %v2070, -inf
      %v2120 = vmax.f32 %v2112, %v2119
      %v2121 = vsel %vm878, %v2071, -inf
      %v2122 = vmax.f32 %v2114, %v2121
      %v2123 = vsel %vm878, %v2072, -inf
      %v2124 = vmax.f32 %v2116, %v2123
      %v2125 = vsel %vm878, %v2073, -inf
      %v2126 = vmax.f32 %v2118, %v2125
      %v2127 = vsel %vm878, %v2074, -inf
      %v2128 = vmax.f32 %v2120, %v2127
      %v2129 = vsel %vm878, %v2075, -inf
      %v2130 = vmax.f32 %v2122, %v2129
      %v2131 = vsel %vm878, %v2076, -inf
      %v2132 = vmax.f32 %v2124, %v2131
      %v2133 = vsel %vm878, %v2077, -inf
      %v2134 = vmax.f32 %v2126, %v2133
      %v2135 = vsel %vm878, %v2078, -inf
      %v2136 = vmax.f32 %v2128, %v2135
      %v2137 = vsel %vm878, %v2079, -inf
      %v2138 = vmax.f32 %v2130, %v2137
      %v2139 = vsel %vm878, %v2080, -inf
      %v2140 = vmax.f32 %v2132, %v2139
      %v2141 = vmax.f32 %v2134, %v2136
      %v2142 = vmax.f32 %v2138, %v2140
      %v2143 = vmax.f32 %v2141, %v2142
      %v2144 = vrot.slane %v2143, 4
      %v2145 = vmax.f32 %v2143, %v2144
      %v2146 = vrot.slane %v2145, 2
      %v2147 = vmax.f32 %v2145, %v2146
      %v2148 = vrot.slane %v2147, 1
      %v2149 = vmax.f32 %v2147, %v2148
      %v2150 = vsub.f32 %v2049, %v2149
      %v2151 = vsub.f32 %v2050, %v2149
      %v2152 = vsub.f32 %v2051, %v2149
      %v2153 = vsub.f32 %v2052, %v2149
      %v2154 = vsub.f32 %v2053, %v2149
      %v2155 = vsub.f32 %v2054, %v2149
      %v2156 = vsub.f32 %v2055, %v2149
      %v2157 = vsub.f32 %v2056, %v2149
      %v2158 = vsub.f32 %v2057, %v2149
      %v2159 = vsub.f32 %v2058, %v2149
      %v2160 = vsub.f32 %v2059, %v2149
      %v2161 = vsub.f32 %v2060, %v2149
      %v2162 = vsub.f32 %v2061, %v2149
      %v2163 = vsub.f32 %v2062, %v2149
      %v2164 = vsub.f32 %v2063, %v2149
      %v2165 = vsub.f32 %v2064, %v2149
      %v2166 = vsub.f32 %v2065, %v2149
      %v2167 = vsub.f32 %v2066, %v2149
      %v2168 = vsub.f32 %v2067, %v2149
      %v2169 = vsub.f32 %v2068, %v2149
      %v2170 = vsub.f32 %v2069, %v2149
      %v2171 = vsub.f32 %v2070, %v2149
      %v2172 = vsub.f32 %v2071, %v2149
      %v2173 = vsub.f32 %v2072, %v2149
      %v2174 = vsub.f32 %v2073, %v2149
      %v2175 = vsub.f32 %v2074, %v2149
      %v2176 = vsub.f32 %v2075, %v2149
      %v2177 = vsub.f32 %v2076, %v2149
      %v2178 = vsub.f32 %v2077, %v2149
      %v2179 = vsub.f32 %v2078, %v2149
      %v2180 = vsub.f32 %v2079, %v2149
      %v2181 = vsub.f32 %v2080, %v2149
      %v2182 = vmul.f32 %v2150, 1.442695
      %v2183 = vpow.pop %v2182
      %v2184 = vmul.f32 %v2151, 1.442695
      %v2185 = vpow.pop %v2184
      %v2186 = vmul.f32 %v2152, 1.442695
      %v2187 = vpow.pop %v2186
      %v2188 = vmul.f32 %v2153, 1.442695
      %v2189 = vpow.pop %v2188
      %v2190 = vmul.f32 %v2154, 1.442695
      %v2191 = vpow.pop %v2190
      %v2192 = vmul.f32 %v2155, 1.442695
      %v2193 = vpow.pop %v2192
      %v2194 = vmul.f32 %v2156, 1.442695
      %v2195 = vpow.pop %v2194
      %v2196 = vmul.f32 %v2157, 1.442695
      %v2197 = vpow.pop %v2196
      %v2198 = vmul.f32 %v2158, 1.442695
      %v2199 = vpow.pop %v2198
      %v2200 = vmul.f32 %v2159, 1.442695
      %v2201 = vpow.pop %v2200
      %v2202 = vmul.f32 %v2160, 1.442695
      %v2203 = vpow.pop %v2202
      %v2204 = vmul.f32 %v2161, 1.442695
      %v2205 = vpow.pop %v2204
      %v2206 = vmul.f32 %v2162, 1.442695
      %v2207 = vpow.pop %v2206
      %v2208 = vmul.f32 %v2163, 1.442695
      %v2209 = vpow.pop %v2208
      %v2210 = vmul.f32 %v2164, 1.442695
      %v2211 = vpow.pop %v2210
      %v2212 = vmul.f32 %v2165, 1.442695
      %v2213 = vpow.pop %v2212
      %v2214 = vmul.f32 %v2166, 1.442695
      %v2215 = vpow.pop %v2214
      %v2216 = vmul.f32 %v2167, 1.442695
      %v2217 = vpow.pop %v2216
      %v2218 = vmul.f32 %v2168, 1.442695
      %v2219 = vpow.pop %v2218
      %v2220 = vmul.f32 %v2169, 1.442695
      %v2221 = vpow.pop %v2220
      %v2222 = vmul.f32 %v2170, 1.442695
      %v2223 = vpow.pop %v2222
      %v2224 = vmul.f32 %v2171, 1.442695
      %v2225 = vpow.pop %v2224
      %v2226 = vmul.f32 %v2172, 1.442695
      %v2227 = vpow.pop %v2226
      %v2228 = vmul.f32 %v2173, 1.442695
      %v2229 = vpow.pop %v2228
      %v2230 = vmul.f32 %v2174, 1.442695
      %v2231 = vpow.pop %v2230
      %v2232 = vmul.f32 %v2175, 1.442695
      %v2233 = vpow.pop %v2232
      %v2234 = vmul.f32 %v2176, 1.442695
      %v2235 = vpow.pop %v2234
      %v2236 = vmul.f32 %v2177, 1.442695
      %v2237 = vpow.pop %v2236
      %v2238 = vmul.f32 %v2178, 1.442695
      %v2239 = vpow.pop %v2238
      %v2240 = vmul.f32 %v2179, 1.442695
      %v2241 = vpow.pop %v2240
      %v2242 = vmul.f32 %v2180, 1.442695
      %v2243 = vpow.pop %v2242
      %v2244 = vmul.f32 %v2181, 1.442695
      %v2245 = vpow.pop %v2244
      %v2246 = vpack.c.bf16 %v2185, %v2183
      %v2247 = vpack.c.bf16 %v2189, %v2187
      %v2248 = vpack.c.bf16 %v2193, %v2191
      %v2249 = vpack.c.bf16 %v2197, %v2195
      %v2250 = vpack.c.bf16 %v2201, %v2199
      %v2251 = vpack.c.bf16 %v2205, %v2203
      %v2252 = vpack.c.bf16 %v2209, %v2207
      %v2253 = vpack.c.bf16 %v2213, %v2211
      %v2254 = vpack.c.bf16 %v2217, %v2215
      %v2255 = vpack.c.bf16 %v2221, %v2219
      %v2256 = vpack.c.bf16 %v2225, %v2223
      %v2257 = vpack.c.bf16 %v2229, %v2227
      %v2258 = vpack.c.bf16 %v2233, %v2231
      %v2259 = vpack.c.bf16 %v2237, %v2235
      %v2260 = vpack.c.bf16 %v2241, %v2239
      %v2261 = vpack.c.bf16 %v2245, %v2243
      %2262 = vxpose.xlu0.c.b16.start [1/8] %v1503, 128
      %2263 = vxpose.xlu0.c.b16.cont [2/8] %v1504, 128
      %2264 = vxpose.xlu0.c.b16.cont [3/8] %v1505, 128
      %2265 = vxpose.xlu0.c.b16.cont [4/8] %v1506, 128
      %2266 = vxpose.xlu0.c.b16.cont [5/8] %v1507, 128
      %2267 = vxpose.xlu0.c.b16.cont [6/8] %v1508, 128
      %2268 = vxpose.xlu0.c.b16.cont [7/8] %v1509, 128
      %2269 = vxpose.xlu0.c.b16.end [8/8] %v1510, 128
      %v2270 = vpop.trf.xlu0
      %v2271 = vpop.trf.xlu0
      %v2272 = vpop.trf.xlu0
      %v2273 = vpop.trf.xlu0
      %v2274 = vpop.trf.xlu0
      %v2275 = vpop.trf.xlu0
      %v2276 = vpop.trf.xlu0
      %v2277 = vpop.trf.xlu0
      %2278 = vxpose.xlu0.c.b16.start [1/8] %v1511, 128
      %2279 = vxpose.xlu0.c.b16.cont [2/8] %v1512, 128
      %2280 = vxpose.xlu0.c.b16.cont [3/8] %v1513, 128
      %2281 = vxpose.xlu0.c.b16.cont [4/8] %v1514, 128
      %2282 = vxpose.xlu0.c.b16.cont [5/8] %v1515, 128
      %2283 = vxpose.xlu0.c.b16.cont [6/8] %v1516, 128
      %2284 = vxpose.xlu0.c.b16.cont [7/8] %v1517, 128
      %2285 = vxpose.xlu0.c.b16.end [8/8] %v1518, 128
      %v2286 = vpop.trf.xlu0
      %v2287 = vpop.trf.xlu0
      %v2288 = vpop.trf.xlu0
      %v2289 = vpop.trf.xlu0
      %v2290 = vpop.trf.xlu0
      %v2291 = vpop.trf.xlu0
      %v2292 = vpop.trf.xlu0
      %v2293 = vpop.trf.xlu0
      %2294 = vmatprep.subr.bf16.mxu0 0
      %2295 = vmatpush1.bf16.msra.mxu0 %v2246
      %2296 = vmatprep.subr.bf16.mxu0 0
      %2297 = vmatpush1.bf16.msra.mxu0 %v2247
      %2298 = vmatprep.subr.bf16.mxu0 0
      %2299 = vmatpush1.bf16.msra.mxu0 %v2248
      %2300 = vmatprep.subr.bf16.mxu0 0
      %2301 = vmatpush1.bf16.msra.mxu0 %v2249
      %2302 = vmatprep.subr.bf16.mxu0 0
      %2303 = vmatpush1.bf16.msra.mxu0 %v2250
      %2304 = vmatprep.subr.bf16.mxu0 0
      %2305 = vmatpush1.bf16.msra.mxu0 %v2251
      %2306 = vmatprep.subr.bf16.mxu0 0
      %2307 = vmatpush1.bf16.msra.mxu0 %v2252
      %2308 = vmatprep.subr.bf16.mxu0 0
      %2309 = vmatpush1.bf16.msra.mxu0 %v2253
      %2310 = vmatprep.subr.bf16.mxu0 0
      %2311 = vmatpush1.bf16.msra.mxu0 %v2254
      %2312 = vmatprep.subr.bf16.mxu0 0
      %2313 = vmatpush1.bf16.msra.mxu0 %v2255
      %2314 = vmatprep.subr.bf16.mxu0 0
      %2315 = vmatpush1.bf16.msra.mxu0 %v2256
      %2316 = vmatprep.subr.bf16.mxu0 0
      %2317 = vmatpush1.bf16.msra.mxu0 %v2257
      %2318 = vmatprep.subr.bf16.mxu0 0
      %2319 = vmatpush1.bf16.msra.mxu0 %v2258
      %2320 = vmatprep.subr.bf16.mxu0 0
      %2321 = vmatpush1.bf16.msra.mxu0 %v2259
      %2322 = vmatprep.subr.bf16.mxu0 0
      %2323 = vmatpush1.bf16.msra.mxu0 %v2260
      %2324 = vmatprep.subr.bf16.mxu0 0
      %2325 = vmatpush1.bf16.msra.mxu0 %v2261
      %2326 = vmatprep.mubr.bf16.mxu0 %v2286
      %2327 = vmatmul.mubr.bf16.gmra.mrb[0].mxu0 %v2270
      %v2328 = vpop.f32.mrb[0].mxu0
      %v2329 = vadd.f32 0.0, %v2328
      %v2330 = vpop.f32.mrb[0].mxu0
      %v2331 = vpop.f32.mrb[0].mxu0
      %v2332 = vadd.f32 0.0, %v2331
      %v2333 = vpop.f32.mrb[0].mxu0
      %2334 = vmatprep.mubr.bf16.mxu0 %v2287
      %2335 = vmatmul.mubr.bf16.gmra.mrb[0].mxu0 %v2271
      %v2336 = vpop.f32.mrb[0].mxu0
      %v2337 = vadd.f32 0.0, %v2336
      %v2338 = vpop.f32.mrb[0].mxu0
      %v2339 = vpop.f32.mrb[0].mxu0
      %v2340 = vadd.f32 0.0, %v2339
      %v2341 = vpop.f32.mrb[0].mxu0
      %2342 = vmatprep.mubr.bf16.mxu0 %v2288
      %2343 = vmatmul.mubr.bf16.gmra.mrb[0].mxu0 %v2272
      %v2344 = vpop.f32.mrb[0].mxu0
      %v2345 = vadd.f32 0.0, %v2344
      %v2346 = vpop.f32.mrb[0].mxu0
      %v2347 = vpop.f32.mrb[0].mxu0
      %v2348 = vadd.f32 0.0, %v2347
      %v2349 = vpop.f32.mrb[0].mxu0
      %2350 = vmatprep.mubr.bf16.mxu0 %v2289
      %2351 = vmatmul.mubr.bf16.gmra.mrb[0].mxu0 %v2273
      %v2352 = vpop.f32.mrb[0].mxu0
      %v2353 = vadd.f32 0.0, %v2352
      %v2354 = vpop.f32.mrb[0].mxu0
      %v2355 = vpop.f32.mrb[0].mxu0
      %v2356 = vadd.f32 0.0, %v2355
      %v2357 = vpop.f32.mrb[0].mxu0
      %2358 = vmatprep.mubr.bf16.mxu0 %v2290
      %2359 = vmatmul.mubr.bf16.gmra.mrb[0].mxu0 %v2274
      %v2360 = vpop.f32.mrb[0].mxu0
      %v2361 = vadd.f32 0.0, %v2360
      %v2362 = vpop.f32.mrb[0].mxu0
      %v2363 = vpop.f32.mrb[0].mxu0
      %v2364 = vadd.f32 0.0, %v2363
      %v2365 = vpop.f32.mrb[0].mxu0
      %2366 = vmatprep.mubr.bf16.mxu0 %v2291
      %2367 = vmatmul.mubr.bf16.gmra.mrb[0].mxu0 %v2275
      %v2368 = vpop.f32.mrb[0].mxu0
      %v2369 = vadd.f32 0.0, %v2368
      %v2370 = vpop.f32.mrb[0].mxu0
      %v2371 = vpop.f32.mrb[0].mxu0
      %v2372 = vadd.f32 0.0, %v2371
      %v2373 = vpop.f32.mrb[0].mxu0
      %2374 = vmatprep.mubr.bf16.mxu0 %v2292
      %2375 = vmatmul.mubr.bf16.gmra.mrb[0].mxu0 %v2276
      %v2376 = vpop.f32.mrb[0].mxu0
      %v2377 = vadd.f32 0.0, %v2376
      %v2378 = vpop.f32.mrb[0].mxu0
      %v2379 = vpop.f32.mrb[0].mxu0
      %v2380 = vadd.f32 0.0, %v2379
      %v2381 = vpop.f32.mrb[0].mxu0
      %2382 = vmatprep.mubr.bf16.mxu0 %v2293
      %2383 = vmatmul.mubr.bf16.gmra.mrb[0].mxu0 %v2277
      %v2384 = vpop.f32.mrb[0].mxu0
      %v2385 = vadd.f32 0.0, %v2384
      %v2386 = vpop.f32.mrb[0].mxu0
      %v2387 = vpop.f32.mrb[0].mxu0
      %v2388 = vadd.f32 0.0, %v2387
      %v2389 = vpop.f32.mrb[0].mxu0
      %2390 = vdwg.mxu0
      %v2391 = vpack.c.bf16 %v2332, %v2329
      %v2392 = vpack.c.bf16 %v2340, %v2337
      %v2393 = vpack.c.bf16 %v2348, %v2345
      %v2394 = vpack.c.bf16 %v2356, %v2353
      %v2395 = vpack.c.bf16 %v2364, %v2361
      %v2396 = vpack.c.bf16 %v2372, %v2369
      %v2397 = vpack.c.bf16 %v2380, %v2377
      %v2398 = vpack.c.bf16 %v2388, %v2385
      %2399 = vmatprep.subr.bf16.mxu0 0
      %2400 = vmatpush1.bf16.msra.mxu0 %v2391
      %2401 = vmatprep.subr.bf16.mxu0 0
      %2402 = vmatpush1.bf16.msra.mxu0 %v2392
      %2403 = vmatprep.subr.bf16.mxu0 0
      %2404 = vmatpush1.bf16.msra.mxu0 %v2393
      %2405 = vmatprep.subr.bf16.mxu0 0
      %2406 = vmatpush1.bf16.msra.mxu0 %v2394
      %2407 = vmatprep.subr.bf16.mxu0 0
      %2408 = vmatpush1.bf16.msra.mxu0 %v2395
      %2409 = vmatprep.subr.bf16.mxu0 0
      %2410 = vmatpush1.bf16.msra.mxu0 %v2396
      %2411 = vmatprep.subr.bf16.mxu0 0
      %2412 = vmatpush1.bf16.msra.mxu0 %v2397
      %2413 = vmatprep.subr.bf16.mxu0 0
      %2414 = vmatpush1.bf16.msra.mxu0 %v2398
      %2415 = vmatprep.subr.bf16.mxu0 0
      %2416 = vmatpush1.bf16.msra.mxu0 0
      %2417 = vmatprep.subr.bf16.mxu0 0
      %2418 = vmatpush1.bf16.msra.mxu0 0
      %2419 = vmatprep.subr.bf16.mxu0 0
      %2420 = vmatpush1.bf16.msra.mxu0 0
      %2421 = vmatprep.subr.bf16.mxu0 0
      %2422 = vmatpush1.bf16.msra.mxu0 0
      %2423 = vmatprep.subr.bf16.mxu0 0
      %2424 = vmatpush1.bf16.msra.mxu0 0
      %2425 = vmatprep.subr.bf16.mxu0 0
      %2426 = vmatpush1.bf16.msra.mxu0 0
      %2427 = vmatprep.subr.bf16.mxu0 0
      %2428 = vmatpush1.bf16.msra.mxu0 0
      %2429 = vmatprep.subr.bf16.mxu0 0
      %2430 = vmatpush1.bf16.msra.mxu0 0
      %2431 = vmatprep.mubr.bf16.mxu0 0
      %2432 = vmatmul.mubr.bf16.gmra.mrb[0].mxu0 %v1503
      %v2433 = vpop.f32.mrb[0].mxu0
      %v2434 = vadd.f32 1e-16, %v2433
      %v2435 = vpop.f32.mrb[0].mxu0
      %v2436 = vpop.f32.mrb[0].mxu0
      %v2437 = vadd.f32 1e-16, %v2436
      %v2438 = vpop.f32.mrb[0].mxu0
      %2439 = vmatprep.mubr.bf16.mxu0 0
      %2440 = vmatmul.mubr.bf16.gmra.mrb[0].mxu0 %v1504
      %v2441 = vpop.f32.mrb[0].mxu0
      %v2442 = vadd.f32 1e-16, %v2441
      %v2443 = vpop.f32.mrb[0].mxu0
      %v2444 = vpop.f32.mrb[0].mxu0
      %v2445 = vadd.f32 1e-16, %v2444
      %v2446 = vpop.f32.mrb[0].mxu0
      %2447 = vmatprep.mubr.bf16.mxu0 0
      %2448 = vmatmul.mubr.bf16.gmra.mrb[0].mxu0 %v1505
      %v2449 = vpop.f32.mrb[0].mxu0
      %v2450 = vadd.f32 1e-16, %v2449
      %v2451 = vpop.f32.mrb[0].mxu0
      %v2452 = vpop.f32.mrb[0].mxu0
      %v2453 = vadd.f32 1e-16, %v2452
      %v2454 = vpop.f32.mrb[0].mxu0
      %2455 = vmatprep.mubr.bf16.mxu0 0
      %2456 = vmatmul.mubr.bf16.gmra.mrb[0].mxu0 %v1506
      %v2457 = vpop.f32.mrb[0].mxu0
      %v2458 = vadd.f32 1e-16, %v2457
      %v2459 = vpop.f32.mrb[0].mxu0
      %v2460 = vpop.f32.mrb[0].mxu0
      %v2461 = vadd.f32 1e-16, %v2460
      %v2462 = vpop.f32.mrb[0].mxu0
      %2463 = vmatprep.mubr.bf16.mxu0 0
      %2464 = vmatmul.mubr.bf16.gmra.mrb[0].mxu0 %v1507
      %v2465 = vpop.f32.mrb[0].mxu0
      %v2466 = vadd.f32 1e-16, %v2465
      %v2467 = vpop.f32.mrb[0].mxu0
      %v2468 = vpop.f32.mrb[0].mxu0
      %v2469 = vadd.f32 1e-16, %v2468
      %v2470 = vpop.f32.mrb[0].mxu0
      %2471 = vmatprep.mubr.bf16.mxu0 0
      %2472 = vmatmul.mubr.bf16.gmra.mrb[0].mxu0 %v1508
      %v2473 = vpop.f32.mrb[0].mxu0
      %v2474 = vadd.f32 1e-16, %v2473
      %v2475 = vpop.f32.mrb[0].mxu0
      %v2476 = vpop.f32.mrb[0].mxu0
      %v2477 = vadd.f32 1e-16, %v2476
      %v2478 = vpop.f32.mrb[0].mxu0
      %2479 = vmatprep.mubr.bf16.mxu0 0
      %2480 = vmatmul.mubr.bf16.gmra.mrb[0].mxu0 %v1509
      %v2481 = vpop.f32.mrb[0].mxu0
      %v2482 = vadd.f32 1e-16, %v2481
      %v2483 = vpop.f32.mrb[0].mxu0
      %v2484 = vpop.f32.mrb[0].mxu0
      %v2485 = vadd.f32 1e-16, %v2484
      %v2486 = vpop.f32.mrb[0].mxu0
      %2487 = vmatprep.mubr.bf16.mxu0 0
      %2488 = vmatmul.mubr.bf16.gmra.mrb[0].mxu0 %v1510
      %v2489 = vpop.f32.mrb[0].mxu0
      %v2490 = vadd.f32 1e-16, %v2489
      %v2491 = vpop.f32.mrb[0].mxu0
      %v2492 = vpop.f32.mrb[0].mxu0
      %v2493 = vadd.f32 1e-16, %v2492
      %v2494 = vpop.f32.mrb[0].mxu0
      %2495 = vmatprep.mubr.bf16.mxu0 0
      %2496 = vmatmul.mubr.bf16.gmra.mrb[0].mxu0 %v1511
      %v2497 = vpop.f32.mrb[0].mxu0
      %v2498 = vadd.f32 1e-16, %v2497
      %v2499 = vpop.f32.mrb[0].mxu0
      %v2500 = vpop.f32.mrb[0].mxu0
      %v2501 = vadd.f32 1e-16, %v2500
      %v2502 = vpop.f32.mrb[0].mxu0
      %2503 = vmatprep.mubr.bf16.mxu0 0
      %2504 = vmatmul.mubr.bf16.gmra.mrb[0].mxu0 %v1512
      %v2505 = vpop.f32.mrb[0].mxu0
      %v2506 = vadd.f32 1e-16, %v2505
      %v2507 = vpop.f32.mrb[0].mxu0
      %v2508 = vpop.f32.mrb[0].mxu0
      %v2509 = vadd.f32 1e-16, %v2508
      %v2510 = vpop.f32.mrb[0].mxu0
      %2511 = vmatprep.mubr.bf16.mxu0 0
      %2512 = vmatmul.mubr.bf16.gmra.mrb[0].mxu0 %v1513
      %v2513 = vpop.f32.mrb[0].mxu0
      %v2514 = vadd.f32 1e-16, %v2513
      %v2515 = vpop.f32.mrb[0].mxu0
      %v2516 = vpop.f32.mrb[0].mxu0
      %v2517 = vadd.f32 1e-16, %v2516
      %v2518 = vpop.f32.mrb[0].mxu0
      %2519 = vmatprep.mubr.bf16.mxu0 0
      %2520 = vmatmul.mubr.bf16.gmra.mrb[0].mxu0 %v1514
      %v2521 = vpop.f32.mrb[0].mxu0
      %v2522 = vadd.f32 1e-16, %v2521
      %v2523 = vpop.f32.mrb[0].mxu0
      %v2524 = vpop.f32.mrb[0].mxu0
      %v2525 = vadd.f32 1e-16, %v2524
      %v2526 = vpop.f32.mrb[0].mxu0
      %2527 = vmatprep.mubr.bf16.mxu0 0
      %2528 = vmatmul.mubr.bf16.gmra.mrb[0].mxu0 %v1515
      %v2529 = vpop.f32.mrb[0].mxu0
      %v2530 = vadd.f32 1e-16, %v2529
      %v2531 = vpop.f32.mrb[0].mxu0
      %v2532 = vpop.f32.mrb[0].mxu0
      %v2533 = vadd.f32 1e-16, %v2532
      %v2534 = vpop.f32.mrb[0].mxu0
      %2535 = vmatprep.mubr.bf16.mxu0 0
      %2536 = vmatmul.mubr.bf16.gmra.mrb[0].mxu0 %v1516
      %v2537 = vpop.f32.mrb[0].mxu0
      %v2538 = vadd.f32 1e-16, %v2537
      %v2539 = vpop.f32.mrb[0].mxu0
      %v2540 = vpop.f32.mrb[0].mxu0
      %v2541 = vadd.f32 1e-16, %v2540
      %v2542 = vpop.f32.mrb[0].mxu0
      %2543 = vmatprep.mubr.bf16.mxu0 0
      %2544 = vmatmul.mubr.bf16.gmra.mrb[0].mxu0 %v1517
      %v2545 = vpop.f32.mrb[0].mxu0
      %v2546 = vadd.f32 1e-16, %v2545
      %v2547 = vpop.f32.mrb[0].mxu0
      %v2548 = vpop.f32.mrb[0].mxu0
      %v2549 = vadd.f32 1e-16, %v2548
      %v2550 = vpop.f32.mrb[0].mxu0
      %2551 = vmatprep.mubr.bf16.mxu0 0
      %2552 = vmatmul.mubr.bf16.gmra.mrb[0].mxu0 %v1518
      %v2553 = vpop.f32.mrb[0].mxu0
      %v2554 = vadd.f32 1e-16, %v2553
      %v2555 = vpop.f32.mrb[0].mxu0
      %v2556 = vpop.f32.mrb[0].mxu0
      %v2557 = vadd.f32 1e-16, %v2556
      %v2558 = vpop.f32.mrb[0].mxu0
      %2559 = vdwg.mxu0
      %v2560 = vrcp.pop %v2434
      %v2561 = vmul.f32 %v2183, %v2560
      %v2562 = vrcp.pop %v2437
      %v2563 = vmul.f32 %v2185, %v2562
      %v2564 = vrcp.pop %v2442
      %v2565 = vmul.f32 %v2187, %v2564
      %v2566 = vrcp.pop %v2445
      %v2567 = vmul.f32 %v2189, %v2566
      %v2568 = vrcp.pop %v2450
      %v2569 = vmul.f32 %v2191, %v2568
      %v2570 = vrcp.pop %v2453
      %v2571 = vmul.f32 %v2193, %v2570
      %v2572 = vrcp.pop %v2458
      %v2573 = vmul.f32 %v2195, %v2572
      %v2574 = vrcp.pop %v2461
      %v2575 = vmul.f32 %v2197, %v2574
      %v2576 = vrcp.pop %v2466
      %v2577 = vmul.f32 %v2199, %v2576
      %v2578 = vrcp.pop %v2469
      %v2579 = vmul.f32 %v2201, %v2578
      %v2580 = vrcp.pop %v2474
      %v2581 = vmul.f32 %v2203, %v2580
      %v2582 = vrcp.pop %v2477
      %v2583 = vmul.f32 %v2205, %v2582
      %v2584 = vrcp.pop %v2482
      %v2585 = vmul.f32 %v2207, %v2584
      %v2586 = vrcp.pop %v2485
      %v2587 = vmul.f32 %v2209, %v2586
      %v2588 = vrcp.pop %v2490
      %v2589 = vmul.f32 %v2211, %v2588
      %v2590 = vrcp.pop %v2493
      %v2591 = vmul.f32 %v2213, %v2590
      %v2592 = vrcp.pop %v2498
      %v2593 = vmul.f32 %v2215, %v2592
      %v2594 = vrcp.pop %v2501
      %v2595 = vmul.f32 %v2217, %v2594
      %v2596 = vrcp.pop %v2506
      %v2597 = vmul.f32 %v2219, %v2596
      %v2598 = vrcp.pop %v2509
      %v2599 = vmul.f32 %v2221, %v2598
      %v2600 = vrcp.pop %v2514
      %v2601 = vmul.f32 %v2223, %v2600
      %v2602 = vrcp.pop %v2517
      %v2603 = vmul.f32 %v2225, %v2602
      %v2604 = vrcp.pop %v2522
      %v2605 = vmul.f32 %v2227, %v2604
      %v2606 = vrcp.pop %v2525
      %v2607 = vmul.f32 %v2229, %v2606
      %v2608 = vrcp.pop %v2530
      %v2609 = vmul.f32 %v2231, %v2608
      %v2610 = vrcp.pop %v2533
      %v2611 = vmul.f32 %v2233, %v2610
      %v2612 = vrcp.pop %v2538
      %v2613 = vmul.f32 %v2235, %v2612
      %v2614 = vrcp.pop %v2541
      %v2615 = vmul.f32 %v2237, %v2614
      %v2616 = vrcp.pop %v2546
      %v2617 = vmul.f32 %v2239, %v2616
      %v2618 = vrcp.pop %v2549
      %v2619 = vmul.f32 %v2241, %v2618
      %v2620 = vrcp.pop %v2554
      %v2621 = vmul.f32 %v2243, %v2620
      %v2622 = vrcp.pop %v2557
      %v2623 = vmul.f32 %v2245, %v2622
      %v2624 = vpack.c.bf16 %v945, %v942
      %v2625 = vpack.c.bf16 %v953, %v950
      %v2626 = vpack.c.bf16 %v961, %v958
      %v2627 = vpack.c.bf16 %v969, %v966
      %v2628 = vpack.c.bf16 %v977, %v974
      %v2629 = vpack.c.bf16 %v985, %v982
      %v2630 = vpack.c.bf16 %v993, %v990
      %v2631 = vpack.c.bf16 %v1001, %v998
      %2632 = vmatprep.subr.bf16.mxu0 0
      %2633 = vmatpush1.bf16.msra.mxu0 %v2624
      %2634 = vmatprep.subr.bf16.mxu0 0
      %2635 = vmatpush1.bf16.msra.mxu0 %v2625
      %2636 = vmatprep.subr.bf16.mxu0 0
      %2637 = vmatpush1.bf16.msra.mxu0 %v2626
      %2638 = vmatprep.subr.bf16.mxu0 0
      %2639 = vmatpush1.bf16.msra.mxu0 %v2627
      %2640 = vmatprep.subr.bf16.mxu0 0
      %2641 = vmatpush1.bf16.msra.mxu0 %v2628
      %2642 = vmatprep.subr.bf16.mxu0 0
      %2643 = vmatpush1.bf16.msra.mxu0 %v2629
      %2644 = vmatprep.subr.bf16.mxu0 0
      %2645 = vmatpush1.bf16.msra.mxu0 %v2630
      %2646 = vmatprep.subr.bf16.mxu0 0
      %2647 = vmatpush1.bf16.msra.mxu0 %v2631
      %2648 = vmatprep.subr.bf16.mxu0 0
      %2649 = vmatpush1.bf16.msra.mxu0 0
      %2650 = vmatprep.subr.bf16.mxu0 0
      %2651 = vmatpush1.bf16.msra.mxu0 0
      %2652 = vmatprep.subr.bf16.mxu0 0
      %2653 = vmatpush1.bf16.msra.mxu0 0
      %2654 = vmatprep.subr.bf16.mxu0 0
      %2655 = vmatpush1.bf16.msra.mxu0 0
      %2656 = vmatprep.subr.bf16.mxu0 0
      %2657 = vmatpush1.bf16.msra.mxu0 0
      %2658 = vmatprep.subr.bf16.mxu0 0
      %2659 = vmatpush1.bf16.msra.mxu0 0
      %2660 = vmatprep.subr.bf16.mxu0 0
      %2661 = vmatpush1.bf16.msra.mxu0 0
      %2662 = vmatprep.subr.bf16.mxu0 0
      %2663 = vmatpush1.bf16.msra.mxu0 0
      %2664 = vmatprep.mubr.bf16.mxu0 0
      %2665 = vmatmul.mubr.bf16.gmra.mrb[0].mxu0 %v1760
      %v2666 = vpop.f32.mrb[0].mxu0
      %v2667 = vadd.f32 0.0, %v2666
      %v2668 = vpop.f32.mrb[0].mxu0
      %v2669 = vpop.f32.mrb[0].mxu0
      %v2670 = vadd.f32 0.0, %v2669
      %v2671 = vpop.f32.mrb[0].mxu0
      %2672 = vmatprep.mubr.bf16.mxu0 0
      %2673 = vmatmul.mubr.bf16.gmra.mrb[0].mxu0 %v1761
      %v2674 = vpop.f32.mrb[0].mxu0
      %v2675 = vadd.f32 0.0, %v2674
      %v2676 = vpop.f32.mrb[0].mxu0
      %v2677 = vpop.f32.mrb[0].mxu0
      %v2678 = vadd.f32 0.0, %v2677
      %v2679 = vpop.f32.mrb[0].mxu0
      %2680 = vmatprep.mubr.bf16.mxu0 0
      %2681 = vmatmul.mubr.bf16.gmra.mrb[0].mxu0 %v1762
      %v2682 = vpop.f32.mrb[0].mxu0
      %v2683 = vadd.f32 0.0, %v2682
      %v2684 = vpop.f32.mrb[0].mxu0
      %v2685 = vpop.f32.mrb[0].mxu0
      %v2686 = vadd.f32 0.0, %v2685
      %v2687 = vpop.f32.mrb[0].mxu0
      %2688 = vmatprep.mubr.bf16.mxu0 0
      %2689 = vmatmul.mubr.bf16.gmra.mrb[0].mxu0 %v1763
      %v2690 = vpop.f32.mrb[0].mxu0
      %v2691 = vadd.f32 0.0, %v2690
      %v2692 = vpop.f32.mrb[0].mxu0
      %v2693 = vpop.f32.mrb[0].mxu0
      %v2694 = vadd.f32 0.0, %v2693
      %v2695 = vpop.f32.mrb[0].mxu0
      %2696 = vmatprep.mubr.bf16.mxu0 0
      %2697 = vmatmul.mubr.bf16.gmra.mrb[0].mxu0 %v1764
      %v2698 = vpop.f32.mrb[0].mxu0
      %v2699 = vadd.f32 0.0, %v2698
      %v2700 = vpop.f32.mrb[0].mxu0
      %v2701 = vpop.f32.mrb[0].mxu0
      %v2702 = vadd.f32 0.0, %v2701
      %v2703 = vpop.f32.mrb[0].mxu0
      %2704 = vmatprep.mubr.bf16.mxu0 0
      %2705 = vmatmul.mubr.bf16.gmra.mrb[0].mxu0 %v1765
      %v2706 = vpop.f32.mrb[0].mxu0
      %v2707 = vadd.f32 0.0, %v2706
      %v2708 = vpop.f32.mrb[0].mxu0
      %v2709 = vpop.f32.mrb[0].mxu0
      %v2710 = vadd.f32 0.0, %v2709
      %v2711 = vpop.f32.mrb[0].mxu0
      %2712 = vmatprep.mubr.bf16.mxu0 0
      %2713 = vmatmul.mubr.bf16.gmra.mrb[0].mxu0 %v1766
      %v2714 = vpop.f32.mrb[0].mxu0
      %v2715 = vadd.f32 0.0, %v2714
      %v2716 = vpop.f32.mrb[0].mxu0
      %v2717 = vpop.f32.mrb[0].mxu0
      %v2718 = vadd.f32 0.0, %v2717
      %v2719 = vpop.f32.mrb[0].mxu0
      %2720 = vmatprep.mubr.bf16.mxu0 0
      %2721 = vmatmul.mubr.bf16.gmra.mrb[0].mxu0 %v1767
      %v2722 = vpop.f32.mrb[0].mxu0
      %v2723 = vadd.f32 0.0, %v2722
      %v2724 = vpop.f32.mrb[0].mxu0
      %v2725 = vpop.f32.mrb[0].mxu0
      %v2726 = vadd.f32 0.0, %v2725
      %v2727 = vpop.f32.mrb[0].mxu0
      %2728 = vmatprep.mubr.bf16.mxu0 0
      %2729 = vmatmul.mubr.bf16.gmra.mrb[0].mxu0 %v1768
      %v2730 = vpop.f32.mrb[0].mxu0
      %v2731 = vadd.f32 0.0, %v2730
      %v2732 = vpop.f32.mrb[0].mxu0
      %v2733 = vpop.f32.mrb[0].mxu0
      %v2734 = vadd.f32 0.0, %v2733
      %v2735 = vpop.f32.mrb[0].mxu0
      %2736 = vmatprep.mubr.bf16.mxu0 0
      %2737 = vmatmul.mubr.bf16.gmra.mrb[0].mxu0 %v1769
      %v2738 = vpop.f32.mrb[0].mxu0
      %v2739 = vadd.f32 0.0, %v2738
      %v2740 = vpop.f32.mrb[0].mxu0
      %v2741 = vpop.f32.mrb[0].mxu0
      %v2742 = vadd.f32 0.0, %v2741
      %v2743 = vpop.f32.mrb[0].mxu0
      %2744 = vmatprep.mubr.bf16.mxu0 0
      %2745 = vmatmul.mubr.bf16.gmra.mrb[0].mxu0 %v1770
      %v2746 = vpop.f32.mrb[0].mxu0
      %v2747 = vadd.f32 0.0, %v2746
      %v2748 = vpop.f32.mrb[0].mxu0
      %v2749 = vpop.f32.mrb[0].mxu0
      %v2750 = vadd.f32 0.0, %v2749
      %v2751 = vpop.f32.mrb[0].mxu0
      %2752 = vmatprep.mubr.bf16.mxu0 0
      %2753 = vmatmul.mubr.bf16.gmra.mrb[0].mxu0 %v1771
      %v2754 = vpop.f32.mrb[0].mxu0
      %v2755 = vadd.f32 0.0, %v2754
      %v2756 = vpop.f32.mrb[0].mxu0
      %v2757 = vpop.f32.mrb[0].mxu0
      %v2758 = vadd.f32 0.0, %v2757
      %v2759 = vpop.f32.mrb[0].mxu0
      %2760 = vmatprep.mubr.bf16.mxu0 0
      %2761 = vmatmul.mubr.bf16.gmra.mrb[0].mxu0 %v1772
      %v2762 = vpop.f32.mrb[0].mxu0
      %v2763 = vadd.f32 0.0, %v2762
      %v2764 = vpop.f32.mrb[0].mxu0
      %v2765 = vpop.f32.mrb[0].mxu0
      %v2766 = vadd.f32 0.0, %v2765
      %v2767 = vpop.f32.mrb[0].mxu0
      %2768 = vmatprep.mubr.bf16.mxu0 0
      %2769 = vmatmul.mubr.bf16.gmra.mrb[0].mxu0 %v1773
      %v2770 = vpop.f32.mrb[0].mxu0
      %v2771 = vadd.f32 0.0, %v2770
      %v2772 = vpop.f32.mrb[0].mxu0
      %v2773 = vpop.f32.mrb[0].mxu0
      %v2774 = vadd.f32 0.0, %v2773
      %v2775 = vpop.f32.mrb[0].mxu0
      %2776 = vmatprep.mubr.bf16.mxu0 0
      %2777 = vmatmul.mubr.bf16.gmra.mrb[0].mxu0 %v1774
      %v2778 = vpop.f32.mrb[0].mxu0
      %v2779 = vadd.f32 0.0, %v2778
      %v2780 = vpop.f32.mrb[0].mxu0
      %v2781 = vpop.f32.mrb[0].mxu0
      %v2782 = vadd.f32 0.0, %v2781
      %v2783 = vpop.f32.mrb[0].mxu0
      %2784 = vmatprep.mubr.bf16.mxu0 0
      %2785 = vmatmul.mubr.bf16.gmra.mrb[0].mxu0 %v1775
      %v2786 = vpop.f32.mrb[0].mxu0
      %v2787 = vadd.f32 0.0, %v2786
      %v2788 = vpop.f32.mrb[0].mxu0
      %v2789 = vpop.f32.mrb[0].mxu0
      %v2790 = vadd.f32 0.0, %v2789
      %v2791 = vpop.f32.mrb[0].mxu0
      %2792 = vdwg.mxu0
      %v2793 = vpack.c.bf16 %v2563, %v2561
      %v2794 = vpack.c.bf16 %v2567, %v2565
      %v2795 = vpack.c.bf16 %v2571, %v2569
      %v2796 = vpack.c.bf16 %v2575, %v2573
      %v2797 = vpack.c.bf16 %v2579, %v2577
      %v2798 = vpack.c.bf16 %v2583, %v2581
      %v2799 = vpack.c.bf16 %v2587, %v2585
      %v2800 = vpack.c.bf16 %v2591, %v2589
      %v2801 = vpack.c.bf16 %v2595, %v2593
      %v2802 = vpack.c.bf16 %v2599, %v2597
      %v2803 = vpack.c.bf16 %v2603, %v2601
      %v2804 = vpack.c.bf16 %v2607, %v2605
      %v2805 = vpack.c.bf16 %v2611, %v2609
      %v2806 = vpack.c.bf16 %v2615, %v2613
      %v2807 = vpack.c.bf16 %v2619, %v2617
      %v2808 = vpack.c.bf16 %v2623, %v2621
      %v2810 = vsel %vm878, %v2793, 0
      %v2813 = vsel %vm878, %v2794, 0
      %v2816 = vsel %vm878, %v2795, 0
      %v2819 = vsel %vm878, %v2796, 0
      %v2822 = vsel %vm878, %v2797, 0
      %v2825 = vsel %vm878, %v2798, 0
      %v2828 = vsel %vm878, %v2799, 0
      %v2831 = vsel %vm878, %v2800, 0
      %v2834 = vsel %vm878, %v2801, 0
      %v2837 = vsel %vm878, %v2802, 0
      %v2840 = vsel %vm878, %v2803, 0
      %v2843 = vsel %vm878, %v2804, 0
      %v2846 = vsel %vm878, %v2805, 0
      %v2849 = vsel %vm878, %v2806, 0
      %v2852 = vsel %vm878, %v2807, 0
      %v2855 = vsel %vm878, %v2808, 0
      %v2858 = vsel %vm903, %v788, 0
      %2860 = vmatprep.subr.bf16.mxu0 0
      %2861 = vmatpush1.bf16.msra.mxu0 %v2858
      %2862 = vmatprep.subr.bf16.mxu0 0
      %2863 = vmatpush1.bf16.msra.mxu0 0
      %2864 = vmatprep.subr.bf16.mxu0 0
      %2865 = vmatpush1.bf16.msra.mxu0 0
      %2866 = vmatprep.subr.bf16.mxu0 0
      %2867 = vmatpush1.bf16.msra.mxu0 0
      %2868 = vmatprep.subr.bf16.mxu0 0
      %2869 = vmatpush1.bf16.msra.mxu0 0
      %2870 = vmatprep.subr.bf16.mxu0 0
      %2871 = vmatpush1.bf16.msra.mxu0 0
      %2872 = vmatprep.subr.bf16.mxu0 0
      %2873 = vmatpush1.bf16.msra.mxu0 0
      %2874 = vmatprep.subr.bf16.mxu0 0
      %2875 = vmatpush1.bf16.msra.mxu0 0
      %2876 = vmatprep.subr.bf16.mxu0 0
      %2877 = vmatpush1.bf16.msra.mxu0 0
      %2878 = vmatprep.subr.bf16.mxu0 0
      %2879 = vmatpush1.bf16.msra.mxu0 0
      %2880 = vmatprep.subr.bf16.mxu0 0
      %2881 = vmatpush1.bf16.msra.mxu0 0
      %2882 = vmatprep.subr.bf16.mxu0 0
      %2883 = vmatpush1.bf16.msra.mxu0 0
      %2884 = vmatprep.subr.bf16.mxu0 0
      %2885 = vmatpush1.bf16.msra.mxu0 0
      %2886 = vmatprep.subr.bf16.mxu0 0
      %2887 = vmatpush1.bf16.msra.mxu0 0
      %2888 = vmatprep.subr.bf16.mxu0 0
      %2889 = vmatpush1.bf16.msra.mxu0 0
      %2890 = vmatprep.subr.bf16.mxu0 0
      %2891 = vmatpush1.bf16.msra.mxu0 0
      %2892 = vmatprep.mubr.bf16.mxu0 0
      %2893 = vmatmul.mubr.bf16.gmra.mrb[0].mxu0 %v2810
      %v2894 = vpop.f32.mrb[0].mxu0
      %v2895 = vadd.f32 0.0, %v2894
      %v2896 = vpop.f32.mrb[0].mxu0
      %v2897 = vpop.f32.mrb[0].mxu0
      %v2898 = vadd.f32 0.0, %v2897
      %v2899 = vpop.f32.mrb[0].mxu0
      %2900 = vmatprep.mubr.bf16.mxu0 0
      %2901 = vmatmul.mubr.bf16.gmra.mrb[0].mxu0 %v2813
      %v2902 = vpop.f32.mrb[0].mxu0
      %v2903 = vadd.f32 0.0, %v2902
      %v2904 = vpop.f32.mrb[0].mxu0
      %v2905 = vpop.f32.mrb[0].mxu0
      %v2906 = vadd.f32 0.0, %v2905
      %v2907 = vpop.f32.mrb[0].mxu0
      %2908 = vmatprep.mubr.bf16.mxu0 0
      %2909 = vmatmul.mubr.bf16.gmra.mrb[0].mxu0 %v2816
      %v2910 = vpop.f32.mrb[0].mxu0
      %v2911 = vadd.f32 0.0, %v2910
      %v2912 = vpop.f32.mrb[0].mxu0
      %v2913 = vpop.f32.mrb[0].mxu0
      %v2914 = vadd.f32 0.0, %v2913
      %v2915 = vpop.f32.mrb[0].mxu0
      %2916 = vmatprep.mubr.bf16.mxu0 0
      %2917 = vmatmul.mubr.bf16.gmra.mrb[0].mxu0 %v2819
      %v2918 = vpop.f32.mrb[0].mxu0
      %v2919 = vadd.f32 0.0, %v2918
      %v2920 = vpop.f32.mrb[0].mxu0
      %v2921 = vpop.f32.mrb[0].mxu0
      %v2922 = vadd.f32 0.0, %v2921
      %v2923 = vpop.f32.mrb[0].mxu0
      %2924 = vmatprep.mubr.bf16.mxu0 0
      %2925 = vmatmul.mubr.bf16.gmra.mrb[0].mxu0 %v2822
      %v2926 = vpop.f32.mrb[0].mxu0
      %v2927 = vadd.f32 0.0, %v2926
      %v2928 = vpop.f32.mrb[0].mxu0
      %v2929 = vpop.f32.mrb[0].mxu0
      %v2930 = vadd.f32 0.0, %v2929
      %v2931 = vpop.f32.mrb[0].mxu0
      %2932 = vmatprep.mubr.bf16.mxu0 0
      %2933 = vmatmul.mubr.bf16.gmra.mrb[0].mxu0 %v2825
      %v2934 = vpop.f32.mrb[0].mxu0
      %v2935 = vadd.f32 0.0, %v2934
      %v2936 = vpop.f32.mrb[0].mxu0
      %v2937 = vpop.f32.mrb[0].mxu0
      %v2938 = vadd.f32 0.0, %v2937
      %v2939 = vpop.f32.mrb[0].mxu0
      %2940 = vmatprep.mubr.bf16.mxu0 0
      %2941 = vmatmul.mubr.bf16.gmra.mrb[0].mxu0 %v2828
      %v2942 = vpop.f32.mrb[0].mxu0
      %v2943 = vadd.f32 0.0, %v2942
      %v2944 = vpop.f32.mrb[0].mxu0
      %v2945 = vpop.f32.mrb[0].mxu0
      %v2946 = vadd.f32 0.0, %v2945
      %v2947 = vpop.f32.mrb[0].mxu0
      %2948 = vmatprep.mubr.bf16.mxu0 0
      %2949 = vmatmul.mubr.bf16.gmra.mrb[0].mxu0 %v2831
      %v2950 = vpop.f32.mrb[0].mxu0
      %v2951 = vadd.f32 0.0, %v2950
      %v2952 = vpop.f32.mrb[0].mxu0
      %v2953 = vpop.f32.mrb[0].mxu0
      %v2954 = vadd.f32 0.0, %v2953
      %v2955 = vpop.f32.mrb[0].mxu0
      %2956 = vmatprep.mubr.bf16.mxu0 0
      %2957 = vmatmul.mubr.bf16.gmra.mrb[0].mxu0 %v2834
      %v2958 = vpop.f32.mrb[0].mxu0
      %v2959 = vadd.f32 0.0, %v2958
      %v2960 = vpop.f32.mrb[0].mxu0
      %v2961 = vpop.f32.mrb[0].mxu0
      %v2962 = vadd.f32 0.0, %v2961
      %v2963 = vpop.f32.mrb[0].mxu0
      %2964 = vmatprep.mubr.bf16.mxu0 0
      %2965 = vmatmul.mubr.bf16.gmra.mrb[0].mxu0 %v2837
      %v2966 = vpop.f32.mrb[0].mxu0
      %v2967 = vadd.f32 0.0, %v2966
      %v2968 = vpop.f32.mrb[0].mxu0
      %v2969 = vpop.f32.mrb[0].mxu0
      %v2970 = vadd.f32 0.0, %v2969
      %v2971 = vpop.f32.mrb[0].mxu0
      %2972 = vmatprep.mubr.bf16.mxu0 0
      %2973 = vmatmul.mubr.bf16.gmra.mrb[0].mxu0 %v2840
      %v2974 = vpop.f32.mrb[0].mxu0
      %v2975 = vadd.f32 0.0, %v2974
      %v2976 = vpop.f32.mrb[0].mxu0
      %v2977 = vpop.f32.mrb[0].mxu0
      %v2978 = vadd.f32 0.0, %v2977
      %v2979 = vpop.f32.mrb[0].mxu0
      %2980 = vmatprep.mubr.bf16.mxu0 0
      %2981 = vmatmul.mubr.bf16.gmra.mrb[0].mxu0 %v2843
      %v2982 = vpop.f32.mrb[0].mxu0
      %v2983 = vadd.f32 0.0, %v2982
      %v2984 = vpop.f32.mrb[0].mxu0
      %v2985 = vpop.f32.mrb[0].mxu0
      %v2986 = vadd.f32 0.0, %v2985
      %v2987 = vpop.f32.mrb[0].mxu0
      %2988 = vmatprep.mubr.bf16.mxu0 0
      %2989 = vmatmul.mubr.bf16.gmra.mrb[0].mxu0 %v2846
      %v2990 = vpop.f32.mrb[0].mxu0
      %v2991 = vadd.f32 0.0, %v2990
      %v2992 = vpop.f32.mrb[0].mxu0
      %v2993 = vpop.f32.mrb[0].mxu0
      %v2994 = vadd.f32 0.0, %v2993
      %v2995 = vpop.f32.mrb[0].mxu0
      %2996 = vmatprep.mubr.bf16.mxu0 0
      %2997 = vmatmul.mubr.bf16.gmra.mrb[0].mxu0 %v2849
      %v2998 = vpop.f32.mrb[0].mxu0
      %v2999 = vadd.f32 0.0, %v2998
      %v3000 = vpop.f32.mrb[0].mxu0
      %v3001 = vpop.f32.mrb[0].mxu0
      %v3002 = vadd.f32 0.0, %v3001
      %v3003 = vpop.f32.mrb[0].mxu0
      %3004 = vmatprep.mubr.bf16.mxu0 0
      %3005 = vmatmul.mubr.bf16.gmra.mrb[0].mxu0 %v2852
      %v3006 = vpop.f32.mrb[0].mxu0
      %v3007 = vadd.f32 0.0, %v3006
      %v3008 = vpop.f32.mrb[0].mxu0
      %v3009 = vpop.f32.mrb[0].mxu0
      %v3010 = vadd.f32 0.0, %v3009
      %v3011 = vpop.f32.mrb[0].mxu0
      %3012 = vmatprep.mubr.bf16.mxu0 0
      %3013 = vmatmul.mubr.bf16.gmra.mrb[0].mxu0 %v2855
      %v3014 = vpop.f32.mrb[0].mxu0
      %v3015 = vadd.f32 0.0, %v3014
      %v3016 = vpop.f32.mrb[0].mxu0
      %v3017 = vpop.f32.mrb[0].mxu0
      %v3018 = vadd.f32 0.0, %v3017
      %v3019 = vpop.f32.mrb[0].mxu0
      %3020 = vdwg.mxu0
      %v3021 = vmul.f32 %v2667, %v2895
      %v3022 = vmul.f32 %v2670, %v2898
      %v3023 = vmul.f32 %v2675, %v2903
      %v3024 = vmul.f32 %v2678, %v2906
      %v3025 = vmul.f32 %v2683, %v2911
      %v3026 = vmul.f32 %v2686, %v2914
      %v3027 = vmul.f32 %v2691, %v2919
      %v3028 = vmul.f32 %v2694, %v2922
      %v3029 = vmul.f32 %v2699, %v2927
      %v3030 = vmul.f32 %v2702, %v2930
      %v3031 = vmul.f32 %v2707, %v2935
      %v3032 = vmul.f32 %v2710, %v2938
      %v3033 = vmul.f32 %v2715, %v2943
      %v3034 = vmul.f32 %v2718, %v2946
      %v3035 = vmul.f32 %v2723, %v2951
      %v3036 = vmul.f32 %v2726, %v2954
      %v3037 = vmul.f32 %v2731, %v2959
      %v3038 = vmul.f32 %v2734, %v2962
      %v3039 = vmul.f32 %v2739, %v2967
      %v3040 = vmul.f32 %v2742, %v2970
      %v3041 = vmul.f32 %v2747, %v2975
      %v3042 = vmul.f32 %v2750, %v2978
      %v3043 = vmul.f32 %v2755, %v2983
      %v3044 = vmul.f32 %v2758, %v2986
      %v3045 = vmul.f32 %v2763, %v2991
      %v3046 = vmul.f32 %v2766, %v2994
      %v3047 = vmul.f32 %v2771, %v2999
      %v3048 = vmul.f32 %v2774, %v3002
      %v3049 = vmul.f32 %v2779, %v3007
      %v3050 = vmul.f32 %v2782, %v3010
      %v3051 = vmul.f32 %v2787, %v3015
      %v3052 = vmul.f32 %v2790, %v3018
      %v3053 = vpack.c.bf16 %v3022, %v3021
      %v3054 = vpack.c.bf16 %v3024, %v3023
      %v3055 = vpack.c.bf16 %v3026, %v3025
      %v3056 = vpack.c.bf16 %v3028, %v3027
      %v3057 = vpack.c.bf16 %v3030, %v3029
      %v3058 = vpack.c.bf16 %v3032, %v3031
      %v3059 = vpack.c.bf16 %v3034, %v3033
      %v3060 = vpack.c.bf16 %v3036, %v3035
      %v3061 = vpack.c.bf16 %v3038, %v3037
      %v3062 = vpack.c.bf16 %v3040, %v3039
      %v3063 = vpack.c.bf16 %v3042, %v3041
      %v3064 = vpack.c.bf16 %v3044, %v3043
      %v3065 = vpack.c.bf16 %v3046, %v3045
      %v3066 = vpack.c.bf16 %v3048, %v3047
      %v3067 = vpack.c.bf16 %v3050, %v3049
      %v3068 = vpack.c.bf16 %v3052, %v3051
      %3069 = vmatprep.subr.bf16.mxu0 0
      %3070 = vmatpush1.bf16.msra.mxu0 %v3053
      %3071 = vmatprep.subr.bf16.mxu0 0
      %3072 = vmatpush1.bf16.msra.mxu0 %v3054
      %3073 = vmatprep.subr.bf16.mxu0 0
      %3074 = vmatpush1.bf16.msra.mxu0 %v3055
      %3075 = vmatprep.subr.bf16.mxu0 0
      %3076 = vmatpush1.bf16.msra.mxu0 %v3056
      %3077 = vmatprep.subr.bf16.mxu0 0
      %3078 = vmatpush1.bf16.msra.mxu0 %v3057
      %3079 = vmatprep.subr.bf16.mxu0 0
      %3080 = vmatpush1.bf16.msra.mxu0 %v3058
      %3081 = vmatprep.subr.bf16.mxu0 0
      %3082 = vmatpush1.bf16.msra.mxu0 %v3059
      %3083 = vmatprep.subr.bf16.mxu0 0
      %3084 = vmatpush1.bf16.msra.mxu0 %v3060
      %3085 = vmatprep.subr.bf16.mxu0 0
      %3086 = vmatpush1.bf16.msra.mxu0 %v3061
      %3087 = vmatprep.subr.bf16.mxu0 0
      %3088 = vmatpush1.bf16.msra.mxu0 %v3062
      %3089 = vmatprep.subr.bf16.mxu0 0
      %3090 = vmatpush1.bf16.msra.mxu0 %v3063
      %3091 = vmatprep.subr.bf16.mxu0 0
      %3092 = vmatpush1.bf16.msra.mxu0 %v3064
      %3093 = vmatprep.subr.bf16.mxu0 0
      %3094 = vmatpush1.bf16.msra.mxu0 %v3065
      %3095 = vmatprep.subr.bf16.mxu0 0
      %3096 = vmatpush1.bf16.msra.mxu0 %v3066
      %3097 = vmatprep.subr.bf16.mxu0 0
      %3098 = vmatpush1.bf16.msra.mxu0 %v3067
      %3099 = vmatprep.subr.bf16.mxu0 0
      %3100 = vmatpush1.bf16.msra.mxu0 %v3068
      %3101 = vmatprep.mubr.bf16.mxu0 %v2286
      %3102 = vmatmul.mubr.bf16.gmra.mrb[0].mxu0 %v2270
      %v3103 = vpop.f32.mrb[0].mxu0
      %v3104 = vadd.f32 0.0, %v3103
      %v3105 = vpop.f32.mrb[0].mxu0
      %v3106 = vpop.f32.mrb[0].mxu0
      %v3107 = vadd.f32 0.0, %v3106
      %v3108 = vpop.f32.mrb[0].mxu0
      %3109 = vmatprep.mubr.bf16.mxu0 %v2287
      %3110 = vmatmul.mubr.bf16.gmra.mrb[0].mxu0 %v2271
      %v3111 = vpop.f32.mrb[0].mxu0
      %v3112 = vadd.f32 0.0, %v3111
      %v3113 = vpop.f32.mrb[0].mxu0
      %v3114 = vpop.f32.mrb[0].mxu0
      %v3115 = vadd.f32 0.0, %v3114
      %v3116 = vpop.f32.mrb[0].mxu0
      %3117 = vmatprep.mubr.bf16.mxu0 %v2288
      %3118 = vmatmul.mubr.bf16.gmra.mrb[0].mxu0 %v2272
      %v3119 = vpop.f32.mrb[0].mxu0
      %v3120 = vadd.f32 0.0, %v3119
      %v3121 = vpop.f32.mrb[0].mxu0
      %v3122 = vpop.f32.mrb[0].mxu0
      %v3123 = vadd.f32 0.0, %v3122
      %v3124 = vpop.f32.mrb[0].mxu0
      %3125 = vmatprep.mubr.bf16.mxu0 %v2289
      %3126 = vmatmul.mubr.bf16.gmra.mrb[0].mxu0 %v2273
      %v3127 = vpop.f32.mrb[0].mxu0
      %v3128 = vadd.f32 0.0, %v3127
      %v3129 = vpop.f32.mrb[0].mxu0
      %v3130 = vpop.f32.mrb[0].mxu0
      %v3131 = vadd.f32 0.0, %v3130
      %v3132 = vpop.f32.mrb[0].mxu0
      %3133 = vmatprep.mubr.bf16.mxu0 %v2290
      %3134 = vmatmul.mubr.bf16.gmra.mrb[0].mxu0 %v2274
      %v3135 = vpop.f32.mrb[0].mxu0
      %v3136 = vadd.f32 0.0, %v3135
      %v3137 = vpop.f32.mrb[0].mxu0
      %v3138 = vpop.f32.mrb[0].mxu0
      %v3139 = vadd.f32 0.0, %v3138
      %v3140 = vpop.f32.mrb[0].mxu0
      %3141 = vmatprep.mubr.bf16.mxu0 %v2291
      %3142 = vmatmul.mubr.bf16.gmra.mrb[0].mxu0 %v2275
      %v3143 = vpop.f32.mrb[0].mxu0
      %v3144 = vadd.f32 0.0, %v3143
      %v3145 = vpop.f32.mrb[0].mxu0
      %v3146 = vpop.f32.mrb[0].mxu0
      %v3147 = vadd.f32 0.0, %v3146
      %v3148 = vpop.f32.mrb[0].mxu0
      %3149 = vmatprep.mubr.bf16.mxu0 %v2292
      %3150 = vmatmul.mubr.bf16.gmra.mrb[0].mxu0 %v2276
      %v3151 = vpop.f32.mrb[0].mxu0
      %v3152 = vadd.f32 0.0, %v3151
      %v3153 = vpop.f32.mrb[0].mxu0
      %v3154 = vpop.f32.mrb[0].mxu0
      %v3155 = vadd.f32 0.0, %v3154
      %v3156 = vpop.f32.mrb[0].mxu0
      %3157 = vmatprep.mubr.bf16.mxu0 %v2293
      %3158 = vmatmul.mubr.bf16.gmra.mrb[0].mxu0 %v2277
      %v3159 = vpop.f32.mrb[0].mxu0
      %v3160 = vadd.f32 0.0, %v3159
      %v3161 = vpop.f32.mrb[0].mxu0
      %v3162 = vpop.f32.mrb[0].mxu0
      %v3163 = vadd.f32 0.0, %v3162
      %v3164 = vpop.f32.mrb[0].mxu0
      %3165 = vdwg.mxu0
      %v3166 = vpack.c.bf16 %v3107, %v3104
      %v3167 = vpack.c.bf16 %v3115, %v3112
      %v3168 = vpack.c.bf16 %v3123, %v3120
      %v3169 = vpack.c.bf16 %v3131, %v3128
      %v3170 = vpack.c.bf16 %v3139, %v3136
      %v3171 = vpack.c.bf16 %v3147, %v3144
      %v3172 = vpack.c.bf16 %v3155, %v3152
      %v3173 = vpack.c.bf16 %v3163, %v3160
      %v3174 = vld [vmem:[%s11] sm:$0x1]
      %v3176 = vlaneseq
      %v3177 = vshrl.u32 %v3176, 7
      %v3178 = vsub.s32 0, %v3177
      %v3179 = vrot.slane %v3174, %v3178
      %v3197 = vunpack.c.l.b16 %v789
      %v3198 = vunpack.c.l.b16 %v790
      %v3199 = vunpack.c.l.b16 %v791
      %v3200 = vunpack.c.l.b16 %v792
      %v3201 = vunpack.c.l.b16 %v793
      %v3202 = vunpack.c.l.b16 %v794
      %v3203 = vunpack.c.l.b16 %v795
      %v3204 = vunpack.c.l.b16 %v796
      %v3205 = vunpack.c.l.b16 %v797
      %v3206 = vunpack.c.l.b16 %v798
      %v3207 = vunpack.c.l.b16 %v799
      %v3208 = vunpack.c.l.b16 %v800
      %v3209 = vunpack.c.l.b16 %v801
      %v3210 = vunpack.c.l.b16 %v802
      %v3211 = vunpack.c.l.b16 %v803
      %v3212 = vunpack.c.l.b16 %v804
      %v3213 = vpack.c.b16 %v3198, %v3197
      %v3214 = vpack.c.b16 %v3200, %v3199
      %v3215 = vpack.c.b16 %v3202, %v3201
      %v3216 = vpack.c.b16 %v3204, %v3203
      %v3217 = vpack.c.b16 %v3206, %v3205
      %v3218 = vpack.c.b16 %v3208, %v3207
      %v3219 = vpack.c.b16 %v3210, %v3209
      %v3220 = vpack.c.b16 %v3212, %v3211
      %3229 = vmatprep.subr.bf16.mxu0 0
      %3230 = vmatpush1.bf16.msra.mxu0 %v3213
      %3231 = vmatprep.subr.bf16.mxu0 0
      %3232 = vmatpush1.bf16.msra.mxu0 %v3214
      %3233 = vmatprep.subr.bf16.mxu0 0
      %3234 = vmatpush1.bf16.msra.mxu0 %v3215
      %3235 = vmatprep.subr.bf16.mxu0 0
      %3236 = vmatpush1.bf16.msra.mxu0 %v3216
      %3237 = vmatprep.subr.bf16.mxu0 0
      %3238 = vmatpush1.bf16.msra.mxu0 %v3217
      %3239 = vmatprep.subr.bf16.mxu0 0
      %3240 = vmatpush1.bf16.msra.mxu0 %v3218
      %3241 = vmatprep.subr.bf16.mxu0 0
      %3242 = vmatpush1.bf16.msra.mxu0 %v3219
      %3243 = vmatprep.subr.bf16.mxu0 0
      %3244 = vmatpush1.bf16.msra.mxu0 %v3220
      %3245 = vmatprep.subr.bf16.mxu0 0
      %3246 = vmatpush1.bf16.msra.mxu0 0
      %3247 = vmatprep.subr.bf16.mxu0 0
      %3248 = vmatpush1.bf16.msra.mxu0 0
      %3249 = vmatprep.subr.bf16.mxu0 0
      %3250 = vmatpush1.bf16.msra.mxu0 0
      %3251 = vmatprep.subr.bf16.mxu0 0
      %3252 = vmatpush1.bf16.msra.mxu0 0
      %3253 = vmatprep.subr.bf16.mxu0 0
      %3254 = vmatpush1.bf16.msra.mxu0 0
      %3255 = vmatprep.subr.bf16.mxu0 0
      %3256 = vmatpush1.bf16.msra.mxu0 0
      %3257 = vmatprep.subr.bf16.mxu0 0
      %3258 = vmatpush1.bf16.msra.mxu0 0
      %3259 = vmatprep.subr.bf16.mxu0 0
      %3260 = vmatpush1.bf16.msra.mxu0 0
      %3261 = vmatprep.mubr.bf16.mxu0 0
      %3262 = vmatmul.mubr.bf16.gmra.mrb[0].mxu0 %v3166
      %v3263 = vpop.f32.mrb[0].mxu0
      %v3264 = vadd.f32 %v3179, %v3263
      %v3265 = vpop.f32.mrb[0].mxu0
      %v3266 = vpop.f32.mrb[0].mxu0
      %v3267 = vadd.f32 %v3179, %v3266
      %v3268 = vpop.f32.mrb[0].mxu0
      %3269 = vmatprep.mubr.bf16.mxu0 0
      %3270 = vmatmul.mubr.bf16.gmra.mrb[0].mxu0 %v3167
      %v3271 = vpop.f32.mrb[0].mxu0
      %v3272 = vadd.f32 %v3179, %v3271
      %v3273 = vpop.f32.mrb[0].mxu0
      %v3274 = vpop.f32.mrb[0].mxu0
      %v3275 = vadd.f32 %v3179, %v3274
      %v3276 = vpop.f32.mrb[0].mxu0
      %3277 = vmatprep.mubr.bf16.mxu0 0
      %3278 = vmatmul.mubr.bf16.gmra.mrb[0].mxu0 %v3168
      %v3279 = vpop.f32.mrb[0].mxu0
      %v3280 = vadd.f32 %v3179, %v3279
      %v3281 = vpop.f32.mrb[0].mxu0
      %v3282 = vpop.f32.mrb[0].mxu0
      %v3283 = vadd.f32 %v3179, %v3282
      %v3284 = vpop.f32.mrb[0].mxu0
      %3285 = vmatprep.mubr.bf16.mxu0 0
      %3286 = vmatmul.mubr.bf16.gmra.mrb[0].mxu0 %v3169
      %v3287 = vpop.f32.mrb[0].mxu0
      %v3288 = vadd.f32 %v3179, %v3287
      %v3289 = vpop.f32.mrb[0].mxu0
      %v3290 = vpop.f32.mrb[0].mxu0
      %v3291 = vadd.f32 %v3179, %v3290
      %v3292 = vpop.f32.mrb[0].mxu0
      %3293 = vmatprep.mubr.bf16.mxu0 0
      %3294 = vmatmul.mubr.bf16.gmra.mrb[0].mxu0 %v3170
      %v3295 = vpop.f32.mrb[0].mxu0
      %v3296 = vadd.f32 %v3179, %v3295
      %v3297 = vpop.f32.mrb[0].mxu0
      %v3298 = vpop.f32.mrb[0].mxu0
      %v3299 = vadd.f32 %v3179, %v3298
      %v3300 = vpop.f32.mrb[0].mxu0
      %3301 = vmatprep.mubr.bf16.mxu0 0
      %3302 = vmatmul.mubr.bf16.gmra.mrb[0].mxu0 %v3171
      %v3303 = vpop.f32.mrb[0].mxu0
      %v3304 = vadd.f32 %v3179, %v3303
      %v3305 = vpop.f32.mrb[0].mxu0
      %v3306 = vpop.f32.mrb[0].mxu0
      %v3307 = vadd.f32 %v3179, %v3306
      %v3308 = vpop.f32.mrb[0].mxu0
      %3309 = vmatprep.mubr.bf16.mxu0 0
      %3310 = vmatmul.mubr.bf16.gmra.mrb[0].mxu0 %v3172
      %v3311 = vpop.f32.mrb[0].mxu0
      %v3312 = vadd.f32 %v3179, %v3311
      %v3313 = vpop.f32.mrb[0].mxu0
      %v3314 = vpop.f32.mrb[0].mxu0
      %v3315 = vadd.f32 %v3179, %v3314
      %v3316 = vpop.f32.mrb[0].mxu0
      %3317 = vmatprep.mubr.bf16.mxu0 0
      %3318 = vmatmul.mubr.bf16.gmra.mrb[0].mxu0 %v3173
      %v3319 = vpop.f32.mrb[0].mxu0
      %v3320 = vadd.f32 %v3179, %v3319
      %v3321 = vpop.f32.mrb[0].mxu0
      %v3322 = vpop.f32.mrb[0].mxu0
      %v3323 = vadd.f32 %v3179, %v3322
      %v3324 = vpop.f32.mrb[0].mxu0
      %3325 = vdwg.mxu0
      %v3326 = vmax.f32 %v3264, 0.0
      %v3327 = vmax.f32 %v3267, 0.0
      %v3328 = vmax.f32 %v3272, 0.0
      %v3329 = vmax.f32 %v3275, 0.0
      %v3330 = vmax.f32 %v3280, 0.0
      %v3331 = vmax.f32 %v3283, 0.0
      %v3332 = vmax.f32 %v3288, 0.0
      %v3333 = vmax.f32 %v3291, 0.0
      %v3334 = vmax.f32 %v3296, 0.0
      %v3335 = vmax.f32 %v3299, 0.0
      %v3336 = vmax.f32 %v3304, 0.0
      %v3337 = vmax.f32 %v3307, 0.0
      %v3338 = vmax.f32 %v3312, 0.0
      %v3339 = vmax.f32 %v3315, 0.0
      %v3340 = vmax.f32 %v3320, 0.0
      %v3341 = vmax.f32 %v3323, 0.0
      %v3342 = vpack.c.bf16 %v3327, %v3326
      %v3343 = vpack.c.bf16 %v3329, %v3328
      %v3344 = vpack.c.bf16 %v3331, %v3330
      %v3345 = vpack.c.bf16 %v3333, %v3332
      %v3346 = vpack.c.bf16 %v3335, %v3334
      %v3347 = vpack.c.bf16 %v3337, %v3336
      %v3348 = vpack.c.bf16 %v3339, %v3338
      %v3349 = vpack.c.bf16 %v3341, %v3340
      %v3350 = vld [vmem:[%s12] sm:$0xf]
      %v3351 = vld [vmem:[%s12 + $0x4] sm:$0xf]
      %v3352 = vld [vmem:[%s12 + $0x8] sm:$0xf]
      %v3353 = vld [vmem:[%s12 + $0xc] sm:$0xf]
      %v3358 = vunpack.c.l.b16 %v3350
      %v3359 = vunpack.c.l.b16 %v3351
      %v3360 = vunpack.c.l.b16 %v3352
      %v3361 = vunpack.c.l.b16 %v3353
      %v3362 = vpack.c.b16 %v3359, %v3358
      %v3363 = vpack.c.b16 %v3361, %v3360
      %vm3366 = vcmask 261120
      %v3368 = vsel %vm3366, %v3342, 0
      %v3371 = vsel %vm3366, %v3343, 0
      %v3374 = vsel %vm3366, %v3344, 0
      %v3377 = vsel %vm3366, %v3345, 0
      %v3380 = vsel %vm3366, %v3346, 0
      %v3383 = vsel %vm3366, %v3347, 0
      %v3386 = vsel %vm3366, %v3348, 0
      %v3389 = vsel %vm3366, %v3349, 0
      %3391 = vmatprep.subr.bf16.mxu0 0
      %3392 = vmatpush1.bf16.msra.mxu0 %v3362
      %3393 = vmatprep.subr.bf16.mxu0 0
      %3394 = vmatpush1.bf16.msra.mxu0 %v3363
      %3395 = vmatprep.subr.bf16.mxu0 0
      %3396 = vmatpush1.bf16.msra.mxu0 0
      %3397 = vmatprep.subr.bf16.mxu0 0
      %3398 = vmatpush1.bf16.msra.mxu0 0
      %3399 = vmatprep.subr.bf16.mxu0 0
      %3400 = vmatpush1.bf16.msra.mxu0 0
      %3401 = vmatprep.subr.bf16.mxu0 0
      %3402 = vmatpush1.bf16.msra.mxu0 0
      %3403 = vmatprep.subr.bf16.mxu0 0
      %3404 = vmatpush1.bf16.msra.mxu0 0
      %3405 = vmatprep.subr.bf16.mxu0 0
      %3406 = vmatpush1.bf16.msra.mxu0 0
      %3407 = vmatprep.subr.bf16.mxu0 0
      %3408 = vmatpush1.bf16.msra.mxu0 0
      %3409 = vmatprep.subr.bf16.mxu0 0
      %3410 = vmatpush1.bf16.msra.mxu0 0
      %3411 = vmatprep.subr.bf16.mxu0 0
      %3412 = vmatpush1.bf16.msra.mxu0 0
      %3413 = vmatprep.subr.bf16.mxu0 0
      %3414 = vmatpush1.bf16.msra.mxu0 0
      %3415 = vmatprep.subr.bf16.mxu0 0
      %3416 = vmatpush1.bf16.msra.mxu0 0
      %3417 = vmatprep.subr.bf16.mxu0 0
      %3418 = vmatpush1.bf16.msra.mxu0 0
      %3419 = vmatprep.subr.bf16.mxu0 0
      %3420 = vmatpush1.bf16.msra.mxu0 0
      %3421 = vmatprep.subr.bf16.mxu0 0
      %3422 = vmatpush1.bf16.msra.mxu0 0
      %3423 = vmatprep.mubr.bf16.mxu0 0
      %3424 = vmatmul.mubr.bf16.gmra.mrb[0].mxu0 %v3368
      %v3425 = vpop.f32.mrb[0].mxu0
      %v3426 = vadd.f32 0.0, %v3425
      %v3427 = vpop.f32.mrb[0].mxu0
      %v3428 = vpop.f32.mrb[0].mxu0
      %v3429 = vadd.f32 0.0, %v3428
      %v3430 = vpop.f32.mrb[0].mxu0
      %3431 = vmatprep.mubr.bf16.mxu0 0
      %3432 = vmatmul.mubr.bf16.gmra.mrb[0].mxu0 %v3371
      %v3433 = vpop.f32.mrb[0].mxu0
      %v3434 = vadd.f32 0.0, %v3433
      %v3435 = vpop.f32.mrb[0].mxu0
      %v3436 = vpop.f32.mrb[0].mxu0
      %v3437 = vadd.f32 0.0, %v3436
      %v3438 = vpop.f32.mrb[0].mxu0
      %3439 = vmatprep.mubr.bf16.mxu0 0
      %3440 = vmatmul.mubr.bf16.gmra.mrb[0].mxu0 %v3374
      %v3441 = vpop.f32.mrb[0].mxu0
      %v3442 = vadd.f32 0.0, %v3441
      %v3443 = vpop.f32.mrb[0].mxu0
      %v3444 = vpop.f32.mrb[0].mxu0
      %v3445 = vadd.f32 0.0, %v3444
      %v3446 = vpop.f32.mrb[0].mxu0
      %3447 = vmatprep.mubr.bf16.mxu0 0
      %3448 = vmatmul.mubr.bf16.gmra.mrb[0].mxu0 %v3377
      %v3449 = vpop.f32.mrb[0].mxu0
      %v3450 = vadd.f32 0.0, %v3449
      %v3451 = vpop.f32.mrb[0].mxu0
      %v3452 = vpop.f32.mrb[0].mxu0
      %v3453 = vadd.f32 0.0, %v3452
      %v3454 = vpop.f32.mrb[0].mxu0
      %3455 = vmatprep.mubr.bf16.mxu0 0
      %3456 = vmatmul.mubr.bf16.gmra.mrb[0].mxu0 %v3380
      %v3457 = vpop.f32.mrb[0].mxu0
      %v3458 = vadd.f32 0.0, %v3457
      %v3459 = vpop.f32.mrb[0].mxu0
      %v3460 = vpop.f32.mrb[0].mxu0
      %v3461 = vadd.f32 0.0, %v3460
      %v3462 = vpop.f32.mrb[0].mxu0
      %3463 = vmatprep.mubr.bf16.mxu0 0
      %3464 = vmatmul.mubr.bf16.gmra.mrb[0].mxu0 %v3383
      %v3465 = vpop.f32.mrb[0].mxu0
      %v3466 = vadd.f32 0.0, %v3465
      %v3467 = vpop.f32.mrb[0].mxu0
      %v3468 = vpop.f32.mrb[0].mxu0
      %v3469 = vadd.f32 0.0, %v3468
      %v3470 = vpop.f32.mrb[0].mxu0
      %3471 = vmatprep.mubr.bf16.mxu0 0
      %3472 = vmatmul.mubr.bf16.gmra.mrb[0].mxu0 %v3386
      %v3473 = vpop.f32.mrb[0].mxu0
      %v3474 = vadd.f32 0.0, %v3473
      %v3475 = vpop.f32.mrb[0].mxu0
      %v3476 = vpop.f32.mrb[0].mxu0
      %v3477 = vadd.f32 0.0, %v3476
      %v3478 = vpop.f32.mrb[0].mxu0
      %3479 = vmatprep.mubr.bf16.mxu0 0
      %3480 = vmatmul.mubr.bf16.gmra.mrb[0].mxu0 %v3389
      %v3481 = vpop.f32.mrb[0].mxu0
      %v3482 = vadd.f32 0.0, %v3481
      %v3483 = vpop.f32.mrb[0].mxu0
      %v3484 = vpop.f32.mrb[0].mxu0
      %v3485 = vadd.f32 0.0, %v3484
      %v3486 = vpop.f32.mrb[0].mxu0
      %3487 = vdwg.mxu0
      %v3488 = vld [vmem:[%s13] sm:$0xf]
      %v3489 = vld [vmem:[%s13 + $0x4] sm:$0xf]
      %v3490 = vld [vmem:[%s13 + $0x8] sm:$0xf]
      %v3491 = vld [vmem:[%s13 + $0xc] sm:$0xf]
      %v3496 = vunpack.c.l.b16 %v3488
      %v3497 = vunpack.c.l.b16 %v3489
      %v3498 = vunpack.c.l.b16 %v3490
      %v3499 = vunpack.c.l.b16 %v3491
      %v3500 = vpack.c.b16 %v3497, %v3496
      %v3501 = vpack.c.b16 %v3499, %v3498
      %3504 = vmatprep.subr.bf16.mxu0 0
      %3505 = vmatpush1.bf16.msra.mxu0 %v3500
      %3506 = vmatprep.subr.bf16.mxu0 0
      %3507 = vmatpush1.bf16.msra.mxu0 %v3501
      %3508 = vmatprep.subr.bf16.mxu0 0
      %3509 = vmatpush1.bf16.msra.mxu0 0
      %3510 = vmatprep.subr.bf16.mxu0 0
      %3511 = vmatpush1.bf16.msra.mxu0 0
      %3512 = vmatprep.subr.bf16.mxu0 0
      %3513 = vmatpush1.bf16.msra.mxu0 0
      %3514 = vmatprep.subr.bf16.mxu0 0
      %3515 = vmatpush1.bf16.msra.mxu0 0
      %3516 = vmatprep.subr.bf16.mxu0 0
      %3517 = vmatpush1.bf16.msra.mxu0 0
      %3518 = vmatprep.subr.bf16.mxu0 0
      %3519 = vmatpush1.bf16.msra.mxu0 0
      %3520 = vmatprep.subr.bf16.mxu0 0
      %3521 = vmatpush1.bf16.msra.mxu0 0
      %3522 = vmatprep.subr.bf16.mxu0 0
      %3523 = vmatpush1.bf16.msra.mxu0 0
      %3524 = vmatprep.subr.bf16.mxu0 0
      %3525 = vmatpush1.bf16.msra.mxu0 0
      %3526 = vmatprep.subr.bf16.mxu0 0
      %3527 = vmatpush1.bf16.msra.mxu0 0
      %3528 = vmatprep.subr.bf16.mxu0 0
      %3529 = vmatpush1.bf16.msra.mxu0 0
      %3530 = vmatprep.subr.bf16.mxu0 0
      %3531 = vmatpush1.bf16.msra.mxu0 0
      %3532 = vmatprep.subr.bf16.mxu0 0
      %3533 = vmatpush1.bf16.msra.mxu0 0
      %3534 = vmatprep.subr.bf16.mxu0 0
      %3535 = vmatpush1.bf16.msra.mxu0 0
      %3536 = vmatprep.mubr.bf16.mxu0 0
      %3537 = vmatmul.mubr.bf16.gmra.mrb[0].mxu0 %v3368
      %v3538 = vpop.f32.mrb[0].mxu0
      %v3539 = vadd.f32 0.0, %v3538
      %v3540 = vpop.f32.mrb[0].mxu0
      %v3541 = vpop.f32.mrb[0].mxu0
      %v3542 = vadd.f32 0.0, %v3541
      %v3543 = vpop.f32.mrb[0].mxu0
      %3544 = vmatprep.mubr.bf16.mxu0 0
      %3545 = vmatmul.mubr.bf16.gmra.mrb[0].mxu0 %v3371
      %v3546 = vpop.f32.mrb[0].mxu0
      %v3547 = vadd.f32 0.0, %v3546
      %v3548 = vpop.f32.mrb[0].mxu0
      %v3549 = vpop.f32.mrb[0].mxu0
      %v3550 = vadd.f32 0.0, %v3549
      %v3551 = vpop.f32.mrb[0].mxu0
      %3552 = vmatprep.mubr.bf16.mxu0 0
      %3553 = vmatmul.mubr.bf16.gmra.mrb[0].mxu0 %v3374
      %v3554 = vpop.f32.mrb[0].mxu0
      %v3555 = vadd.f32 0.0, %v3554
      %v3556 = vpop.f32.mrb[0].mxu0
      %v3557 = vpop.f32.mrb[0].mxu0
      %v3558 = vadd.f32 0.0, %v3557
      %v3559 = vpop.f32.mrb[0].mxu0
      %3560 = vmatprep.mubr.bf16.mxu0 0
      %3561 = vmatmul.mubr.bf16.gmra.mrb[0].mxu0 %v3377
      %v3562 = vpop.f32.mrb[0].mxu0
      %v3563 = vadd.f32 0.0, %v3562
      %v3564 = vpop.f32.mrb[0].mxu0
      %v3565 = vpop.f32.mrb[0].mxu0
      %v3566 = vadd.f32 0.0, %v3565
      %v3567 = vpop.f32.mrb[0].mxu0
      %3568 = vmatprep.mubr.bf16.mxu0 0
      %3569 = vmatmul.mubr.bf16.gmra.mrb[0].mxu0 %v3380
      %v3570 = vpop.f32.mrb[0].mxu0
      %v3571 = vadd.f32 0.0, %v3570
      %v3572 = vpop.f32.mrb[0].mxu0
      %v3573 = vpop.f32.mrb[0].mxu0
      %v3574 = vadd.f32 0.0, %v3573
      %v3575 = vpop.f32.mrb[0].mxu0
      %3576 = vmatprep.mubr.bf16.mxu0 0
      %3577 = vmatmul.mubr.bf16.gmra.mrb[0].mxu0 %v3383
      %v3578 = vpop.f32.mrb[0].mxu0
      %v3579 = vadd.f32 0.0, %v3578
      %v3580 = vpop.f32.mrb[0].mxu0
      %v3581 = vpop.f32.mrb[0].mxu0
      %v3582 = vadd.f32 0.0, %v3581
      %v3583 = vpop.f32.mrb[0].mxu0
      %3584 = vmatprep.mubr.bf16.mxu0 0
      %3585 = vmatmul.mubr.bf16.gmra.mrb[0].mxu0 %v3386
      %v3586 = vpop.f32.mrb[0].mxu0
      %v3587 = vadd.f32 0.0, %v3586
      %v3588 = vpop.f32.mrb[0].mxu0
      %v3589 = vpop.f32.mrb[0].mxu0
      %v3590 = vadd.f32 0.0, %v3589
      %v3591 = vpop.f32.mrb[0].mxu0
      %3592 = vmatprep.mubr.bf16.mxu0 0
      %3593 = vmatmul.mubr.bf16.gmra.mrb[0].mxu0 %v3389
      %v3594 = vpop.f32.mrb[0].mxu0
      %v3595 = vadd.f32 0.0, %v3594
      %v3596 = vpop.f32.mrb[0].mxu0
      %v3597 = vpop.f32.mrb[0].mxu0
      %v3598 = vadd.f32 0.0, %v3597
      %v3599 = vpop.f32.mrb[0].mxu0
      %3600 = vdwg.mxu0
      %v3601 = vld [vmem:[%s14] sm:$0xf]
      %v3602 = vld [vmem:[%s14 + $0x4] sm:$0xf]
      %v3603 = vld [vmem:[%s14 + $0x8] sm:$0xf]
      %v3604 = vld [vmem:[%s14 + $0xc] sm:$0xf]
      %v3609 = vunpack.c.l.b16 %v3601
      %v3610 = vunpack.c.l.b16 %v3602
      %v3611 = vunpack.c.l.b16 %v3603
      %v3612 = vunpack.c.l.b16 %v3604
      %v3613 = vpack.c.b16 %v3610, %v3609
      %v3614 = vpack.c.b16 %v3612, %v3611
      %3617 = vmatprep.subr.bf16.mxu0 0
      %3618 = vmatpush1.bf16.msra.mxu0 %v3613
      %3619 = vmatprep.subr.bf16.mxu0 0
      %3620 = vmatpush1.bf16.msra.mxu0 %v3614
      %3621 = vmatprep.subr.bf16.mxu0 0
      %3622 = vmatpush1.bf16.msra.mxu0 0
      %3623 = vmatprep.subr.bf16.mxu0 0
      %3624 = vmatpush1.bf16.msra.mxu0 0
      %3625 = vmatprep.subr.bf16.mxu0 0
      %3626 = vmatpush1.bf16.msra.mxu0 0
      %3627 = vmatprep.subr.bf16.mxu0 0
      %3628 = vmatpush1.bf16.msra.mxu0 0
      %3629 = vmatprep.subr.bf16.mxu0 0
      %3630 = vmatpush1.bf16.msra.mxu0 0
      %3631 = vmatprep.subr.bf16.mxu0 0
      %3632 = vmatpush1.bf16.msra.mxu0 0
      %3633 = vmatprep.subr.bf16.mxu0 0
      %3634 = vmatpush1.bf16.msra.mxu0 0
      %3635 = vmatprep.subr.bf16.mxu0 0
      %3636 = vmatpush1.bf16.msra.mxu0 0
      %3637 = vmatprep.subr.bf16.mxu0 0
      %3638 = vmatpush1.bf16.msra.mxu0 0
      %3639 = vmatprep.subr.bf16.mxu0 0
      %3640 = vmatpush1.bf16.msra.mxu0 0
      %3641 = vmatprep.subr.bf16.mxu0 0
      %3642 = vmatpush1.bf16.msra.mxu0 0
      %3643 = vmatprep.subr.bf16.mxu0 0
      %3644 = vmatpush1.bf16.msra.mxu0 0
      %3645 = vmatprep.subr.bf16.mxu0 0
      %3646 = vmatpush1.bf16.msra.mxu0 0
      %3647 = vmatprep.subr.bf16.mxu0 0
      %3648 = vmatpush1.bf16.msra.mxu0 0
      %3649 = vmatprep.mubr.bf16.mxu0 0
      %3650 = vmatmul.mubr.bf16.gmra.mrb[0].mxu0 %v3368
      %v3651 = vpop.f32.mrb[0].mxu0
      %v3652 = vadd.f32 0.0, %v3651
      %v3653 = vpop.f32.mrb[0].mxu0
      %v3654 = vpop.f32.mrb[0].mxu0
      %v3655 = vadd.f32 0.0, %v3654
      %v3656 = vpop.f32.mrb[0].mxu0
      %3657 = vmatprep.mubr.bf16.mxu0 0
      %3658 = vmatmul.mubr.bf16.gmra.mrb[0].mxu0 %v3371
      %v3659 = vpop.f32.mrb[0].mxu0
      %v3660 = vadd.f32 0.0, %v3659
      %v3661 = vpop.f32.mrb[0].mxu0
      %v3662 = vpop.f32.mrb[0].mxu0
      %v3663 = vadd.f32 0.0, %v3662
      %v3664 = vpop.f32.mrb[0].mxu0
      %3665 = vmatprep.mubr.bf16.mxu0 0
      %3666 = vmatmul.mubr.bf16.gmra.mrb[0].mxu0 %v3374
      %v3667 = vpop.f32.mrb[0].mxu0
      %v3668 = vadd.f32 0.0, %v3667
      %v3669 = vpop.f32.mrb[0].mxu0
      %v3670 = vpop.f32.mrb[0].mxu0
      %v3671 = vadd.f32 0.0, %v3670
      %v3672 = vpop.f32.mrb[0].mxu0
      %3673 = vmatprep.mubr.bf16.mxu0 0
      %3674 = vmatmul.mubr.bf16.gmra.mrb[0].mxu0 %v3377
      %v3675 = vpop.f32.mrb[0].mxu0
      %v3676 = vadd.f32 0.0, %v3675
      %v3677 = vpop.f32.mrb[0].mxu0
      %v3678 = vpop.f32.mrb[0].mxu0
      %v3679 = vadd.f32 0.0, %v3678
      %v3680 = vpop.f32.mrb[0].mxu0
      %3681 = vmatprep.mubr.bf16.mxu0 0
      %3682 = vmatmul.mubr.bf16.gmra.mrb[0].mxu0 %v3380
      %v3683 = vpop.f32.mrb[0].mxu0
      %v3684 = vadd.f32 0.0, %v3683
      %v3685 = vpop.f32.mrb[0].mxu0
      %v3686 = vpop.f32.mrb[0].mxu0
      %v3687 = vadd.f32 0.0, %v3686
      %v3688 = vpop.f32.mrb[0].mxu0
      %3689 = vmatprep.mubr.bf16.mxu0 0
      %3690 = vmatmul.mubr.bf16.gmra.mrb[0].mxu0 %v3383
      %v3691 = vpop.f32.mrb[0].mxu0
      %v3692 = vadd.f32 0.0, %v3691
      %v3693 = vpop.f32.mrb[0].mxu0
      %v3694 = vpop.f32.mrb[0].mxu0
      %v3695 = vadd.f32 0.0, %v3694
      %v3696 = vpop.f32.mrb[0].mxu0
      %3697 = vmatprep.mubr.bf16.mxu0 0
      %3698 = vmatmul.mubr.bf16.gmra.mrb[0].mxu0 %v3386
      %v3699 = vpop.f32.mrb[0].mxu0
      %v3700 = vadd.f32 0.0, %v3699
      %v3701 = vpop.f32.mrb[0].mxu0
      %v3702 = vpop.f32.mrb[0].mxu0
      %v3703 = vadd.f32 0.0, %v3702
      %v3704 = vpop.f32.mrb[0].mxu0
      %3705 = vmatprep.mubr.bf16.mxu0 0
      %3706 = vmatmul.mubr.bf16.gmra.mrb[0].mxu0 %v3389
      %v3707 = vpop.f32.mrb[0].mxu0
      %v3708 = vadd.f32 0.0, %v3707
      %v3709 = vpop.f32.mrb[0].mxu0
      %v3710 = vpop.f32.mrb[0].mxu0
      %v3711 = vadd.f32 0.0, %v3710
      %v3712 = vpop.f32.mrb[0].mxu0
      %3713 = vdwg.mxu0
      %v3714 = vld [vmem:[%s15] sm:$0x3]
      %v3716 = vand.u32 %v3714, %v1258
      %3718 = vmatprep.subr.bf16.mxu0 0
      %3719 = vmatpush1.bf16.msra.mxu0 %v3716
      %3720 = vmatprep.subr.bf16.mxu0 0
      %3721 = vmatpush1.bf16.msra.mxu0 0
      %3722 = vmatprep.subr.bf16.mxu0 0
      %3723 = vmatpush1.bf16.msra.mxu0 0
      %3724 = vmatprep.subr.bf16.mxu0 0
      %3725 = vmatpush1.bf16.msra.mxu0 0
      %3726 = vmatprep.subr.bf16.mxu0 0
      %3727 = vmatpush1.bf16.msra.mxu0 0
      %3728 = vmatprep.subr.bf16.mxu0 0
      %3729 = vmatpush1.bf16.msra.mxu0 0
      %3730 = vmatprep.subr.bf16.mxu0 0
      %3731 = vmatpush1.bf16.msra.mxu0 0
      %3732 = vmatprep.subr.bf16.mxu0 0
      %3733 = vmatpush1.bf16.msra.mxu0 0
      %3734 = vmatprep.subr.bf16.mxu0 0
      %3735 = vmatpush1.bf16.msra.mxu0 0
      %3736 = vmatprep.subr.bf16.mxu0 0
      %3737 = vmatpush1.bf16.msra.mxu0 0
      %3738 = vmatprep.subr.bf16.mxu0 0
      %3739 = vmatpush1.bf16.msra.mxu0 0
      %3740 = vmatprep.subr.bf16.mxu0 0
      %3741 = vmatpush1.bf16.msra.mxu0 0
      %3742 = vmatprep.subr.bf16.mxu0 0
      %3743 = vmatpush1.bf16.msra.mxu0 0
      %3744 = vmatprep.subr.bf16.mxu0 0
      %3745 = vmatpush1.bf16.msra.mxu0 0
      %3746 = vmatprep.subr.bf16.mxu0 0
      %3747 = vmatpush1.bf16.msra.mxu0 0
      %3748 = vmatprep.subr.bf16.mxu0 0
      %3749 = vmatpush1.bf16.msra.mxu0 0
      %3750 = vmatprep.mubr.bf16.mxu0 0
      %3751 = vmatmul.mubr.bf16.gmra.mrb[0].mxu0 %v1209
      %v3752 = vpop.f32.mrb[0].mxu0
      %v3753 = vadd.f32 0.0, %v3752
      %v3754 = vpop.f32.mrb[0].mxu0
      %v3755 = vpop.f32.mrb[0].mxu0
      %v3756 = vadd.f32 0.0, %v3755
      %v3757 = vpop.f32.mrb[0].mxu0
      %3758 = vmatprep.mubr.bf16.mxu0 0
      %3759 = vmatmul.mubr.bf16.gmra.mrb[0].mxu0 %v1212
      %v3760 = vpop.f32.mrb[0].mxu0
      %v3761 = vadd.f32 0.0, %v3760
      %v3762 = vpop.f32.mrb[0].mxu0
      %v3763 = vpop.f32.mrb[0].mxu0
      %v3764 = vadd.f32 0.0, %v3763
      %v3765 = vpop.f32.mrb[0].mxu0
      %3766 = vmatprep.mubr.bf16.mxu0 0
      %3767 = vmatmul.mubr.bf16.gmra.mrb[0].mxu0 %v1215
      %v3768 = vpop.f32.mrb[0].mxu0
      %v3769 = vadd.f32 0.0, %v3768
      %v3770 = vpop.f32.mrb[0].mxu0
      %v3771 = vpop.f32.mrb[0].mxu0
      %v3772 = vadd.f32 0.0, %v3771
      %v3773 = vpop.f32.mrb[0].mxu0
      %3774 = vmatprep.mubr.bf16.mxu0 0
      %3775 = vmatmul.mubr.bf16.gmra.mrb[0].mxu0 %v1218
      %v3776 = vpop.f32.mrb[0].mxu0
      %v3777 = vadd.f32 0.0, %v3776
      %v3778 = vpop.f32.mrb[0].mxu0
      %v3779 = vpop.f32.mrb[0].mxu0
      %v3780 = vadd.f32 0.0, %v3779
      %v3781 = vpop.f32.mrb[0].mxu0
      %3782 = vmatprep.mubr.bf16.mxu0 0
      %3783 = vmatmul.mubr.bf16.gmra.mrb[0].mxu0 %v1221
      %v3784 = vpop.f32.mrb[0].mxu0
      %v3785 = vadd.f32 0.0, %v3784
      %v3786 = vpop.f32.mrb[0].mxu0
      %v3787 = vpop.f32.mrb[0].mxu0
      %v3788 = vadd.f32 0.0, %v3787
      %v3789 = vpop.f32.mrb[0].mxu0
      %3790 = vmatprep.mubr.bf16.mxu0 0
      %3791 = vmatmul.mubr.bf16.gmra.mrb[0].mxu0 %v1224
      %v3792 = vpop.f32.mrb[0].mxu0
      %v3793 = vadd.f32 0.0, %v3792
      %v3794 = vpop.f32.mrb[0].mxu0
      %v3795 = vpop.f32.mrb[0].mxu0
      %v3796 = vadd.f32 0.0, %v3795
      %v3797 = vpop.f32.mrb[0].mxu0
      %3798 = vmatprep.mubr.bf16.mxu0 0
      %3799 = vmatmul.mubr.bf16.gmra.mrb[0].mxu0 %v1227
      %v3800 = vpop.f32.mrb[0].mxu0
      %v3801 = vadd.f32 0.0, %v3800
      %v3802 = vpop.f32.mrb[0].mxu0
      %v3803 = vpop.f32.mrb[0].mxu0
      %v3804 = vadd.f32 0.0, %v3803
      %v3805 = vpop.f32.mrb[0].mxu0
      %3806 = vmatprep.mubr.bf16.mxu0 0
      %3807 = vmatmul.mubr.bf16.gmra.mrb[0].mxu0 %v1230
      %v3808 = vpop.f32.mrb[0].mxu0
      %v3809 = vadd.f32 0.0, %v3808
      %v3810 = vpop.f32.mrb[0].mxu0
      %v3811 = vpop.f32.mrb[0].mxu0
      %v3812 = vadd.f32 0.0, %v3811
      %v3813 = vpop.f32.mrb[0].mxu0
      %3814 = vmatprep.mubr.bf16.mxu0 0
      %3815 = vmatmul.mubr.bf16.gmra.mrb[0].mxu0 %v1233
      %v3816 = vpop.f32.mrb[0].mxu0
      %v3817 = vadd.f32 0.0, %v3816
      %v3818 = vpop.f32.mrb[0].mxu0
      %v3819 = vpop.f32.mrb[0].mxu0
      %v3820 = vadd.f32 0.0, %v3819
      %v3821 = vpop.f32.mrb[0].mxu0
      %3822 = vmatprep.mubr.bf16.mxu0 0
      %3823 = vmatmul.mubr.bf16.gmra.mrb[0].mxu0 %v1236
      %v3824 = vpop.f32.mrb[0].mxu0
      %v3825 = vadd.f32 0.0, %v3824
      %v3826 = vpop.f32.mrb[0].mxu0
      %v3827 = vpop.f32.mrb[0].mxu0
      %v3828 = vadd.f32 0.0, %v3827
      %v3829 = vpop.f32.mrb[0].mxu0
      %3830 = vmatprep.mubr.bf16.mxu0 0
      %3831 = vmatmul.mubr.bf16.gmra.mrb[0].mxu0 %v1239
      %v3832 = vpop.f32.mrb[0].mxu0
      %v3833 = vadd.f32 0.0, %v3832
      %v3834 = vpop.f32.mrb[0].mxu0
      %v3835 = vpop.f32.mrb[0].mxu0
      %v3836 = vadd.f32 0.0, %v3835
      %v3837 = vpop.f32.mrb[0].mxu0
      %3838 = vmatprep.mubr.bf16.mxu0 0
      %3839 = vmatmul.mubr.bf16.gmra.mrb[0].mxu0 %v1242
      %v3840 = vpop.f32.mrb[0].mxu0
      %v3841 = vadd.f32 0.0, %v3840
      %v3842 = vpop.f32.mrb[0].mxu0
      %v3843 = vpop.f32.mrb[0].mxu0
      %v3844 = vadd.f32 0.0, %v3843
      %v3845 = vpop.f32.mrb[0].mxu0
      %3846 = vmatprep.mubr.bf16.mxu0 0
      %3847 = vmatmul.mubr.bf16.gmra.mrb[0].mxu0 %v1245
      %v3848 = vpop.f32.mrb[0].mxu0
      %v3849 = vadd.f32 0.0, %v3848
      %v3850 = vpop.f32.mrb[0].mxu0
      %v3851 = vpop.f32.mrb[0].mxu0
      %v3852 = vadd.f32 0.0, %v3851
      %v3853 = vpop.f32.mrb[0].mxu0
      %3854 = vmatprep.mubr.bf16.mxu0 0
      %3855 = vmatmul.mubr.bf16.gmra.mrb[0].mxu0 %v1248
      %v3856 = vpop.f32.mrb[0].mxu0
      %v3857 = vadd.f32 0.0, %v3856
      %v3858 = vpop.f32.mrb[0].mxu0
      %v3859 = vpop.f32.mrb[0].mxu0
      %v3860 = vadd.f32 0.0, %v3859
      %v3861 = vpop.f32.mrb[0].mxu0
      %3862 = vmatprep.mubr.bf16.mxu0 0
      %3863 = vmatmul.mubr.bf16.gmra.mrb[0].mxu0 %v1251
      %v3864 = vpop.f32.mrb[0].mxu0
      %v3865 = vadd.f32 0.0, %v3864
      %v3866 = vpop.f32.mrb[0].mxu0
      %v3867 = vpop.f32.mrb[0].mxu0
      %v3868 = vadd.f32 0.0, %v3867
      %v3869 = vpop.f32.mrb[0].mxu0
      %3870 = vmatprep.mubr.bf16.mxu0 0
      %3871 = vmatmul.mubr.bf16.gmra.mrb[0].mxu0 %v1254
      %v3872 = vpop.f32.mrb[0].mxu0
      %v3873 = vadd.f32 0.0, %v3872
      %v3874 = vpop.f32.mrb[0].mxu0
      %v3875 = vpop.f32.mrb[0].mxu0
      %v3876 = vadd.f32 0.0, %v3875
      %v3877 = vpop.f32.mrb[0].mxu0
      %3878 = vdwg.mxu0
      %v3879 = vpack.c.bf16 %v3542, %v3539
      %v3880 = vpack.c.bf16 %v3550, %v3547
      %v3881 = vpack.c.bf16 %v3558, %v3555
      %v3882 = vpack.c.bf16 %v3566, %v3563
      %v3883 = vpack.c.bf16 %v3574, %v3571
      %v3884 = vpack.c.bf16 %v3582, %v3579
      %v3885 = vpack.c.bf16 %v3590, %v3587
      %v3886 = vpack.c.bf16 %v3598, %v3595
      %v3887 = vpack.c.bf16 %v3655, %v3652
      %v3888 = vpack.c.bf16 %v3663, %v3660
      %v3889 = vpack.c.bf16 %v3671, %v3668
      %v3890 = vpack.c.bf16 %v3679, %v3676
      %v3891 = vpack.c.bf16 %v3687, %v3684
      %v3892 = vpack.c.bf16 %v3695, %v3692
      %v3893 = vpack.c.bf16 %v3703, %v3700
      %v3894 = vpack.c.bf16 %v3711, %v3708
      %3895 = vmatprep.subr.bf16.mxu0 0
      %3896 = vmatpush1.bf16.msra.mxu0 %v3887
      %3897 = vmatprep.subr.bf16.mxu0 0
      %3898 = vmatpush1.bf16.msra.mxu0 %v3888
      %3899 = vmatprep.subr.bf16.mxu0 0
      %3900 = vmatpush1.bf16.msra.mxu0 %v3889
      %3901 = vmatprep.subr.bf16.mxu0 0
      %3902 = vmatpush1.bf16.msra.mxu0 %v3890
      %3903 = vmatprep.subr.bf16.mxu0 0
      %3904 = vmatpush1.bf16.msra.mxu0 %v3891
      %3905 = vmatprep.subr.bf16.mxu0 0
      %3906 = vmatpush1.bf16.msra.mxu0 %v3892
      %3907 = vmatprep.subr.bf16.mxu0 0
      %3908 = vmatpush1.bf16.msra.mxu0 %v3893
      %3909 = vmatprep.subr.bf16.mxu0 0
      %3910 = vmatpush1.bf16.msra.mxu0 %v3894
      %3911 = vmatprep.subr.bf16.mxu0 0
      %3912 = vmatpush1.bf16.msra.mxu0 0
      %3913 = vmatprep.subr.bf16.mxu0 0
      %3914 = vmatpush1.bf16.msra.mxu0 0
      %3915 = vmatprep.subr.bf16.mxu0 0
      %3916 = vmatpush1.bf16.msra.mxu0 0
      %3917 = vmatprep.subr.bf16.mxu0 0
      %3918 = vmatpush1.bf16.msra.mxu0 0
      %3919 = vmatprep.subr.bf16.mxu0 0
      %3920 = vmatpush1.bf16.msra.mxu0 0
      %3921 = vmatprep.subr.bf16.mxu0 0
      %3922 = vmatpush1.bf16.msra.mxu0 0
      %3923 = vmatprep.subr.bf16.mxu0 0
      %3924 = vmatpush1.bf16.msra.mxu0 0
      %3925 = vmatprep.subr.bf16.mxu0 0
      %3926 = vmatpush1.bf16.msra.mxu0 0
      %3927 = vmatprep.mubr.bf16.mxu0 0
      %3928 = vmatmul.mubr.bf16.gmra.mrb[0].mxu0 %v1503
      %v3929 = vpop.f32.mrb[0].mxu0
      %v3930 = vadd.f32 0.0, %v3929
      %v3931 = vpop.f32.mrb[0].mxu0
      %v3932 = vpop.f32.mrb[0].mxu0
      %v3933 = vadd.f32 0.0, %v3932
      %v3934 = vpop.f32.mrb[0].mxu0
      %3935 = vmatprep.mubr.bf16.mxu0 0
      %3936 = vmatmul.mubr.bf16.gmra.mrb[0].mxu0 %v1504
      %v3937 = vpop.f32.mrb[0].mxu0
      %v3938 = vadd.f32 0.0, %v3937
      %v3939 = vpop.f32.mrb[0].mxu0
      %v3940 = vpop.f32.mrb[0].mxu0
      %v3941 = vadd.f32 0.0, %v3940
      %v3942 = vpop.f32.mrb[0].mxu0
      %3943 = vmatprep.mubr.bf16.mxu0 0
      %3944 = vmatmul.mubr.bf16.gmra.mrb[0].mxu0 %v1505
      %v3945 = vpop.f32.mrb[0].mxu0
      %v3946 = vadd.f32 0.0, %v3945
      %v3947 = vpop.f32.mrb[0].mxu0
      %v3948 = vpop.f32.mrb[0].mxu0
      %v3949 = vadd.f32 0.0, %v3948
      %v3950 = vpop.f32.mrb[0].mxu0
      %3951 = vmatprep.mubr.bf16.mxu0 0
      %3952 = vmatmul.mubr.bf16.gmra.mrb[0].mxu0 %v1506
      %v3953 = vpop.f32.mrb[0].mxu0
      %v3954 = vadd.f32 0.0, %v3953
      %v3955 = vpop.f32.mrb[0].mxu0
      %v3956 = vpop.f32.mrb[0].mxu0
      %v3957 = vadd.f32 0.0, %v3956
      %v3958 = vpop.f32.mrb[0].mxu0
      %3959 = vmatprep.mubr.bf16.mxu0 0
      %3960 = vmatmul.mubr.bf16.gmra.mrb[0].mxu0 %v1507
      %v3961 = vpop.f32.mrb[0].mxu0
      %v3962 = vadd.f32 0.0, %v3961
      %v3963 = vpop.f32.mrb[0].mxu0
      %v3964 = vpop.f32.mrb[0].mxu0
      %v3965 = vadd.f32 0.0, %v3964
      %v3966 = vpop.f32.mrb[0].mxu0
      %3967 = vmatprep.mubr.bf16.mxu0 0
      %3968 = vmatmul.mubr.bf16.gmra.mrb[0].mxu0 %v1508
      %v3969 = vpop.f32.mrb[0].mxu0
      %v3970 = vadd.f32 0.0, %v3969
      %v3971 = vpop.f32.mrb[0].mxu0
      %v3972 = vpop.f32.mrb[0].mxu0
      %v3973 = vadd.f32 0.0, %v3972
      %v3974 = vpop.f32.mrb[0].mxu0
      %3975 = vmatprep.mubr.bf16.mxu0 0
      %3976 = vmatmul.mubr.bf16.gmra.mrb[0].mxu0 %v1509
      %v3977 = vpop.f32.mrb[0].mxu0
      %v3978 = vadd.f32 0.0, %v3977
      %v3979 = vpop.f32.mrb[0].mxu0
      %v3980 = vpop.f32.mrb[0].mxu0
      %v3981 = vadd.f32 0.0, %v3980
      %v3982 = vpop.f32.mrb[0].mxu0
      %3983 = vmatprep.mubr.bf16.mxu0 0
      %3984 = vmatmul.mubr.bf16.gmra.mrb[0].mxu0 %v1510
      %v3985 = vpop.f32.mrb[0].mxu0
      %v3986 = vadd.f32 0.0, %v3985
      %v3987 = vpop.f32.mrb[0].mxu0
      %v3988 = vpop.f32.mrb[0].mxu0
      %v3989 = vadd.f32 0.0, %v3988
      %v3990 = vpop.f32.mrb[0].mxu0
      %3991 = vmatprep.mubr.bf16.mxu0 0
      %3992 = vmatmul.mubr.bf16.gmra.mrb[0].mxu0 %v1511
      %v3993 = vpop.f32.mrb[0].mxu0
      %v3994 = vadd.f32 0.0, %v3993
      %v3995 = vpop.f32.mrb[0].mxu0
      %v3996 = vpop.f32.mrb[0].mxu0
      %v3997 = vadd.f32 0.0, %v3996
      %v3998 = vpop.f32.mrb[0].mxu0
      %3999 = vmatprep.mubr.bf16.mxu0 0
      %4000 = vmatmul.mubr.bf16.gmra.mrb[0].mxu0 %v1512
      %v4001 = vpop.f32.mrb[0].mxu0
      %v4002 = vadd.f32 0.0, %v4001
      %v4003 = vpop.f32.mrb[0].mxu0
      %v4004 = vpop.f32.mrb[0].mxu0
      %v4005 = vadd.f32 0.0, %v4004
      %v4006 = vpop.f32.mrb[0].mxu0
      %4007 = vmatprep.mubr.bf16.mxu0 0
      %4008 = vmatmul.mubr.bf16.gmra.mrb[0].mxu0 %v1513
      %v4009 = vpop.f32.mrb[0].mxu0
      %v4010 = vadd.f32 0.0, %v4009
      %v4011 = vpop.f32.mrb[0].mxu0
      %v4012 = vpop.f32.mrb[0].mxu0
      %v4013 = vadd.f32 0.0, %v4012
      %v4014 = vpop.f32.mrb[0].mxu0
      %4015 = vmatprep.mubr.bf16.mxu0 0
      %4016 = vmatmul.mubr.bf16.gmra.mrb[0].mxu0 %v1514
      %v4017 = vpop.f32.mrb[0].mxu0
      %v4018 = vadd.f32 0.0, %v4017
      %v4019 = vpop.f32.mrb[0].mxu0
      %v4020 = vpop.f32.mrb[0].mxu0
      %v4021 = vadd.f32 0.0, %v4020
      %v4022 = vpop.f32.mrb[0].mxu0
      %4023 = vmatprep.mubr.bf16.mxu0 0
      %4024 = vmatmul.mubr.bf16.gmra.mrb[0].mxu0 %v1515
      %v4025 = vpop.f32.mrb[0].mxu0
      %v4026 = vadd.f32 0.0, %v4025
      %v4027 = vpop.f32.mrb[0].mxu0
      %v4028 = vpop.f32.mrb[0].mxu0
      %v4029 = vadd.f32 0.0, %v4028
      %v4030 = vpop.f32.mrb[0].mxu0
      %4031 = vmatprep.mubr.bf16.mxu0 0
      %4032 = vmatmul.mubr.bf16.gmra.mrb[0].mxu0 %v1516
      %v4033 = vpop.f32.mrb[0].mxu0
      %v4034 = vadd.f32 0.0, %v4033
      %v4035 = vpop.f32.mrb[0].mxu0
      %v4036 = vpop.f32.mrb[0].mxu0
      %v4037 = vadd.f32 0.0, %v4036
      %v4038 = vpop.f32.mrb[0].mxu0
      %4039 = vmatprep.mubr.bf16.mxu0 0
      %4040 = vmatmul.mubr.bf16.gmra.mrb[0].mxu0 %v1517
      %v4041 = vpop.f32.mrb[0].mxu0
      %v4042 = vadd.f32 0.0, %v4041
      %v4043 = vpop.f32.mrb[0].mxu0
      %v4044 = vpop.f32.mrb[0].mxu0
      %v4045 = vadd.f32 0.0, %v4044
      %v4046 = vpop.f32.mrb[0].mxu0
      %4047 = vmatprep.mubr.bf16.mxu0 0
      %4048 = vmatmul.mubr.bf16.gmra.mrb[0].mxu0 %v1518
      %v4049 = vpop.f32.mrb[0].mxu0
      %v4050 = vadd.f32 0.0, %v4049
      %v4051 = vpop.f32.mrb[0].mxu0
      %v4052 = vpop.f32.mrb[0].mxu0
      %v4053 = vadd.f32 0.0, %v4052
      %v4054 = vpop.f32.mrb[0].mxu0
      %4055 = vdwg.mxu0
      %4056 = vmatprep.subr.bf16.mxu0 0
      %4057 = vmatpush1.bf16.msra.mxu0 %v3879
      %4058 = vmatprep.subr.bf16.mxu0 0
      %4059 = vmatpush1.bf16.msra.mxu0 %v3880
      %4060 = vmatprep.subr.bf16.mxu0 0
      %4061 = vmatpush1.bf16.msra.mxu0 %v3881
      %4062 = vmatprep.subr.bf16.mxu0 0
      %4063 = vmatpush1.bf16.msra.mxu0 %v3882
      %4064 = vmatprep.subr.bf16.mxu0 0
      %4065 = vmatpush1.bf16.msra.mxu0 %v3883
      %4066 = vmatprep.subr.bf16.mxu0 0
      %4067 = vmatpush1.bf16.msra.mxu0 %v3884
      %4068 = vmatprep.subr.bf16.mxu0 0
      %4069 = vmatpush1.bf16.msra.mxu0 %v3885
      %4070 = vmatprep.subr.bf16.mxu0 0
      %4071 = vmatpush1.bf16.msra.mxu0 %v3886
      %4072 = vmatprep.subr.bf16.mxu0 0
      %4073 = vmatpush1.bf16.msra.mxu0 0
      %4074 = vmatprep.subr.bf16.mxu0 0
      %4075 = vmatpush1.bf16.msra.mxu0 0
      %4076 = vmatprep.subr.bf16.mxu0 0
      %4077 = vmatpush1.bf16.msra.mxu0 0
      %4078 = vmatprep.subr.bf16.mxu0 0
      %4079 = vmatpush1.bf16.msra.mxu0 0
      %4080 = vmatprep.subr.bf16.mxu0 0
      %4081 = vmatpush1.bf16.msra.mxu0 0
      %4082 = vmatprep.subr.bf16.mxu0 0
      %4083 = vmatpush1.bf16.msra.mxu0 0
      %4084 = vmatprep.subr.bf16.mxu0 0
      %4085 = vmatpush1.bf16.msra.mxu0 0
      %4086 = vmatprep.subr.bf16.mxu0 0
      %4087 = vmatpush1.bf16.msra.mxu0 0
      %4088 = vmatprep.mubr.bf16.mxu0 0
      %4089 = vmatmul.mubr.bf16.gmra.mrb[0].mxu0 %v1760
      %v4090 = vpop.f32.mrb[0].mxu0
      %v4091 = vadd.f32 %v3930, %v4090
      %v4092 = vpop.f32.mrb[0].mxu0
      %v4093 = vpop.f32.mrb[0].mxu0
      %v4094 = vadd.f32 %v3933, %v4093
      %v4095 = vpop.f32.mrb[0].mxu0
      %4096 = vmatprep.mubr.bf16.mxu0 0
      %4097 = vmatmul.mubr.bf16.gmra.mrb[0].mxu0 %v1761
      %v4098 = vpop.f32.mrb[0].mxu0
      %v4099 = vadd.f32 %v3938, %v4098
      %v4100 = vpop.f32.mrb[0].mxu0
      %v4101 = vpop.f32.mrb[0].mxu0
      %v4102 = vadd.f32 %v3941, %v4101
      %v4103 = vpop.f32.mrb[0].mxu0
      %4104 = vmatprep.mubr.bf16.mxu0 0
      %4105 = vmatmul.mubr.bf16.gmra.mrb[0].mxu0 %v1762
      %v4106 = vpop.f32.mrb[0].mxu0
      %v4107 = vadd.f32 %v3946, %v4106
      %v4108 = vpop.f32.mrb[0].mxu0
      %v4109 = vpop.f32.mrb[0].mxu0
      %v4110 = vadd.f32 %v3949, %v4109
      %v4111 = vpop.f32.mrb[0].mxu0
      %4112 = vmatprep.mubr.bf16.mxu0 0
      %4113 = vmatmul.mubr.bf16.gmra.mrb[0].mxu0 %v1763
      %v4114 = vpop.f32.mrb[0].mxu0
      %v4115 = vadd.f32 %v3954, %v4114
      %v4116 = vpop.f32.mrb[0].mxu0
      %v4117 = vpop.f32.mrb[0].mxu0
      %v4118 = vadd.f32 %v3957, %v4117
      %v4119 = vpop.f32.mrb[0].mxu0
      %4120 = vmatprep.mubr.bf16.mxu0 0
      %4121 = vmatmul.mubr.bf16.gmra.mrb[0].mxu0 %v1764
      %v4122 = vpop.f32.mrb[0].mxu0
      %v4123 = vadd.f32 %v3962, %v4122
      %v4124 = vpop.f32.mrb[0].mxu0
      %v4125 = vpop.f32.mrb[0].mxu0
      %v4126 = vadd.f32 %v3965, %v4125
      %v4127 = vpop.f32.mrb[0].mxu0
      %4128 = vmatprep.mubr.bf16.mxu0 0
      %4129 = vmatmul.mubr.bf16.gmra.mrb[0].mxu0 %v1765
      %v4130 = vpop.f32.mrb[0].mxu0
      %v4131 = vadd.f32 %v3970, %v4130
      %v4132 = vpop.f32.mrb[0].mxu0
      %v4133 = vpop.f32.mrb[0].mxu0
      %v4134 = vadd.f32 %v3973, %v4133
      %v4135 = vpop.f32.mrb[0].mxu0
      %4136 = vmatprep.mubr.bf16.mxu0 0
      %4137 = vmatmul.mubr.bf16.gmra.mrb[0].mxu0 %v1766
      %v4138 = vpop.f32.mrb[0].mxu0
      %v4139 = vadd.f32 %v3978, %v4138
      %v4140 = vpop.f32.mrb[0].mxu0
      %v4141 = vpop.f32.mrb[0].mxu0
      %v4142 = vadd.f32 %v3981, %v4141
      %v4143 = vpop.f32.mrb[0].mxu0
      %4144 = vmatprep.mubr.bf16.mxu0 0
      %4145 = vmatmul.mubr.bf16.gmra.mrb[0].mxu0 %v1767
      %v4146 = vpop.f32.mrb[0].mxu0
      %v4147 = vadd.f32 %v3986, %v4146
      %v4148 = vpop.f32.mrb[0].mxu0
      %v4149 = vpop.f32.mrb[0].mxu0
      %v4150 = vadd.f32 %v3989, %v4149
      %v4151 = vpop.f32.mrb[0].mxu0
      %4152 = vmatprep.mubr.bf16.mxu0 0
      %4153 = vmatmul.mubr.bf16.gmra.mrb[0].mxu0 %v1768
      %v4154 = vpop.f32.mrb[0].mxu0
      %v4155 = vadd.f32 %v3994, %v4154
      %v4156 = vpop.f32.mrb[0].mxu0
      %v4157 = vpop.f32.mrb[0].mxu0
      %v4158 = vadd.f32 %v3997, %v4157
      %v4159 = vpop.f32.mrb[0].mxu0
      %4160 = vmatprep.mubr.bf16.mxu0 0
      %4161 = vmatmul.mubr.bf16.gmra.mrb[0].mxu0 %v1769
      %v4162 = vpop.f32.mrb[0].mxu0
      %v4163 = vadd.f32 %v4002, %v4162
      %v4164 = vpop.f32.mrb[0].mxu0
      %v4165 = vpop.f32.mrb[0].mxu0
      %v4166 = vadd.f32 %v4005, %v4165
      %v4167 = vpop.f32.mrb[0].mxu0
      %4168 = vmatprep.mubr.bf16.mxu0 0
      %4169 = vmatmul.mubr.bf16.gmra.mrb[0].mxu0 %v1770
      %v4170 = vpop.f32.mrb[0].mxu0
      %v4171 = vadd.f32 %v4010, %v4170
      %v4172 = vpop.f32.mrb[0].mxu0
      %v4173 = vpop.f32.mrb[0].mxu0
      %v4174 = vadd.f32 %v4013, %v4173
      %v4175 = vpop.f32.mrb[0].mxu0
      %4176 = vmatprep.mubr.bf16.mxu0 0
      %4177 = vmatmul.mubr.bf16.gmra.mrb[0].mxu0 %v1771
      %v4178 = vpop.f32.mrb[0].mxu0
      %v4179 = vadd.f32 %v4018, %v4178
      %v4180 = vpop.f32.mrb[0].mxu0
      %v4181 = vpop.f32.mrb[0].mxu0
      %v4182 = vadd.f32 %v4021, %v4181
      %v4183 = vpop.f32.mrb[0].mxu0
      %4184 = vmatprep.mubr.bf16.mxu0 0
      %4185 = vmatmul.mubr.bf16.gmra.mrb[0].mxu0 %v1772
      %v4186 = vpop.f32.mrb[0].mxu0
      %v4187 = vadd.f32 %v4026, %v4186
      %v4188 = vpop.f32.mrb[0].mxu0
      %v4189 = vpop.f32.mrb[0].mxu0
      %v4190 = vadd.f32 %v4029, %v4189
      %v4191 = vpop.f32.mrb[0].mxu0
      %4192 = vmatprep.mubr.bf16.mxu0 0
      %4193 = vmatmul.mubr.bf16.gmra.mrb[0].mxu0 %v1773
      %v4194 = vpop.f32.mrb[0].mxu0
      %v4195 = vadd.f32 %v4034, %v4194
      %v4196 = vpop.f32.mrb[0].mxu0
      %v4197 = vpop.f32.mrb[0].mxu0
      %v4198 = vadd.f32 %v4037, %v4197
      %v4199 = vpop.f32.mrb[0].mxu0
      %4200 = vmatprep.mubr.bf16.mxu0 0
      %4201 = vmatmul.mubr.bf16.gmra.mrb[0].mxu0 %v1774
      %v4202 = vpop.f32.mrb[0].mxu0
      %v4203 = vadd.f32 %v4042, %v4202
      %v4204 = vpop.f32.mrb[0].mxu0
      %v4205 = vpop.f32.mrb[0].mxu0
      %v4206 = vadd.f32 %v4045, %v4205
      %v4207 = vpop.f32.mrb[0].mxu0
      %4208 = vmatprep.mubr.bf16.mxu0 0
      %4209 = vmatmul.mubr.bf16.gmra.mrb[0].mxu0 %v1775
      %v4210 = vpop.f32.mrb[0].mxu0
      %v4211 = vadd.f32 %v4050, %v4210
      %v4212 = vpop.f32.mrb[0].mxu0
      %v4213 = vpop.f32.mrb[0].mxu0
      %v4214 = vadd.f32 %v4053, %v4213
      %v4215 = vpop.f32.mrb[0].mxu0
      %4216 = vdwg.mxu0
      %v4217 = vadd.f32 %v4091, %v3753
      %v4218 = vadd.f32 %v4094, %v3756
      %v4219 = vadd.f32 %v4099, %v3761
      %v4220 = vadd.f32 %v4102, %v3764
      %v4221 = vadd.f32 %v4107, %v3769
      %v4222 = vadd.f32 %v4110, %v3772
      %v4223 = vadd.f32 %v4115, %v3777
      %v4224 = vadd.f32 %v4118, %v3780
      %v4225 = vadd.f32 %v4123, %v3785
      %v4226 = vadd.f32 %v4126, %v3788
      %v4227 = vadd.f32 %v4131, %v3793
      %v4228 = vadd.f32 %v4134, %v3796
      %v4229 = vadd.f32 %v4139, %v3801
      %v4230 = vadd.f32 %v4142, %v3804
      %v4231 = vadd.f32 %v4147, %v3809
      %v4232 = vadd.f32 %v4150, %v3812
      %v4233 = vadd.f32 %v4155, %v3817
      %v4234 = vadd.f32 %v4158, %v3820
      %v4235 = vadd.f32 %v4163, %v3825
      %v4236 = vadd.f32 %v4166, %v3828
      %v4237 = vadd.f32 %v4171, %v3833
      %v4238 = vadd.f32 %v4174, %v3836
      %v4239 = vadd.f32 %v4179, %v3841
      %v4240 = vadd.f32 %v4182, %v3844
      %v4241 = vadd.f32 %v4187, %v3849
      %v4242 = vadd.f32 %v4190, %v3852
      %v4243 = vadd.f32 %v4195, %v3857
      %v4244 = vadd.f32 %v4198, %v3860
      %v4245 = vadd.f32 %v4203, %v3865
      %v4246 = vadd.f32 %v4206, %v3868
      %v4247 = vadd.f32 %v4211, %v3873
      %v4248 = vadd.f32 %v4214, %v3876
      %vm4249 = vcmp.gt.f32.partialorder %v4217, 0.0
      %vm4250 = vcmp.gt.f32.partialorder %v4218, 0.0
      %vm4251 = vcmp.gt.f32.partialorder %v4219, 0.0
      %vm4252 = vcmp.gt.f32.partialorder %v4220, 0.0
      %vm4253 = vcmp.gt.f32.partialorder %v4221, 0.0
      %vm4254 = vcmp.gt.f32.partialorder %v4222, 0.0
      %vm4255 = vcmp.gt.f32.partialorder %v4223, 0.0
      %vm4256 = vcmp.gt.f32.partialorder %v4224, 0.0
      %vm4257 = vcmp.gt.f32.partialorder %v4225, 0.0
      %vm4258 = vcmp.gt.f32.partialorder %v4226, 0.0
      %vm4259 = vcmp.gt.f32.partialorder %v4227, 0.0
      %vm4260 = vcmp.gt.f32.partialorder %v4228, 0.0
      %vm4261 = vcmp.gt.f32.partialorder %v4229, 0.0
      %vm4262 = vcmp.gt.f32.partialorder %v4230, 0.0
      %vm4263 = vcmp.gt.f32.partialorder %v4231, 0.0
      %vm4264 = vcmp.gt.f32.partialorder %v4232, 0.0
      %vm4265 = vcmp.gt.f32.partialorder %v4233, 0.0
      %vm4266 = vcmp.gt.f32.partialorder %v4234, 0.0
      %vm4267 = vcmp.gt.f32.partialorder %v4235, 0.0
      %vm4268 = vcmp.gt.f32.partialorder %v4236, 0.0
      %vm4269 = vcmp.gt.f32.partialorder %v4237, 0.0
      %vm4270 = vcmp.gt.f32.partialorder %v4238, 0.0
      %vm4271 = vcmp.gt.f32.partialorder %v4239, 0.0
      %vm4272 = vcmp.gt.f32.partialorder %v4240, 0.0
      %vm4273 = vcmp.gt.f32.partialorder %v4241, 0.0
      %vm4274 = vcmp.gt.f32.partialorder %v4242, 0.0
      %vm4275 = vcmp.gt.f32.partialorder %v4243, 0.0
      %vm4276 = vcmp.gt.f32.partialorder %v4244, 0.0
      %vm4277 = vcmp.gt.f32.partialorder %v4245, 0.0
      %vm4278 = vcmp.gt.f32.partialorder %v4246, 0.0
      %vm4279 = vcmp.gt.f32.partialorder %v4247, 0.0
      %vm4280 = vcmp.gt.f32.partialorder %v4248, 0.0
      %v4281 = vmul.f32 %v4217, 0.2
      %v4282 = vmul.f32 %v4218, 0.2
      %v4283 = vmul.f32 %v4219, 0.2
      %v4284 = vmul.f32 %v4220, 0.2
      %v4285 = vmul.f32 %v4221, 0.2
      %v4286 = vmul.f32 %v4222, 0.2
      %v4287 = vmul.f32 %v4223, 0.2
      %v4288 = vmul.f32 %v4224, 0.2
      %v4289 = vmul.f32 %v4225, 0.2
      %v4290 = vmul.f32 %v4226, 0.2
      %v4291 = vmul.f32 %v4227, 0.2
      %v4292 = vmul.f32 %v4228, 0.2
      %v4293 = vmul.f32 %v4229, 0.2
      %v4294 = vmul.f32 %v4230, 0.2
      %v4295 = vmul.f32 %v4231, 0.2
      %v4296 = vmul.f32 %v4232, 0.2
      %v4297 = vmul.f32 %v4233, 0.2
      %v4298 = vmul.f32 %v4234, 0.2
      %v4299 = vmul.f32 %v4235, 0.2
      %v4300 = vmul.f32 %v4236, 0.2
      %v4301 = vmul.f32 %v4237, 0.2
      %v4302 = vmul.f32 %v4238, 0.2
      %v4303 = vmul.f32 %v4239, 0.2
      %v4304 = vmul.f32 %v4240, 0.2
      %v4305 = vmul.f32 %v4241, 0.2
      %v4306 = vmul.f32 %v4242, 0.2
      %v4307 = vmul.f32 %v4243, 0.2
      %v4308 = vmul.f32 %v4244, 0.2
      %v4309 = vmul.f32 %v4245, 0.2
      %v4310 = vmul.f32 %v4246, 0.2
      %v4311 = vmul.f32 %v4247, 0.2
      %v4312 = vmul.f32 %v4248, 0.2
      %v4313 = vsel %vm4249, %v4217, %v4281
      %v4314 = vsel %vm4250, %v4218, %v4282
      %v4315 = vsel %vm4251, %v4219, %v4283
      %v4316 = vsel %vm4252, %v4220, %v4284
      %v4317 = vsel %vm4253, %v4221, %v4285
      %v4318 = vsel %vm4254, %v4222, %v4286
      %v4319 = vsel %vm4255, %v4223, %v4287
      %v4320 = vsel %vm4256, %v4224, %v4288
      %v4321 = vsel %vm4257, %v4225, %v4289
      %v4322 = vsel %vm4258, %v4226, %v4290
      %v4323 = vsel %vm4259, %v4227, %v4291
      %v4324 = vsel %vm4260, %v4228, %v4292
      %v4325 = vsel %vm4261, %v4229, %v4293
      %v4326 = vsel %vm4262, %v4230, %v4294
      %v4327 = vsel %vm4263, %v4231, %v4295
      %v4328 = vsel %vm4264, %v4232, %v4296
      %v4329 = vsel %vm4265, %v4233, %v4297
      %v4330 = vsel %vm4266, %v4234, %v4298
      %v4331 = vsel %vm4267, %v4235, %v4299
      %v4332 = vsel %vm4268, %v4236, %v4300
      %v4333 = vsel %vm4269, %v4237, %v4301
      %v4334 = vsel %vm4270, %v4238, %v4302
      %v4335 = vsel %vm4271, %v4239, %v4303
      %v4336 = vsel %vm4272, %v4240, %v4304
      %v4337 = vsel %vm4273, %v4241, %v4305
      %v4338 = vsel %vm4274, %v4242, %v4306
      %v4339 = vsel %vm4275, %v4243, %v4307
      %v4340 = vsel %vm4276, %v4244, %v4308
      %v4341 = vsel %vm4277, %v4245, %v4309
      %v4342 = vsel %vm4278, %v4246, %v4310
      %v4343 = vsel %vm4279, %v4247, %v4311
      %v4344 = vsel %vm4280, %v4248, %v4312
      %v4345 = vsel %vm878, %v4313, -inf
      %v4346 = vsel %vm878, %v4314, -inf
      %v4347 = vsel %vm878, %v4315, -inf
      %v4348 = vsel %vm878, %v4316, -inf
      %v4349 = vsel %vm878, %v4317, -inf
      %v4350 = vmax.f32 %v4345, %v4349
      %v4351 = vsel %vm878, %v4318, -inf
      %v4352 = vmax.f32 %v4346, %v4351
      %v4353 = vsel %vm878, %v4319, -inf
      %v4354 = vmax.f32 %v4347, %v4353
      %v4355 = vsel %vm878, %v4320, -inf
      %v4356 = vmax.f32 %v4348, %v4355
      %v4357 = vsel %vm878, %v4321, -inf
      %v4358 = vmax.f32 %v4350, %v4357
      %v4359 = vsel %vm878, %v4322, -inf
      %v4360 = vmax.f32 %v4352, %v4359
      %v4361 = vsel %vm878, %v4323, -inf
      %v4362 = vmax.f32 %v4354, %v4361
      %v4363 = vsel %vm878, %v4324, -inf
      %v4364 = vmax.f32 %v4356, %v4363
      %v4365 = vsel %vm878, %v4325, -inf
      %v4366 = vmax.f32 %v4358, %v4365
      %v4367 = vsel %vm878, %v4326, -inf
      %v4368 = vmax.f32 %v4360, %v4367
      %v4369 = vsel %vm878, %v4327, -inf
      %v4370 = vmax.f32 %v4362, %v4369
      %v4371 = vsel %vm878, %v4328, -inf
      %v4372 = vmax.f32 %v4364, %v4371
      %v4373 = vsel %vm878, %v4329, -inf
      %v4374 = vmax.f32 %v4366, %v4373
      %v4375 = vsel %vm878, %v4330, -inf
      %v4376 = vmax.f32 %v4368, %v4375
      %v4377 = vsel %vm878, %v4331, -inf
      %v4378 = vmax.f32 %v4370, %v4377
      %v4379 = vsel %vm878, %v4332, -inf
      %v4380 = vmax.f32 %v4372, %v4379
      %v4381 = vsel %vm878, %v4333, -inf
      %v4382 = vmax.f32 %v4374, %v4381
      %v4383 = vsel %vm878, %v4334, -inf
      %v4384 = vmax.f32 %v4376, %v4383
      %v4385 = vsel %vm878, %v4335, -inf
      %v4386 = vmax.f32 %v4378, %v4385
      %v4387 = vsel %vm878, %v4336, -inf
      %v4388 = vmax.f32 %v4380, %v4387
      %v4389 = vsel %vm878, %v4337, -inf
      %v4390 = vmax.f32 %v4382, %v4389
      %v4391 = vsel %vm878, %v4338, -inf
      %v4392 = vmax.f32 %v4384, %v4391
      %v4393 = vsel %vm878, %v4339, -inf
      %v4394 = vmax.f32 %v4386, %v4393
      %v4395 = vsel %vm878, %v4340, -inf
      %v4396 = vmax.f32 %v4388, %v4395
      %v4397 = vsel %vm878, %v4341, -inf
      %v4398 = vmax.f32 %v4390, %v4397
      %v4399 = vsel %vm878, %v4342, -inf
      %v4400 = vmax.f32 %v4392, %v4399
      %v4401 = vsel %vm878, %v4343, -inf
      %v4402 = vmax.f32 %v4394, %v4401
      %v4403 = vsel %vm878, %v4344, -inf
      %v4404 = vmax.f32 %v4396, %v4403
      %v4405 = vmax.f32 %v4398, %v4400
      %v4406 = vmax.f32 %v4402, %v4404
      %v4407 = vmax.f32 %v4405, %v4406
      %v4408 = vrot.slane %v4407, 4
      %v4409 = vmax.f32 %v4407, %v4408
      %v4410 = vrot.slane %v4409, 2
      %v4411 = vmax.f32 %v4409, %v4410
      %v4412 = vrot.slane %v4411, 1
      %v4413 = vmax.f32 %v4411, %v4412
      %v4414 = vsub.f32 %v4313, %v4413
      %v4415 = vsub.f32 %v4314, %v4413
      %v4416 = vsub.f32 %v4315, %v4413
      %v4417 = vsub.f32 %v4316, %v4413
      %v4418 = vsub.f32 %v4317, %v4413
      %v4419 = vsub.f32 %v4318, %v4413
      %v4420 = vsub.f32 %v4319, %v4413
      %v4421 = vsub.f32 %v4320, %v4413
      %v4422 = vsub.f32 %v4321, %v4413
      %v4423 = vsub.f32 %v4322, %v4413
      %v4424 = vsub.f32 %v4323, %v4413
      %v4425 = vsub.f32 %v4324, %v4413
      %v4426 = vsub.f32 %v4325, %v4413
      %v4427 = vsub.f32 %v4326, %v4413
      %v4428 = vsub.f32 %v4327, %v4413
      %v4429 = vsub.f32 %v4328, %v4413
      %v4430 = vsub.f32 %v4329, %v4413
      %v4431 = vsub.f32 %v4330, %v4413
      %v4432 = vsub.f32 %v4331, %v4413
      %v4433 = vsub.f32 %v4332, %v4413
      %v4434 = vsub.f32 %v4333, %v4413
      %v4435 = vsub.f32 %v4334, %v4413
      %v4436 = vsub.f32 %v4335, %v4413
      %v4437 = vsub.f32 %v4336, %v4413
      %v4438 = vsub.f32 %v4337, %v4413
      %v4439 = vsub.f32 %v4338, %v4413
      %v4440 = vsub.f32 %v4339, %v4413
      %v4441 = vsub.f32 %v4340, %v4413
      %v4442 = vsub.f32 %v4341, %v4413
      %v4443 = vsub.f32 %v4342, %v4413
      %v4444 = vsub.f32 %v4343, %v4413
      %v4445 = vsub.f32 %v4344, %v4413
      %v4446 = vmul.f32 %v4414, 1.442695
      %v4447 = vpow.pop %v4446
      %v4448 = vmul.f32 %v4415, 1.442695
      %v4449 = vpow.pop %v4448
      %v4450 = vmul.f32 %v4416, 1.442695
      %v4451 = vpow.pop %v4450
      %v4452 = vmul.f32 %v4417, 1.442695
      %v4453 = vpow.pop %v4452
      %v4454 = vmul.f32 %v4418, 1.442695
      %v4455 = vpow.pop %v4454
      %v4456 = vmul.f32 %v4419, 1.442695
      %v4457 = vpow.pop %v4456
      %v4458 = vmul.f32 %v4420, 1.442695
      %v4459 = vpow.pop %v4458
      %v4460 = vmul.f32 %v4421, 1.442695
      %v4461 = vpow.pop %v4460
      %v4462 = vmul.f32 %v4422, 1.442695
      %v4463 = vpow.pop %v4462
      %v4464 = vmul.f32 %v4423, 1.442695
      %v4465 = vpow.pop %v4464
      %v4466 = vmul.f32 %v4424, 1.442695
      %v4467 = vpow.pop %v4466
      %v4468 = vmul.f32 %v4425, 1.442695
      %v4469 = vpow.pop %v4468
      %v4470 = vmul.f32 %v4426, 1.442695
      %v4471 = vpow.pop %v4470
      %v4472 = vmul.f32 %v4427, 1.442695
      %v4473 = vpow.pop %v4472
      %v4474 = vmul.f32 %v4428, 1.442695
      %v4475 = vpow.pop %v4474
      %v4476 = vmul.f32 %v4429, 1.442695
      %v4477 = vpow.pop %v4476
      %v4478 = vmul.f32 %v4430, 1.442695
      %v4479 = vpow.pop %v4478
      %v4480 = vmul.f32 %v4431, 1.442695
      %v4481 = vpow.pop %v4480
      %v4482 = vmul.f32 %v4432, 1.442695
      %v4483 = vpow.pop %v4482
      %v4484 = vmul.f32 %v4433, 1.442695
      %v4485 = vpow.pop %v4484
      %v4486 = vmul.f32 %v4434, 1.442695
      %v4487 = vpow.pop %v4486
      %v4488 = vmul.f32 %v4435, 1.442695
      %v4489 = vpow.pop %v4488
      %v4490 = vmul.f32 %v4436, 1.442695
      %v4491 = vpow.pop %v4490
      %v4492 = vmul.f32 %v4437, 1.442695
      %v4493 = vpow.pop %v4492
      %v4494 = vmul.f32 %v4438, 1.442695
      %v4495 = vpow.pop %v4494
      %v4496 = vmul.f32 %v4439, 1.442695
      %v4497 = vpow.pop %v4496
      %v4498 = vmul.f32 %v4440, 1.442695
      %v4499 = vpow.pop %v4498
      %v4500 = vmul.f32 %v4441, 1.442695
      %v4501 = vpow.pop %v4500
      %v4502 = vmul.f32 %v4442, 1.442695
      %v4503 = vpow.pop %v4502
      %v4504 = vmul.f32 %v4443, 1.442695
      %v4505 = vpow.pop %v4504
      %v4506 = vmul.f32 %v4444, 1.442695
      %v4507 = vpow.pop %v4506
      %v4508 = vmul.f32 %v4445, 1.442695
      %v4509 = vpow.pop %v4508
      %v4510 = vpack.c.bf16 %v4449, %v4447
      %v4511 = vpack.c.bf16 %v4453, %v4451
      %v4512 = vpack.c.bf16 %v4457, %v4455
      %v4513 = vpack.c.bf16 %v4461, %v4459
      %v4514 = vpack.c.bf16 %v4465, %v4463
      %v4515 = vpack.c.bf16 %v4469, %v4467
      %v4516 = vpack.c.bf16 %v4473, %v4471
      %v4517 = vpack.c.bf16 %v4477, %v4475
      %v4518 = vpack.c.bf16 %v4481, %v4479
      %v4519 = vpack.c.bf16 %v4485, %v4483
      %v4520 = vpack.c.bf16 %v4489, %v4487
      %v4521 = vpack.c.bf16 %v4493, %v4491
      %v4522 = vpack.c.bf16 %v4497, %v4495
      %v4523 = vpack.c.bf16 %v4501, %v4499
      %v4524 = vpack.c.bf16 %v4505, %v4503
      %v4525 = vpack.c.bf16 %v4509, %v4507
      %4526 = vmatprep.subr.bf16.mxu0 0
      %4527 = vmatpush1.bf16.msra.mxu0 %v4510
      %4528 = vmatprep.subr.bf16.mxu0 0
      %4529 = vmatpush1.bf16.msra.mxu0 %v4511
      %4530 = vmatprep.subr.bf16.mxu0 0
      %4531 = vmatpush1.bf16.msra.mxu0 %v4512
      %4532 = vmatprep.subr.bf16.mxu0 0
      %4533 = vmatpush1.bf16.msra.mxu0 %v4513
      %4534 = vmatprep.subr.bf16.mxu0 0
      %4535 = vmatpush1.bf16.msra.mxu0 %v4514
      %4536 = vmatprep.subr.bf16.mxu0 0
      %4537 = vmatpush1.bf16.msra.mxu0 %v4515
      %4538 = vmatprep.subr.bf16.mxu0 0
      %4539 = vmatpush1.bf16.msra.mxu0 %v4516
      %4540 = vmatprep.subr.bf16.mxu0 0
      %4541 = vmatpush1.bf16.msra.mxu0 %v4517
      %4542 = vmatprep.subr.bf16.mxu0 0
      %4543 = vmatpush1.bf16.msra.mxu0 %v4518
      %4544 = vmatprep.subr.bf16.mxu0 0
      %4545 = vmatpush1.bf16.msra.mxu0 %v4519
      %4546 = vmatprep.subr.bf16.mxu0 0
      %4547 = vmatpush1.bf16.msra.mxu0 %v4520
      %4548 = vmatprep.subr.bf16.mxu0 0
      %4549 = vmatpush1.bf16.msra.mxu0 %v4521
      %4550 = vmatprep.subr.bf16.mxu0 0
      %4551 = vmatpush1.bf16.msra.mxu0 %v4522
      %4552 = vmatprep.subr.bf16.mxu0 0
      %4553 = vmatpush1.bf16.msra.mxu0 %v4523
      %4554 = vmatprep.subr.bf16.mxu0 0
      %4555 = vmatpush1.bf16.msra.mxu0 %v4524
      %4556 = vmatprep.subr.bf16.mxu0 0
      %4557 = vmatpush1.bf16.msra.mxu0 %v4525
      %4558 = vmatprep.mubr.bf16.mxu0 %v2286
      %4559 = vmatmul.mubr.bf16.gmra.mrb[0].mxu0 %v2270
      %v4560 = vpop.f32.mrb[0].mxu0
      %v4561 = vadd.f32 0.0, %v4560
      %v4562 = vpop.f32.mrb[0].mxu0
      %v4563 = vpop.f32.mrb[0].mxu0
      %v4564 = vadd.f32 0.0, %v4563
      %v4565 = vpop.f32.mrb[0].mxu0
      %4566 = vmatprep.mubr.bf16.mxu0 %v2287
      %4567 = vmatmul.mubr.bf16.gmra.mrb[0].mxu0 %v2271
      %v4568 = vpop.f32.mrb[0].mxu0
      %v4569 = vadd.f32 0.0, %v4568
      %v4570 = vpop.f32.mrb[0].mxu0
      %v4571 = vpop.f32.mrb[0].mxu0
      %v4572 = vadd.f32 0.0, %v4571
      %v4573 = vpop.f32.mrb[0].mxu0
      %4574 = vmatprep.mubr.bf16.mxu0 %v2288
      %4575 = vmatmul.mubr.bf16.gmra.mrb[0].mxu0 %v2272
      %v4576 = vpop.f32.mrb[0].mxu0
      %v4577 = vadd.f32 0.0, %v4576
      %v4578 = vpop.f32.mrb[0].mxu0
      %v4579 = vpop.f32.mrb[0].mxu0
      %v4580 = vadd.f32 0.0, %v4579
      %v4581 = vpop.f32.mrb[0].mxu0
      %4582 = vmatprep.mubr.bf16.mxu0 %v2289
      %4583 = vmatmul.mubr.bf16.gmra.mrb[0].mxu0 %v2273
      %v4584 = vpop.f32.mrb[0].mxu0
      %v4585 = vadd.f32 0.0, %v4584
      %v4586 = vpop.f32.mrb[0].mxu0
      %v4587 = vpop.f32.mrb[0].mxu0
      %v4588 = vadd.f32 0.0, %v4587
      %v4589 = vpop.f32.mrb[0].mxu0
      %4590 = vmatprep.mubr.bf16.mxu0 %v2290
      %4591 = vmatmul.mubr.bf16.gmra.mrb[0].mxu0 %v2274
      %v4592 = vpop.f32.mrb[0].mxu0
      %v4593 = vadd.f32 0.0, %v4592
      %v4594 = vpop.f32.mrb[0].mxu0
      %v4595 = vpop.f32.mrb[0].mxu0
      %v4596 = vadd.f32 0.0, %v4595
      %v4597 = vpop.f32.mrb[0].mxu0
      %4598 = vmatprep.mubr.bf16.mxu0 %v2291
      %4599 = vmatmul.mubr.bf16.gmra.mrb[0].mxu0 %v2275
      %v4600 = vpop.f32.mrb[0].mxu0
      %v4601 = vadd.f32 0.0, %v4600
      %v4602 = vpop.f32.mrb[0].mxu0
      %v4603 = vpop.f32.mrb[0].mxu0
      %v4604 = vadd.f32 0.0, %v4603
      %v4605 = vpop.f32.mrb[0].mxu0
      %4606 = vmatprep.mubr.bf16.mxu0 %v2292
      %4607 = vmatmul.mubr.bf16.gmra.mrb[0].mxu0 %v2276
      %v4608 = vpop.f32.mrb[0].mxu0
      %v4609 = vadd.f32 0.0, %v4608
      %v4610 = vpop.f32.mrb[0].mxu0
      %v4611 = vpop.f32.mrb[0].mxu0
      %v4612 = vadd.f32 0.0, %v4611
      %v4613 = vpop.f32.mrb[0].mxu0
      %4614 = vmatprep.mubr.bf16.mxu0 %v2293
      %4615 = vmatmul.mubr.bf16.gmra.mrb[0].mxu0 %v2277
      %v4616 = vpop.f32.mrb[0].mxu0
      %v4617 = vadd.f32 0.0, %v4616
      %v4618 = vpop.f32.mrb[0].mxu0
      %v4619 = vpop.f32.mrb[0].mxu0
      %v4620 = vadd.f32 0.0, %v4619
      %v4621 = vpop.f32.mrb[0].mxu0
      %4622 = vdwg.mxu0
      %v4623 = vpack.c.bf16 %v4564, %v4561
      %v4624 = vpack.c.bf16 %v4572, %v4569
      %v4625 = vpack.c.bf16 %v4580, %v4577
      %v4626 = vpack.c.bf16 %v4588, %v4585
      %v4627 = vpack.c.bf16 %v4596, %v4593
      %v4628 = vpack.c.bf16 %v4604, %v4601
      %v4629 = vpack.c.bf16 %v4612, %v4609
      %v4630 = vpack.c.bf16 %v4620, %v4617
      %4631 = vmatprep.subr.bf16.mxu0 0
      %4632 = vmatpush1.bf16.msra.mxu0 %v4623
      %4633 = vmatprep.subr.bf16.mxu0 0
      %4634 = vmatpush1.bf16.msra.mxu0 %v4624
      %4635 = vmatprep.subr.bf16.mxu0 0
      %4636 = vmatpush1.bf16.msra.mxu0 %v4625
      %4637 = vmatprep.subr.bf16.mxu0 0
      %4638 = vmatpush1.bf16.msra.mxu0 %v4626
      %4639 = vmatprep.subr.bf16.mxu0 0
      %4640 = vmatpush1.bf16.msra.mxu0 %v4627
      %4641 = vmatprep.subr.bf16.mxu0 0
      %4642 = vmatpush1.bf16.msra.mxu0 %v4628
      %4643 = vmatprep.subr.bf16.mxu0 0
      %4644 = vmatpush1.bf16.msra.mxu0 %v4629
      %4645 = vmatprep.subr.bf16.mxu0 0
      %4646 = vmatpush1.bf16.msra.mxu0 %v4630
      %4647 = vmatprep.subr.bf16.mxu0 0
      %4648 = vmatpush1.bf16.msra.mxu0 0
      %4649 = vmatprep.subr.bf16.mxu0 0
      %4650 = vmatpush1.bf16.msra.mxu0 0
      %4651 = vmatprep.subr.bf16.mxu0 0
      %4652 = vmatpush1.bf16.msra.mxu0 0
      %4653 = vmatprep.subr.bf16.mxu0 0
      %4654 = vmatpush1.bf16.msra.mxu0 0
      %4655 = vmatprep.subr.bf16.mxu0 0
      %4656 = vmatpush1.bf16.msra.mxu0 0
      %4657 = vmatprep.subr.bf16.mxu0 0
      %4658 = vmatpush1.bf16.msra.mxu0 0
      %4659 = vmatprep.subr.bf16.mxu0 0
      %4660 = vmatpush1.bf16.msra.mxu0 0
      %4661 = vmatprep.subr.bf16.mxu0 0
      %4662 = vmatpush1.bf16.msra.mxu0 0
      %4663 = vmatprep.mubr.bf16.mxu0 0
      %4664 = vmatmul.mubr.bf16.gmra.mrb[0].mxu0 %v1503
      %v4665 = vpop.f32.mrb[0].mxu0
      %v4666 = vadd.f32 1e-16, %v4665
      %v4667 = vpop.f32.mrb[0].mxu0
      %v4668 = vpop.f32.mrb[0].mxu0
      %v4669 = vadd.f32 1e-16, %v4668
      %v4670 = vpop.f32.mrb[0].mxu0
      %4671 = vmatprep.mubr.bf16.mxu0 0
      %4672 = vmatmul.mubr.bf16.gmra.mrb[0].mxu0 %v1504
      %v4673 = vpop.f32.mrb[0].mxu0
      %v4674 = vadd.f32 1e-16, %v4673
      %v4675 = vpop.f32.mrb[0].mxu0
      %v4676 = vpop.f32.mrb[0].mxu0
      %v4677 = vadd.f32 1e-16, %v4676
      %v4678 = vpop.f32.mrb[0].mxu0
      %4679 = vmatprep.mubr.bf16.mxu0 0
      %4680 = vmatmul.mubr.bf16.gmra.mrb[0].mxu0 %v1505
      %v4681 = vpop.f32.mrb[0].mxu0
      %v4682 = vadd.f32 1e-16, %v4681
      %v4683 = vpop.f32.mrb[0].mxu0
      %v4684 = vpop.f32.mrb[0].mxu0
      %v4685 = vadd.f32 1e-16, %v4684
      %v4686 = vpop.f32.mrb[0].mxu0
      %4687 = vmatprep.mubr.bf16.mxu0 0
      %4688 = vmatmul.mubr.bf16.gmra.mrb[0].mxu0 %v1506
      %v4689 = vpop.f32.mrb[0].mxu0
      %v4690 = vadd.f32 1e-16, %v4689
      %v4691 = vpop.f32.mrb[0].mxu0
      %v4692 = vpop.f32.mrb[0].mxu0
      %v4693 = vadd.f32 1e-16, %v4692
      %v4694 = vpop.f32.mrb[0].mxu0
      %4695 = vmatprep.mubr.bf16.mxu0 0
      %4696 = vmatmul.mubr.bf16.gmra.mrb[0].mxu0 %v1507
      %v4697 = vpop.f32.mrb[0].mxu0
      %v4698 = vadd.f32 1e-16, %v4697
      %v4699 = vpop.f32.mrb[0].mxu0
      %v4700 = vpop.f32.mrb[0].mxu0
      %v4701 = vadd.f32 1e-16, %v4700
      %v4702 = vpop.f32.mrb[0].mxu0
      %4703 = vmatprep.mubr.bf16.mxu0 0
      %4704 = vmatmul.mubr.bf16.gmra.mrb[0].mxu0 %v1508
      %v4705 = vpop.f32.mrb[0].mxu0
      %v4706 = vadd.f32 1e-16, %v4705
      %v4707 = vpop.f32.mrb[0].mxu0
      %v4708 = vpop.f32.mrb[0].mxu0
      %v4709 = vadd.f32 1e-16, %v4708
      %v4710 = vpop.f32.mrb[0].mxu0
      %4711 = vmatprep.mubr.bf16.mxu0 0
      %4712 = vmatmul.mubr.bf16.gmra.mrb[0].mxu0 %v1509
      %v4713 = vpop.f32.mrb[0].mxu0
      %v4714 = vadd.f32 1e-16, %v4713
      %v4715 = vpop.f32.mrb[0].mxu0
      %v4716 = vpop.f32.mrb[0].mxu0
      %v4717 = vadd.f32 1e-16, %v4716
      %v4718 = vpop.f32.mrb[0].mxu0
      %4719 = vmatprep.mubr.bf16.mxu0 0
      %4720 = vmatmul.mubr.bf16.gmra.mrb[0].mxu0 %v1510
      %v4721 = vpop.f32.mrb[0].mxu0
      %v4722 = vadd.f32 1e-16, %v4721
      %v4723 = vpop.f32.mrb[0].mxu0
      %v4724 = vpop.f32.mrb[0].mxu0
      %v4725 = vadd.f32 1e-16, %v4724
      %v4726 = vpop.f32.mrb[0].mxu0
      %4727 = vmatprep.mubr.bf16.mxu0 0
      %4728 = vmatmul.mubr.bf16.gmra.mrb[0].mxu0 %v1511
      %v4729 = vpop.f32.mrb[0].mxu0
      %v4730 = vadd.f32 1e-16, %v4729
      %v4731 = vpop.f32.mrb[0].mxu0
      %v4732 = vpop.f32.mrb[0].mxu0
      %v4733 = vadd.f32 1e-16, %v4732
      %v4734 = vpop.f32.mrb[0].mxu0
      %4735 = vmatprep.mubr.bf16.mxu0 0
      %4736 = vmatmul.mubr.bf16.gmra.mrb[0].mxu0 %v1512
      %v4737 = vpop.f32.mrb[0].mxu0
      %v4738 = vadd.f32 1e-16, %v4737
      %v4739 = vpop.f32.mrb[0].mxu0
      %v4740 = vpop.f32.mrb[0].mxu0
      %v4741 = vadd.f32 1e-16, %v4740
      %v4742 = vpop.f32.mrb[0].mxu0
      %4743 = vmatprep.mubr.bf16.mxu0 0
      %4744 = vmatmul.mubr.bf16.gmra.mrb[0].mxu0 %v1513
      %v4745 = vpop.f32.mrb[0].mxu0
      %v4746 = vadd.f32 1e-16, %v4745
      %v4747 = vpop.f32.mrb[0].mxu0
      %v4748 = vpop.f32.mrb[0].mxu0
      %v4749 = vadd.f32 1e-16, %v4748
      %v4750 = vpop.f32.mrb[0].mxu0
      %4751 = vmatprep.mubr.bf16.mxu0 0
      %4752 = vmatmul.mubr.bf16.gmra.mrb[0].mxu0 %v1514
      %v4753 = vpop.f32.mrb[0].mxu0
      %v4754 = vadd.f32 1e-16, %v4753
      %v4755 = vpop.f32.mrb[0].mxu0
      %v4756 = vpop.f32.mrb[0].mxu0
      %v4757 = vadd.f32 1e-16, %v4756
      %v4758 = vpop.f32.mrb[0].mxu0
      %4759 = vmatprep.mubr.bf16.mxu0 0
      %4760 = vmatmul.mubr.bf16.gmra.mrb[0].mxu0 %v1515
      %v4761 = vpop.f32.mrb[0].mxu0
      %v4762 = vadd.f32 1e-16, %v4761
      %v4763 = vpop.f32.mrb[0].mxu0
      %v4764 = vpop.f32.mrb[0].mxu0
      %v4765 = vadd.f32 1e-16, %v4764
      %v4766 = vpop.f32.mrb[0].mxu0
      %4767 = vmatprep.mubr.bf16.mxu0 0
      %4768 = vmatmul.mubr.bf16.gmra.mrb[0].mxu0 %v1516
      %v4769 = vpop.f32.mrb[0].mxu0
      %v4770 = vadd.f32 1e-16, %v4769
      %v4771 = vpop.f32.mrb[0].mxu0
      %v4772 = vpop.f32.mrb[0].mxu0
      %v4773 = vadd.f32 1e-16, %v4772
      %v4774 = vpop.f32.mrb[0].mxu0
      %4775 = vmatprep.mubr.bf16.mxu0 0
      %4776 = vmatmul.mubr.bf16.gmra.mrb[0].mxu0 %v1517
      %v4777 = vpop.f32.mrb[0].mxu0
      %v4778 = vadd.f32 1e-16, %v4777
      %v4779 = vpop.f32.mrb[0].mxu0
      %v4780 = vpop.f32.mrb[0].mxu0
      %v4781 = vadd.f32 1e-16, %v4780
      %v4782 = vpop.f32.mrb[0].mxu0
      %4783 = vmatprep.mubr.bf16.mxu0 0
      %4784 = vmatmul.mubr.bf16.gmra.mrb[0].mxu0 %v1518
      %v4785 = vpop.f32.mrb[0].mxu0
      %v4786 = vadd.f32 1e-16, %v4785
      %v4787 = vpop.f32.mrb[0].mxu0
      %v4788 = vpop.f32.mrb[0].mxu0
      %v4789 = vadd.f32 1e-16, %v4788
      %v4790 = vpop.f32.mrb[0].mxu0
      %4791 = vdwg.mxu0
      %v4792 = vrcp.pop %v4666
      %v4793 = vmul.f32 %v4447, %v4792
      %v4794 = vrcp.pop %v4669
      %v4795 = vmul.f32 %v4449, %v4794
      %v4796 = vrcp.pop %v4674
      %v4797 = vmul.f32 %v4451, %v4796
      %v4798 = vrcp.pop %v4677
      %v4799 = vmul.f32 %v4453, %v4798
      %v4800 = vrcp.pop %v4682
      %v4801 = vmul.f32 %v4455, %v4800
      %v4802 = vrcp.pop %v4685
      %v4803 = vmul.f32 %v4457, %v4802
      %v4804 = vrcp.pop %v4690
      %v4805 = vmul.f32 %v4459, %v4804
      %v4806 = vrcp.pop %v4693
      %v4807 = vmul.f32 %v4461, %v4806
      %v4808 = vrcp.pop %v4698
      %v4809 = vmul.f32 %v4463, %v4808
      %v4810 = vrcp.pop %v4701
      %v4811 = vmul.f32 %v4465, %v4810
      %v4812 = vrcp.pop %v4706
      %v4813 = vmul.f32 %v4467, %v4812
      %v4814 = vrcp.pop %v4709
      %v4815 = vmul.f32 %v4469, %v4814
      %v4816 = vrcp.pop %v4714
      %v4817 = vmul.f32 %v4471, %v4816
      %v4818 = vrcp.pop %v4717
      %v4819 = vmul.f32 %v4473, %v4818
      %v4820 = vrcp.pop %v4722
      %v4821 = vmul.f32 %v4475, %v4820
      %v4822 = vrcp.pop %v4725
      %v4823 = vmul.f32 %v4477, %v4822
      %v4824 = vrcp.pop %v4730
      %v4825 = vmul.f32 %v4479, %v4824
      %v4826 = vrcp.pop %v4733
      %v4827 = vmul.f32 %v4481, %v4826
      %v4828 = vrcp.pop %v4738
      %v4829 = vmul.f32 %v4483, %v4828
      %v4830 = vrcp.pop %v4741
      %v4831 = vmul.f32 %v4485, %v4830
      %v4832 = vrcp.pop %v4746
      %v4833 = vmul.f32 %v4487, %v4832
      %v4834 = vrcp.pop %v4749
      %v4835 = vmul.f32 %v4489, %v4834
      %v4836 = vrcp.pop %v4754
      %v4837 = vmul.f32 %v4491, %v4836
      %v4838 = vrcp.pop %v4757
      %v4839 = vmul.f32 %v4493, %v4838
      %v4840 = vrcp.pop %v4762
      %v4841 = vmul.f32 %v4495, %v4840
      %v4842 = vrcp.pop %v4765
      %v4843 = vmul.f32 %v4497, %v4842
      %v4844 = vrcp.pop %v4770
      %v4845 = vmul.f32 %v4499, %v4844
      %v4846 = vrcp.pop %v4773
      %v4847 = vmul.f32 %v4501, %v4846
      %v4848 = vrcp.pop %v4778
      %v4849 = vmul.f32 %v4503, %v4848
      %v4850 = vrcp.pop %v4781
      %v4851 = vmul.f32 %v4505, %v4850
      %v4852 = vrcp.pop %v4786
      %v4853 = vmul.f32 %v4507, %v4852
      %v4854 = vrcp.pop %v4789
      %v4855 = vmul.f32 %v4509, %v4854
      %v4856 = vpack.c.bf16 %v3429, %v3426
      %v4857 = vpack.c.bf16 %v3437, %v3434
      %v4858 = vpack.c.bf16 %v3445, %v3442
      %v4859 = vpack.c.bf16 %v3453, %v3450
      %v4860 = vpack.c.bf16 %v3461, %v3458
      %v4861 = vpack.c.bf16 %v3469, %v3466
      %v4862 = vpack.c.bf16 %v3477, %v3474
      %v4863 = vpack.c.bf16 %v3485, %v3482
      %4864 = vmatprep.subr.bf16.mxu0 0
      %4865 = vmatpush1.bf16.msra.mxu0 %v4856
      %4866 = vmatprep.subr.bf16.mxu0 0
      %4867 = vmatpush1.bf16.msra.mxu0 %v4857
      %4868 = vmatprep.subr.bf16.mxu0 0
      %4869 = vmatpush1.bf16.msra.mxu0 %v4858
      %4870 = vmatprep.subr.bf16.mxu0 0
      %4871 = vmatpush1.bf16.msra.mxu0 %v4859
      %4872 = vmatprep.subr.bf16.mxu0 0
      %4873 = vmatpush1.bf16.msra.mxu0 %v4860
      %4874 = vmatprep.subr.bf16.mxu0 0
      %4875 = vmatpush1.bf16.msra.mxu0 %v4861
      %4876 = vmatprep.subr.bf16.mxu0 0
      %4877 = vmatpush1.bf16.msra.mxu0 %v4862
      %4878 = vmatprep.subr.bf16.mxu0 0
      %4879 = vmatpush1.bf16.msra.mxu0 %v4863
      %4880 = vmatprep.subr.bf16.mxu0 0
      %4881 = vmatpush1.bf16.msra.mxu0 0
      %4882 = vmatprep.subr.bf16.mxu0 0
      %4883 = vmatpush1.bf16.msra.mxu0 0
      %4884 = vmatprep.subr.bf16.mxu0 0
      %4885 = vmatpush1.bf16.msra.mxu0 0
      %4886 = vmatprep.subr.bf16.mxu0 0
      %4887 = vmatpush1.bf16.msra.mxu0 0
      %4888 = vmatprep.subr.bf16.mxu0 0
      %4889 = vmatpush1.bf16.msra.mxu0 0
      %4890 = vmatprep.subr.bf16.mxu0 0
      %4891 = vmatpush1.bf16.msra.mxu0 0
      %4892 = vmatprep.subr.bf16.mxu0 0
      %4893 = vmatpush1.bf16.msra.mxu0 0
      %4894 = vmatprep.subr.bf16.mxu0 0
      %4895 = vmatpush1.bf16.msra.mxu0 0
      %4896 = vmatprep.mubr.bf16.mxu0 0
      %4897 = vmatmul.mubr.bf16.gmra.mrb[0].mxu0 %v1760
      %v4898 = vpop.f32.mrb[0].mxu0
      %v4899 = vadd.f32 0.0, %v4898
      %v4900 = vpop.f32.mrb[0].mxu0
      %v4901 = vpop.f32.mrb[0].mxu0
      %v4902 = vadd.f32 0.0, %v4901
      %v4903 = vpop.f32.mrb[0].mxu0
      %4904 = vmatprep.mubr.bf16.mxu0 0
      %4905 = vmatmul.mubr.bf16.gmra.mrb[0].mxu0 %v1761
      %v4906 = vpop.f32.mrb[0].mxu0
      %v4907 = vadd.f32 0.0, %v4906
      %v4908 = vpop.f32.mrb[0].mxu0
      %v4909 = vpop.f32.mrb[0].mxu0
      %v4910 = vadd.f32 0.0, %v4909
      %v4911 = vpop.f32.mrb[0].mxu0
      %4912 = vmatprep.mubr.bf16.mxu0 0
      %4913 = vmatmul.mubr.bf16.gmra.mrb[0].mxu0 %v1762
      %v4914 = vpop.f32.mrb[0].mxu0
      %v4915 = vadd.f32 0.0, %v4914
      %v4916 = vpop.f32.mrb[0].mxu0
      %v4917 = vpop.f32.mrb[0].mxu0
      %v4918 = vadd.f32 0.0, %v4917
      %v4919 = vpop.f32.mrb[0].mxu0
      %4920 = vmatprep.mubr.bf16.mxu0 0
      %4921 = vmatmul.mubr.bf16.gmra.mrb[0].mxu0 %v1763
      %v4922 = vpop.f32.mrb[0].mxu0
      %v4923 = vadd.f32 0.0, %v4922
      %v4924 = vpop.f32.mrb[0].mxu0
      %v4925 = vpop.f32.mrb[0].mxu0
      %v4926 = vadd.f32 0.0, %v4925
      %v4927 = vpop.f32.mrb[0].mxu0
      %4928 = vmatprep.mubr.bf16.mxu0 0
      %4929 = vmatmul.mubr.bf16.gmra.mrb[0].mxu0 %v1764
      %v4930 = vpop.f32.mrb[0].mxu0
      %v4931 = vadd.f32 0.0, %v4930
      %v4932 = vpop.f32.mrb[0].mxu0
      %v4933 = vpop.f32.mrb[0].mxu0
      %v4934 = vadd.f32 0.0, %v4933
      %v4935 = vpop.f32.mrb[0].mxu0
      %4936 = vmatprep.mubr.bf16.mxu0 0
      %4937 = vmatmul.mubr.bf16.gmra.mrb[0].mxu0 %v1765
      %v4938 = vpop.f32.mrb[0].mxu0
      %v4939 = vadd.f32 0.0, %v4938
      %v4940 = vpop.f32.mrb[0].mxu0
      %v4941 = vpop.f32.mrb[0].mxu0
      %v4942 = vadd.f32 0.0, %v4941
      %v4943 = vpop.f32.mrb[0].mxu0
      %4944 = vmatprep.mubr.bf16.mxu0 0
      %4945 = vmatmul.mubr.bf16.gmra.mrb[0].mxu0 %v1766
      %v4946 = vpop.f32.mrb[0].mxu0
      %v4947 = vadd.f32 0.0, %v4946
      %v4948 = vpop.f32.mrb[0].mxu0
      %v4949 = vpop.f32.mrb[0].mxu0
      %v4950 = vadd.f32 0.0, %v4949
      %v4951 = vpop.f32.mrb[0].mxu0
      %4952 = vmatprep.mubr.bf16.mxu0 0
      %4953 = vmatmul.mubr.bf16.gmra.mrb[0].mxu0 %v1767
      %v4954 = vpop.f32.mrb[0].mxu0
      %v4955 = vadd.f32 0.0, %v4954
      %v4956 = vpop.f32.mrb[0].mxu0
      %v4957 = vpop.f32.mrb[0].mxu0
      %v4958 = vadd.f32 0.0, %v4957
      %v4959 = vpop.f32.mrb[0].mxu0
      %4960 = vmatprep.mubr.bf16.mxu0 0
      %4961 = vmatmul.mubr.bf16.gmra.mrb[0].mxu0 %v1768
      %v4962 = vpop.f32.mrb[0].mxu0
      %v4963 = vadd.f32 0.0, %v4962
      %v4964 = vpop.f32.mrb[0].mxu0
      %v4965 = vpop.f32.mrb[0].mxu0
      %v4966 = vadd.f32 0.0, %v4965
      %v4967 = vpop.f32.mrb[0].mxu0
      %4968 = vmatprep.mubr.bf16.mxu0 0
      %4969 = vmatmul.mubr.bf16.gmra.mrb[0].mxu0 %v1769
      %v4970 = vpop.f32.mrb[0].mxu0
      %v4971 = vadd.f32 0.0, %v4970
      %v4972 = vpop.f32.mrb[0].mxu0
      %v4973 = vpop.f32.mrb[0].mxu0
      %v4974 = vadd.f32 0.0, %v4973
      %v4975 = vpop.f32.mrb[0].mxu0
      %4976 = vmatprep.mubr.bf16.mxu0 0
      %4977 = vmatmul.mubr.bf16.gmra.mrb[0].mxu0 %v1770
      %v4978 = vpop.f32.mrb[0].mxu0
      %v4979 = vadd.f32 0.0, %v4978
      %v4980 = vpop.f32.mrb[0].mxu0
      %v4981 = vpop.f32.mrb[0].mxu0
      %v4982 = vadd.f32 0.0, %v4981
      %v4983 = vpop.f32.mrb[0].mxu0
      %4984 = vmatprep.mubr.bf16.mxu0 0
      %4985 = vmatmul.mubr.bf16.gmra.mrb[0].mxu0 %v1771
      %v4986 = vpop.f32.mrb[0].mxu0
      %v4987 = vadd.f32 0.0, %v4986
      %v4988 = vpop.f32.mrb[0].mxu0
      %v4989 = vpop.f32.mrb[0].mxu0
      %v4990 = vadd.f32 0.0, %v4989
      %v4991 = vpop.f32.mrb[0].mxu0
      %4992 = vmatprep.mubr.bf16.mxu0 0
      %4993 = vmatmul.mubr.bf16.gmra.mrb[0].mxu0 %v1772
      %v4994 = vpop.f32.mrb[0].mxu0
      %v4995 = vadd.f32 0.0, %v4994
      %v4996 = vpop.f32.mrb[0].mxu0
      %v4997 = vpop.f32.mrb[0].mxu0
      %v4998 = vadd.f32 0.0, %v4997
      %v4999 = vpop.f32.mrb[0].mxu0
      %5000 = vmatprep.mubr.bf16.mxu0 0
      %5001 = vmatmul.mubr.bf16.gmra.mrb[0].mxu0 %v1773
      %v5002 = vpop.f32.mrb[0].mxu0
      %v5003 = vadd.f32 0.0, %v5002
      %v5004 = vpop.f32.mrb[0].mxu0
      %v5005 = vpop.f32.mrb[0].mxu0
      %v5006 = vadd.f32 0.0, %v5005
      %v5007 = vpop.f32.mrb[0].mxu0
      %5008 = vmatprep.mubr.bf16.mxu0 0
      %5009 = vmatmul.mubr.bf16.gmra.mrb[0].mxu0 %v1774
      %v5010 = vpop.f32.mrb[0].mxu0
      %v5011 = vadd.f32 0.0, %v5010
      %v5012 = vpop.f32.mrb[0].mxu0
      %v5013 = vpop.f32.mrb[0].mxu0
      %v5014 = vadd.f32 0.0, %v5013
      %v5015 = vpop.f32.mrb[0].mxu0
      %5016 = vmatprep.mubr.bf16.mxu0 0
      %5017 = vmatmul.mubr.bf16.gmra.mrb[0].mxu0 %v1775
      %v5018 = vpop.f32.mrb[0].mxu0
      %v5019 = vadd.f32 0.0, %v5018
      %v5020 = vpop.f32.mrb[0].mxu0
      %v5021 = vpop.f32.mrb[0].mxu0
      %v5022 = vadd.f32 0.0, %v5021
      %v5023 = vpop.f32.mrb[0].mxu0
      %5024 = vdwg.mxu0
      %v5025 = vpack.c.bf16 %v4795, %v4793
      %v5026 = vpack.c.bf16 %v4799, %v4797
      %v5027 = vpack.c.bf16 %v4803, %v4801
      %v5028 = vpack.c.bf16 %v4807, %v4805
      %v5029 = vpack.c.bf16 %v4811, %v4809
      %v5030 = vpack.c.bf16 %v4815, %v4813
      %v5031 = vpack.c.bf16 %v4819, %v4817
      %v5032 = vpack.c.bf16 %v4823, %v4821
      %v5033 = vpack.c.bf16 %v4827, %v4825
      %v5034 = vpack.c.bf16 %v4831, %v4829
      %v5035 = vpack.c.bf16 %v4835, %v4833
      %v5036 = vpack.c.bf16 %v4839, %v4837
      %v5037 = vpack.c.bf16 %v4843, %v4841
      %v5038 = vpack.c.bf16 %v4847, %v4845
      %v5039 = vpack.c.bf16 %v4851, %v4849
      %v5040 = vpack.c.bf16 %v4855, %v4853
      %v5042 = vsel %vm878, %v5025, 0
      %v5045 = vsel %vm878, %v5026, 0
      %v5048 = vsel %vm878, %v5027, 0
      %v5051 = vsel %vm878, %v5028, 0
      %v5054 = vsel %vm878, %v5029, 0
      %v5057 = vsel %vm878, %v5030, 0
      %v5060 = vsel %vm878, %v5031, 0
      %v5063 = vsel %vm878, %v5032, 0
      %v5066 = vsel %vm878, %v5033, 0
      %v5069 = vsel %vm878, %v5034, 0
      %v5072 = vsel %vm878, %v5035, 0
      %v5075 = vsel %vm878, %v5036, 0
      %v5078 = vsel %vm878, %v5037, 0
      %v5081 = vsel %vm878, %v5038, 0
      %v5084 = vsel %vm878, %v5039, 0
      %v5087 = vsel %vm878, %v5040, 0
      %5089 = vmatprep.subr.bf16.mxu0 0
      %5090 = vmatpush1.bf16.msra.mxu0 %v2858
      %5091 = vmatprep.subr.bf16.mxu0 0
      %5092 = vmatpush1.bf16.msra.mxu0 0
      %5093 = vmatprep.subr.bf16.mxu0 0
      %5094 = vmatpush1.bf16.msra.mxu0 0
      %5095 = vmatprep.subr.bf16.mxu0 0
      %5096 = vmatpush1.bf16.msra.mxu0 0
      %5097 = vmatprep.subr.bf16.mxu0 0
      %5098 = vmatpush1.bf16.msra.mxu0 0
      %5099 = vmatprep.subr.bf16.mxu0 0
      %5100 = vmatpush1.bf16.msra.mxu0 0
      %5101 = vmatprep.subr.bf16.mxu0 0
      %5102 = vmatpush1.bf16.msra.mxu0 0
      %5103 = vmatprep.subr.bf16.mxu0 0
      %5104 = vmatpush1.bf16.msra.mxu0 0
      %5105 = vmatprep.subr.bf16.mxu0 0
      %5106 = vmatpush1.bf16.msra.mxu0 0
      %5107 = vmatprep.subr.bf16.mxu0 0
      %5108 = vmatpush1.bf16.msra.mxu0 0
      %5109 = vmatprep.subr.bf16.mxu0 0
      %5110 = vmatpush1.bf16.msra.mxu0 0
      %5111 = vmatprep.subr.bf16.mxu0 0
      %5112 = vmatpush1.bf16.msra.mxu0 0
      %5113 = vmatprep.subr.bf16.mxu0 0
      %5114 = vmatpush1.bf16.msra.mxu0 0
      %5115 = vmatprep.subr.bf16.mxu0 0
      %5116 = vmatpush1.bf16.msra.mxu0 0
      %5117 = vmatprep.subr.bf16.mxu0 0
      %5118 = vmatpush1.bf16.msra.mxu0 0
      %5119 = vmatprep.subr.bf16.mxu0 0
      %5120 = vmatpush1.bf16.msra.mxu0 0
      %5121 = vmatprep.mubr.bf16.mxu0 0
      %5122 = vmatmul.mubr.bf16.gmra.mrb[0].mxu0 %v5042
      %v5123 = vpop.f32.mrb[0].mxu0
      %v5124 = vadd.f32 0.0, %v5123
      %v5125 = vpop.f32.mrb[0].mxu0
      %v5126 = vpop.f32.mrb[0].mxu0
      %v5127 = vadd.f32 0.0, %v5126
      %v5128 = vpop.f32.mrb[0].mxu0
      %5129 = vmatprep.mubr.bf16.mxu0 0
      %5130 = vmatmul.mubr.bf16.gmra.mrb[0].mxu0 %v5045
      %v5131 = vpop.f32.mrb[0].mxu0
      %v5132 = vadd.f32 0.0, %v5131
      %v5133 = vpop.f32.mrb[0].mxu0
      %v5134 = vpop.f32.mrb[0].mxu0
      %v5135 = vadd.f32 0.0, %v5134
      %v5136 = vpop.f32.mrb[0].mxu0
      %5137 = vmatprep.mubr.bf16.mxu0 0
      %5138 = vmatmul.mubr.bf16.gmra.mrb[0].mxu0 %v5048
      %v5139 = vpop.f32.mrb[0].mxu0
      %v5140 = vadd.f32 0.0, %v5139
      %v5141 = vpop.f32.mrb[0].mxu0
      %v5142 = vpop.f32.mrb[0].mxu0
      %v5143 = vadd.f32 0.0, %v5142
      %v5144 = vpop.f32.mrb[0].mxu0
      %5145 = vmatprep.mubr.bf16.mxu0 0
      %5146 = vmatmul.mubr.bf16.gmra.mrb[0].mxu0 %v5051
      %v5147 = vpop.f32.mrb[0].mxu0
      %v5148 = vadd.f32 0.0, %v5147
      %v5149 = vpop.f32.mrb[0].mxu0
      %v5150 = vpop.f32.mrb[0].mxu0
      %v5151 = vadd.f32 0.0, %v5150
      %v5152 = vpop.f32.mrb[0].mxu0
      %5153 = vmatprep.mubr.bf16.mxu0 0
      %5154 = vmatmul.mubr.bf16.gmra.mrb[0].mxu0 %v5054
      %v5155 = vpop.f32.mrb[0].mxu0
      %v5156 = vadd.f32 0.0, %v5155
      %v5157 = vpop.f32.mrb[0].mxu0
      %v5158 = vpop.f32.mrb[0].mxu0
      %v5159 = vadd.f32 0.0, %v5158
      %v5160 = vpop.f32.mrb[0].mxu0
      %5161 = vmatprep.mubr.bf16.mxu0 0
      %5162 = vmatmul.mubr.bf16.gmra.mrb[0].mxu0 %v5057
      %v5163 = vpop.f32.mrb[0].mxu0
      %v5164 = vadd.f32 0.0, %v5163
      %v5165 = vpop.f32.mrb[0].mxu0
      %v5166 = vpop.f32.mrb[0].mxu0
      %v5167 = vadd.f32 0.0, %v5166
      %v5168 = vpop.f32.mrb[0].mxu0
      %5169 = vmatprep.mubr.bf16.mxu0 0
      %5170 = vmatmul.mubr.bf16.gmra.mrb[0].mxu0 %v5060
      %v5171 = vpop.f32.mrb[0].mxu0
      %v5172 = vadd.f32 0.0, %v5171
      %v5173 = vpop.f32.mrb[0].mxu0
      %v5174 = vpop.f32.mrb[0].mxu0
      %v5175 = vadd.f32 0.0, %v5174
      %v5176 = vpop.f32.mrb[0].mxu0
      %5177 = vmatprep.mubr.bf16.mxu0 0
      %5178 = vmatmul.mubr.bf16.gmra.mrb[0].mxu0 %v5063
      %v5179 = vpop.f32.mrb[0].mxu0
      %v5180 = vadd.f32 0.0, %v5179
      %v5181 = vpop.f32.mrb[0].mxu0
      %v5182 = vpop.f32.mrb[0].mxu0
      %v5183 = vadd.f32 0.0, %v5182
      %v5184 = vpop.f32.mrb[0].mxu0
      %5185 = vmatprep.mubr.bf16.mxu0 0
      %5186 = vmatmul.mubr.bf16.gmra.mrb[0].mxu0 %v5066
      %v5187 = vpop.f32.mrb[0].mxu0
      %v5188 = vadd.f32 0.0, %v5187
      %v5189 = vpop.f32.mrb[0].mxu0
      %v5190 = vpop.f32.mrb[0].mxu0
      %v5191 = vadd.f32 0.0, %v5190
      %v5192 = vpop.f32.mrb[0].mxu0
      %5193 = vmatprep.mubr.bf16.mxu0 0
      %5194 = vmatmul.mubr.bf16.gmra.mrb[0].mxu0 %v5069
      %v5195 = vpop.f32.mrb[0].mxu0
      %v5196 = vadd.f32 0.0, %v5195
      %v5197 = vpop.f32.mrb[0].mxu0
      %v5198 = vpop.f32.mrb[0].mxu0
      %v5199 = vadd.f32 0.0, %v5198
      %v5200 = vpop.f32.mrb[0].mxu0
      %5201 = vmatprep.mubr.bf16.mxu0 0
      %5202 = vmatmul.mubr.bf16.gmra.mrb[0].mxu0 %v5072
      %v5203 = vpop.f32.mrb[0].mxu0
      %v5204 = vadd.f32 0.0, %v5203
      %v5205 = vpop.f32.mrb[0].mxu0
      %v5206 = vpop.f32.mrb[0].mxu0
      %v5207 = vadd.f32 0.0, %v5206
      %v5208 = vpop.f32.mrb[0].mxu0
      %5209 = vmatprep.mubr.bf16.mxu0 0
      %5210 = vmatmul.mubr.bf16.gmra.mrb[0].mxu0 %v5075
      %v5211 = vpop.f32.mrb[0].mxu0
      %v5212 = vadd.f32 0.0, %v5211
      %v5213 = vpop.f32.mrb[0].mxu0
      %v5214 = vpop.f32.mrb[0].mxu0
      %v5215 = vadd.f32 0.0, %v5214
      %v5216 = vpop.f32.mrb[0].mxu0
      %5217 = vmatprep.mubr.bf16.mxu0 0
      %5218 = vmatmul.mubr.bf16.gmra.mrb[0].mxu0 %v5078
      %v5219 = vpop.f32.mrb[0].mxu0
      %v5220 = vadd.f32 0.0, %v5219
      %v5221 = vpop.f32.mrb[0].mxu0
      %v5222 = vpop.f32.mrb[0].mxu0
      %v5223 = vadd.f32 0.0, %v5222
      %v5224 = vpop.f32.mrb[0].mxu0
      %5225 = vmatprep.mubr.bf16.mxu0 0
      %5226 = vmatmul.mubr.bf16.gmra.mrb[0].mxu0 %v5081
      %v5227 = vpop.f32.mrb[0].mxu0
      %v5228 = vadd.f32 0.0, %v5227
      %v5229 = vpop.f32.mrb[0].mxu0
      %v5230 = vpop.f32.mrb[0].mxu0
      %v5231 = vadd.f32 0.0, %v5230
      %v5232 = vpop.f32.mrb[0].mxu0
      %5233 = vmatprep.mubr.bf16.mxu0 0
      %5234 = vmatmul.mubr.bf16.gmra.mrb[0].mxu0 %v5084
      %v5235 = vpop.f32.mrb[0].mxu0
      %v5236 = vadd.f32 0.0, %v5235
      %v5237 = vpop.f32.mrb[0].mxu0
      %v5238 = vpop.f32.mrb[0].mxu0
      %v5239 = vadd.f32 0.0, %v5238
      %v5240 = vpop.f32.mrb[0].mxu0
      %5241 = vmatprep.mubr.bf16.mxu0 0
      %5242 = vmatmul.mubr.bf16.gmra.mrb[0].mxu0 %v5087
      %v5243 = vpop.f32.mrb[0].mxu0
      %v5244 = vadd.f32 0.0, %v5243
      %v5245 = vpop.f32.mrb[0].mxu0
      %v5246 = vpop.f32.mrb[0].mxu0
      %v5247 = vadd.f32 0.0, %v5246
      %v5248 = vpop.f32.mrb[0].mxu0
      %5249 = vdwg.mxu0
      %v5250 = vmul.f32 %v4899, %v5124
      %v5251 = vmul.f32 %v4902, %v5127
      %v5252 = vmul.f32 %v4907, %v5132
      %v5253 = vmul.f32 %v4910, %v5135
      %v5254 = vmul.f32 %v4915, %v5140
      %v5255 = vmul.f32 %v4918, %v5143
      %v5256 = vmul.f32 %v4923, %v5148
      %v5257 = vmul.f32 %v4926, %v5151
      %v5258 = vmul.f32 %v4931, %v5156
      %v5259 = vmul.f32 %v4934, %v5159
      %v5260 = vmul.f32 %v4939, %v5164
      %v5261 = vmul.f32 %v4942, %v5167
      %v5262 = vmul.f32 %v4947, %v5172
      %v5263 = vmul.f32 %v4950, %v5175
      %v5264 = vmul.f32 %v4955, %v5180
      %v5265 = vmul.f32 %v4958, %v5183
      %v5266 = vmul.f32 %v4963, %v5188
      %v5267 = vmul.f32 %v4966, %v5191
      %v5268 = vmul.f32 %v4971, %v5196
      %v5269 = vmul.f32 %v4974, %v5199
      %v5270 = vmul.f32 %v4979, %v5204
      %v5271 = vmul.f32 %v4982, %v5207
      %v5272 = vmul.f32 %v4987, %v5212
      %v5273 = vmul.f32 %v4990, %v5215
      %v5274 = vmul.f32 %v4995, %v5220
      %v5275 = vmul.f32 %v4998, %v5223
      %v5276 = vmul.f32 %v5003, %v5228
      %v5277 = vmul.f32 %v5006, %v5231
      %v5278 = vmul.f32 %v5011, %v5236
      %v5279 = vmul.f32 %v5014, %v5239
      %v5280 = vmul.f32 %v5019, %v5244
      %v5281 = vmul.f32 %v5022, %v5247
      %v5282 = vpack.c.bf16 %v5251, %v5250
      %v5283 = vpack.c.bf16 %v5253, %v5252
      %v5284 = vpack.c.bf16 %v5255, %v5254
      %v5285 = vpack.c.bf16 %v5257, %v5256
      %v5286 = vpack.c.bf16 %v5259, %v5258
      %v5287 = vpack.c.bf16 %v5261, %v5260
      %v5288 = vpack.c.bf16 %v5263, %v5262
      %v5289 = vpack.c.bf16 %v5265, %v5264
      %v5290 = vpack.c.bf16 %v5267, %v5266
      %v5291 = vpack.c.bf16 %v5269, %v5268
      %v5292 = vpack.c.bf16 %v5271, %v5270
      %v5293 = vpack.c.bf16 %v5273, %v5272
      %v5294 = vpack.c.bf16 %v5275, %v5274
      %v5295 = vpack.c.bf16 %v5277, %v5276
      %v5296 = vpack.c.bf16 %v5279, %v5278
      %v5297 = vpack.c.bf16 %v5281, %v5280
      %5298 = vmatprep.subr.bf16.mxu0 0
      %5299 = vmatpush1.bf16.msra.mxu0 %v5282
      %5300 = vmatprep.subr.bf16.mxu0 0
      %5301 = vmatpush1.bf16.msra.mxu0 %v5283
      %5302 = vmatprep.subr.bf16.mxu0 0
      %5303 = vmatpush1.bf16.msra.mxu0 %v5284
      %5304 = vmatprep.subr.bf16.mxu0 0
      %5305 = vmatpush1.bf16.msra.mxu0 %v5285
      %5306 = vmatprep.subr.bf16.mxu0 0
      %5307 = vmatpush1.bf16.msra.mxu0 %v5286
      %5308 = vmatprep.subr.bf16.mxu0 0
      %5309 = vmatpush1.bf16.msra.mxu0 %v5287
      %5310 = vmatprep.subr.bf16.mxu0 0
      %5311 = vmatpush1.bf16.msra.mxu0 %v5288
      %5312 = vmatprep.subr.bf16.mxu0 0
      %5313 = vmatpush1.bf16.msra.mxu0 %v5289
      %5314 = vmatprep.subr.bf16.mxu0 0
      %5315 = vmatpush1.bf16.msra.mxu0 %v5290
      %5316 = vmatprep.subr.bf16.mxu0 0
      %5317 = vmatpush1.bf16.msra.mxu0 %v5291
      %5318 = vmatprep.subr.bf16.mxu0 0
      %5319 = vmatpush1.bf16.msra.mxu0 %v5292
      %5320 = vmatprep.subr.bf16.mxu0 0
      %5321 = vmatpush1.bf16.msra.mxu0 %v5293
      %5322 = vmatprep.subr.bf16.mxu0 0
      %5323 = vmatpush1.bf16.msra.mxu0 %v5294
      %5324 = vmatprep.subr.bf16.mxu0 0
      %5325 = vmatpush1.bf16.msra.mxu0 %v5295
      %5326 = vmatprep.subr.bf16.mxu0 0
      %5327 = vmatpush1.bf16.msra.mxu0 %v5296
      %5328 = vmatprep.subr.bf16.mxu0 0
      %5329 = vmatpush1.bf16.msra.mxu0 %v5297
      %5330 = vmatprep.mubr.bf16.mxu0 %v2286
      %5331 = vmatmul.mubr.bf16.gmra.mrb[0].mxu0 %v2270
      %v5332 = vpop.f32.mrb[0].mxu0
      %v5333 = vadd.f32 0.0, %v5332
      %v5334 = vpop.f32.mrb[0].mxu0
      %v5335 = vpop.f32.mrb[0].mxu0
      %v5336 = vadd.f32 0.0, %v5335
      %v5337 = vpop.f32.mrb[0].mxu0
      %5338 = vmatprep.mubr.bf16.mxu0 %v2287
      %5339 = vmatmul.mubr.bf16.gmra.mrb[0].mxu0 %v2271
      %v5340 = vpop.f32.mrb[0].mxu0
      %v5341 = vadd.f32 0.0, %v5340
      %v5342 = vpop.f32.mrb[0].mxu0
      %v5343 = vpop.f32.mrb[0].mxu0
      %v5344 = vadd.f32 0.0, %v5343
      %v5345 = vpop.f32.mrb[0].mxu0
      %5346 = vmatprep.mubr.bf16.mxu0 %v2288
      %5347 = vmatmul.mubr.bf16.gmra.mrb[0].mxu0 %v2272
      %v5348 = vpop.f32.mrb[0].mxu0
      %v5349 = vadd.f32 0.0, %v5348
      %v5350 = vpop.f32.mrb[0].mxu0
      %v5351 = vpop.f32.mrb[0].mxu0
      %v5352 = vadd.f32 0.0, %v5351
      %v5353 = vpop.f32.mrb[0].mxu0
      %5354 = vmatprep.mubr.bf16.mxu0 %v2289
      %5355 = vmatmul.mubr.bf16.gmra.mrb[0].mxu0 %v2273
      %v5356 = vpop.f32.mrb[0].mxu0
      %v5357 = vadd.f32 0.0, %v5356
      %v5358 = vpop.f32.mrb[0].mxu0
      %v5359 = vpop.f32.mrb[0].mxu0
      %v5360 = vadd.f32 0.0, %v5359
      %v5361 = vpop.f32.mrb[0].mxu0
      %5362 = vmatprep.mubr.bf16.mxu0 %v2290
      %5363 = vmatmul.mubr.bf16.gmra.mrb[0].mxu0 %v2274
      %v5364 = vpop.f32.mrb[0].mxu0
      %v5365 = vadd.f32 0.0, %v5364
      %v5366 = vpop.f32.mrb[0].mxu0
      %v5367 = vpop.f32.mrb[0].mxu0
      %v5368 = vadd.f32 0.0, %v5367
      %v5369 = vpop.f32.mrb[0].mxu0
      %5370 = vmatprep.mubr.bf16.mxu0 %v2291
      %5371 = vmatmul.mubr.bf16.gmra.mrb[0].mxu0 %v2275
      %v5372 = vpop.f32.mrb[0].mxu0
      %v5373 = vadd.f32 0.0, %v5372
      %v5374 = vpop.f32.mrb[0].mxu0
      %v5375 = vpop.f32.mrb[0].mxu0
      %v5376 = vadd.f32 0.0, %v5375
      %v5377 = vpop.f32.mrb[0].mxu0
      %5378 = vmatprep.mubr.bf16.mxu0 %v2292
      %5379 = vmatmul.mubr.bf16.gmra.mrb[0].mxu0 %v2276
      %v5380 = vpop.f32.mrb[0].mxu0
      %v5381 = vadd.f32 0.0, %v5380
      %v5382 = vpop.f32.mrb[0].mxu0
      %v5383 = vpop.f32.mrb[0].mxu0
      %v5384 = vadd.f32 0.0, %v5383
      %v5385 = vpop.f32.mrb[0].mxu0
      %5386 = vmatprep.mubr.bf16.mxu0 %v2293
      %5387 = vmatmul.mubr.bf16.gmra.mrb[0].mxu0 %v2277
      %v5388 = vpop.f32.mrb[0].mxu0
      %v5389 = vadd.f32 0.0, %v5388
      %v5390 = vpop.f32.mrb[0].mxu0
      %v5391 = vpop.f32.mrb[0].mxu0
      %v5392 = vadd.f32 0.0, %v5391
      %v5393 = vpop.f32.mrb[0].mxu0
      %5394 = vdwg.mxu0
      %v5395 = vpack.c.bf16 %v5336, %v5333
      %v5396 = vpack.c.bf16 %v5344, %v5341
      %v5397 = vpack.c.bf16 %v5352, %v5349
      %v5398 = vpack.c.bf16 %v5360, %v5357
      %v5399 = vpack.c.bf16 %v5368, %v5365
      %v5400 = vpack.c.bf16 %v5376, %v5373
      %v5401 = vpack.c.bf16 %v5384, %v5381
      %v5402 = vpack.c.bf16 %v5392, %v5389
      %v5403 = vld [vmem:[%s16] sm:$0x1]
      %v5405 = vlaneseq
      %v5406 = vshrl.u32 %v5405, 7
      %v5407 = vsub.s32 0, %v5406
      %v5408 = vrot.slane %v5403, %v5407
      %5410 = vmatprep.subr.bf16.mxu0 0
      %5411 = vmatpush1.bf16.msra.mxu0 %v3213
      %5412 = vmatprep.subr.bf16.mxu0 0
      %5413 = vmatpush1.bf16.msra.mxu0 %v3214
      %5414 = vmatprep.subr.bf16.mxu0 0
      %5415 = vmatpush1.bf16.msra.mxu0 %v3215
      %5416 = vmatprep.subr.bf16.mxu0 0
      %5417 = vmatpush1.bf16.msra.mxu0 %v3216
      %5418 = vmatprep.subr.bf16.mxu0 0
      %5419 = vmatpush1.bf16.msra.mxu0 %v3217
      %5420 = vmatprep.subr.bf16.mxu0 0
      %5421 = vmatpush1.bf16.msra.mxu0 %v3218
      %5422 = vmatprep.subr.bf16.mxu0 0
      %5423 = vmatpush1.bf16.msra.mxu0 %v3219
      %5424 = vmatprep.subr.bf16.mxu0 0
      %5425 = vmatpush1.bf16.msra.mxu0 %v3220
      %5426 = vmatprep.subr.bf16.mxu0 0
      %5427 = vmatpush1.bf16.msra.mxu0 0
      %5428 = vmatprep.subr.bf16.mxu0 0
      %5429 = vmatpush1.bf16.msra.mxu0 0
      %5430 = vmatprep.subr.bf16.mxu0 0
      %5431 = vmatpush1.bf16.msra.mxu0 0
      %5432 = vmatprep.subr.bf16.mxu0 0
      %5433 = vmatpush1.bf16.msra.mxu0 0
      %5434 = vmatprep.subr.bf16.mxu0 0
      %5435 = vmatpush1.bf16.msra.mxu0 0
      %5436 = vmatprep.subr.bf16.mxu0 0
      %5437 = vmatpush1.bf16.msra.mxu0 0
      %5438 = vmatprep.subr.bf16.mxu0 0
      %5439 = vmatpush1.bf16.msra.mxu0 0
      %5440 = vmatprep.subr.bf16.mxu0 0
      %5441 = vmatpush1.bf16.msra.mxu0 0
      %5442 = vmatprep.mubr.bf16.mxu0 0
      %5443 = vmatmul.mubr.bf16.gmra.mrb[0].mxu0 %v5395
      %v5444 = vpop.f32.mrb[0].mxu0
      %v5445 = vadd.f32 %v5408, %v5444
      %v5446 = vpop.f32.mrb[0].mxu0
      %v5447 = vpop.f32.mrb[0].mxu0
      %v5448 = vadd.f32 %v5408, %v5447
      %v5449 = vpop.f32.mrb[0].mxu0
      %5450 = vmatprep.mubr.bf16.mxu0 0
      %5451 = vmatmul.mubr.bf16.gmra.mrb[0].mxu0 %v5396
      %v5452 = vpop.f32.mrb[0].mxu0
      %v5453 = vadd.f32 %v5408, %v5452
      %v5454 = vpop.f32.mrb[0].mxu0
      %v5455 = vpop.f32.mrb[0].mxu0
      %v5456 = vadd.f32 %v5408, %v5455
      %v5457 = vpop.f32.mrb[0].mxu0
      %5458 = vmatprep.mubr.bf16.mxu0 0
      %5459 = vmatmul.mubr.bf16.gmra.mrb[0].mxu0 %v5397
      %v5460 = vpop.f32.mrb[0].mxu0
      %v5461 = vadd.f32 %v5408, %v5460
      %v5462 = vpop.f32.mrb[0].mxu0
      %v5463 = vpop.f32.mrb[0].mxu0
      %v5464 = vadd.f32 %v5408, %v5463
      %v5465 = vpop.f32.mrb[0].mxu0
      %5466 = vmatprep.mubr.bf16.mxu0 0
      %5467 = vmatmul.mubr.bf16.gmra.mrb[0].mxu0 %v5398
      %v5468 = vpop.f32.mrb[0].mxu0
      %v5469 = vadd.f32 %v5408, %v5468
      %v5470 = vpop.f32.mrb[0].mxu0
      %v5471 = vpop.f32.mrb[0].mxu0
      %v5472 = vadd.f32 %v5408, %v5471
      %v5473 = vpop.f32.mrb[0].mxu0
      %5474 = vmatprep.mubr.bf16.mxu0 0
      %5475 = vmatmul.mubr.bf16.gmra.mrb[0].mxu0 %v5399
      %v5476 = vpop.f32.mrb[0].mxu0
      %v5477 = vadd.f32 %v5408, %v5476
      %v5478 = vpop.f32.mrb[0].mxu0
      %v5479 = vpop.f32.mrb[0].mxu0
      %v5480 = vadd.f32 %v5408, %v5479
      %v5481 = vpop.f32.mrb[0].mxu0
      %5482 = vmatprep.mubr.bf16.mxu0 0
      %5483 = vmatmul.mubr.bf16.gmra.mrb[0].mxu0 %v5400
      %v5484 = vpop.f32.mrb[0].mxu0
      %v5485 = vadd.f32 %v5408, %v5484
      %v5486 = vpop.f32.mrb[0].mxu0
      %v5487 = vpop.f32.mrb[0].mxu0
      %v5488 = vadd.f32 %v5408, %v5487
      %v5489 = vpop.f32.mrb[0].mxu0
      %5490 = vmatprep.mubr.bf16.mxu0 0
      %5491 = vmatmul.mubr.bf16.gmra.mrb[0].mxu0 %v5401
      %v5492 = vpop.f32.mrb[0].mxu0
      %v5493 = vadd.f32 %v5408, %v5492
      %v5494 = vpop.f32.mrb[0].mxu0
      %v5495 = vpop.f32.mrb[0].mxu0
      %v5496 = vadd.f32 %v5408, %v5495
      %v5497 = vpop.f32.mrb[0].mxu0
      %5498 = vmatprep.mubr.bf16.mxu0 0
      %5499 = vmatmul.mubr.bf16.gmra.mrb[0].mxu0 %v5402
      %v5500 = vpop.f32.mrb[0].mxu0
      %v5501 = vadd.f32 %v5408, %v5500
      %v5502 = vpop.f32.mrb[0].mxu0
      %v5503 = vpop.f32.mrb[0].mxu0
      %v5504 = vadd.f32 %v5408, %v5503
      %v5505 = vpop.f32.mrb[0].mxu0
      %5506 = vdwg.mxu0
      %v5507 = vmax.f32 %v5445, 0.0
      %v5508 = vmax.f32 %v5448, 0.0
      %v5509 = vmax.f32 %v5453, 0.0
      %v5510 = vmax.f32 %v5456, 0.0
      %v5511 = vmax.f32 %v5461, 0.0
      %v5512 = vmax.f32 %v5464, 0.0
      %v5513 = vmax.f32 %v5469, 0.0
      %v5514 = vmax.f32 %v5472, 0.0
      %v5515 = vmax.f32 %v5477, 0.0
      %v5516 = vmax.f32 %v5480, 0.0
      %v5517 = vmax.f32 %v5485, 0.0
      %v5518 = vmax.f32 %v5488, 0.0
      %v5519 = vmax.f32 %v5493, 0.0
      %v5520 = vmax.f32 %v5496, 0.0
      %v5521 = vmax.f32 %v5501, 0.0
      %v5522 = vmax.f32 %v5504, 0.0
      %v5523 = vld [vmem:[%s4] sm:$0xff]
      %5524 = vmatprep.subr.mxu0 0.0
      %5525 = vmatpush1.msra.mxu0 %v5507
      %5526 = vmatprep.subr.mxu0 0.0
      %5527 = vmatpush1.msra.mxu0 %v5508
      %5528 = vmatprep.subr.mxu0 0.0
      %5529 = vmatpush1.msra.mxu0 %v5509
      %5530 = vmatprep.subr.mxu0 0.0
      %5531 = vmatpush1.msra.mxu0 %v5510
      %5532 = vmatprep.subr.mxu0 0.0
      %5533 = vmatpush1.msra.mxu0 %v5511
      %5534 = vmatprep.subr.mxu0 0.0
      %5535 = vmatpush1.msra.mxu0 %v5512
      %5536 = vmatprep.subr.mxu0 0.0
      %5537 = vmatpush1.msra.mxu0 %v5513
      %5538 = vmatprep.subr.mxu0 0.0
      %5539 = vmatpush1.msra.mxu0 %v5514
      %5540 = vmatprep.subr.mxu0 0.0
      %5541 = vmatpush1.msra.mxu0 %v5515
      %5542 = vmatprep.subr.mxu0 0.0
      %5543 = vmatpush1.msra.mxu0 %v5516
      %5544 = vmatprep.subr.mxu0 0.0
      %5545 = vmatpush1.msra.mxu0 %v5517
      %5546 = vmatprep.subr.mxu0 0.0
      %5547 = vmatpush1.msra.mxu0 %v5518
      %5548 = vmatprep.subr.mxu0 0.0
      %5549 = vmatpush1.msra.mxu0 %v5519
      %5550 = vmatprep.subr.mxu0 0.0
      %5551 = vmatpush1.msra.mxu0 %v5520
      %5552 = vmatprep.subr.mxu0 0.0
      %5553 = vmatpush1.msra.mxu0 %v5521
      %5554 = vmatprep.subr.mxu0 0.0
      %5555 = vmatpush1.msra.mxu0 %v5522
      %5556 = vmatprep.subr.mxu0 0.0
      %5557 = vmatpush1.msra.mxu0 0.0
      %5558 = vmatprep.subr.mxu0 0.0
      %5559 = vmatpush1.msra.mxu0 0.0
      %5560 = vmatprep.subr.mxu0 0.0
      %5561 = vmatpush1.msra.mxu0 0.0
      %5562 = vmatprep.subr.mxu0 0.0
      %5563 = vmatpush1.msra.mxu0 0.0
      %5564 = vmatprep.subr.mxu0 0.0
      %5565 = vmatpush1.msra.mxu0 0.0
      %5566 = vmatprep.subr.mxu0 0.0
      %5567 = vmatpush1.msra.mxu0 0.0
      %5568 = vmatprep.subr.mxu0 0.0
      %5569 = vmatpush1.msra.mxu0 0.0
      %5570 = vmatprep.subr.mxu0 0.0
      %5571 = vmatpush1.msra.mxu0 0.0
      %5572 = vmatprep.subr.mxu0 0.0
      %5573 = vmatpush1.msra.mxu0 0.0
      %5574 = vmatprep.subr.mxu0 0.0
      %5575 = vmatpush1.msra.mxu0 0.0
      %5576 = vmatprep.subr.mxu0 0.0
      %5577 = vmatpush1.msra.mxu0 0.0
      %5578 = vmatprep.subr.mxu0 0.0
      %5579 = vmatpush1.msra.mxu0 0.0
      %5580 = vmatprep.subr.mxu0 0.0
      %5581 = vmatpush1.msra.mxu0 0.0
      %5582 = vmatprep.subr.mxu0 0.0
      %5583 = vmatpush1.msra.mxu0 0.0
      %5584 = vmatprep.subr.mxu0 0.0
      %5585 = vmatpush1.msra.mxu0 0.0
      %5586 = vmatprep.subr.mxu0 0.0
      %5587 = vmatpush1.msra.mxu0 0.0
      %5588 = vmatprep.mubr.f32.mxu0 0.0
      %5589 = vmatmul.mubr.f32.gmra.mrb[0].mxu0 %v5523
      %v5590 = vpop.f32.mrb[0].mxu0
      %v5591 = vadd.f32 0.0, %v5590
      %v5592 = vpop.f32.mrb[0].mxu0
      %5593 = vdwg.mxu0
      %v5594 = vld [vmem:[%s17] sm:$0xff]
      %v5595 = vld [vmem:[%s17 + $0x8] sm:$0xff]
      %v5596 = vld [vmem:[%s17 + $0x10] sm:$0xff]
      %v5597 = vld [vmem:[%s17 + $0x18] sm:$0xff]
      %v5598 = vld [vmem:[%s18] sm:$0x1]
      %v5600 = vlaneseq
      %v5601 = vshrl.u32 %v5600, 7
      %v5602 = vsub.s32 0, %v5601
      %v5603 = vrot.slane %v5598, %v5602
      %v5606 = vsel %vm3366, %v5591, 0
      %5608 = vmatprep.subr.mxu0 0.0
      %5609 = vmatpush1.msra.mxu0 %v5594
      %5610 = vmatprep.subr.mxu0 0.0
      %5611 = vmatpush1.msra.mxu0 %v5595
      %5612 = vmatprep.subr.mxu0 0.0
      %5613 = vmatpush1.msra.mxu0 %v5596
      %5614 = vmatprep.subr.mxu0 0.0
      %5615 = vmatpush1.msra.mxu0 %v5597
      %5616 = vmatprep.subr.mxu0 0.0
      %5617 = vmatpush1.msra.mxu0 0.0
      %5618 = vmatprep.subr.mxu0 0.0
      %5619 = vmatpush1.msra.mxu0 0.0
      %5620 = vmatprep.subr.mxu0 0.0
      %5621 = vmatpush1.msra.mxu0 0.0
      %5622 = vmatprep.subr.mxu0 0.0
      %5623 = vmatpush1.msra.mxu0 0.0
      %5624 = vmatprep.subr.mxu0 0.0
      %5625 = vmatpush1.msra.mxu0 0.0
      %5626 = vmatprep.subr.mxu0 0.0
      %5627 = vmatpush1.msra.mxu0 0.0
      %5628 = vmatprep.subr.mxu0 0.0
      %5629 = vmatpush1.msra.mxu0 0.0
      %5630 = vmatprep.subr.mxu0 0.0
      %5631 = vmatpush1.msra.mxu0 0.0
      %5632 = vmatprep.subr.mxu0 0.0
      %5633 = vmatpush1.msra.mxu0 0.0
      %5634 = vmatprep.subr.mxu0 0.0
      %5635 = vmatpush1.msra.mxu0 0.0
      %5636 = vmatprep.subr.mxu0 0.0
      %5637 = vmatpush1.msra.mxu0 0.0
      %5638 = vmatprep.subr.mxu0 0.0
      %5639 = vmatpush1.msra.mxu0 0.0
      %5640 = vmatprep.subr.mxu0 0.0
      %5641 = vmatpush1.msra.mxu0 0.0
      %5642 = vmatprep.subr.mxu0 0.0
      %5643 = vmatpush1.msra.mxu0 0.0
      %5644 = vmatprep.subr.mxu0 0.0
      %5645 = vmatpush1.msra.mxu0 0.0
      %5646 = vmatprep.subr.mxu0 0.0
      %5647 = vmatpush1.msra.mxu0 0.0
      %5648 = vmatprep.subr.mxu0 0.0
      %5649 = vmatpush1.msra.mxu0 0.0
      %5650 = vmatprep.subr.mxu0 0.0
      %5651 = vmatpush1.msra.mxu0 0.0
      %5652 = vmatprep.subr.mxu0 0.0
      %5653 = vmatpush1.msra.mxu0 0.0
      %5654 = vmatprep.subr.mxu0 0.0
      %5655 = vmatpush1.msra.mxu0 0.0
      %5656 = vmatprep.subr.mxu0 0.0
      %5657 = vmatpush1.msra.mxu0 0.0
      %5658 = vmatprep.subr.mxu0 0.0
      %5659 = vmatpush1.msra.mxu0 0.0
      %5660 = vmatprep.subr.mxu0 0.0
      %5661 = vmatpush1.msra.mxu0 0.0
      %5662 = vmatprep.subr.mxu0 0.0
      %5663 = vmatpush1.msra.mxu0 0.0
      %5664 = vmatprep.subr.mxu0 0.0
      %5665 = vmatpush1.msra.mxu0 0.0
      %5666 = vmatprep.subr.mxu0 0.0
      %5667 = vmatpush1.msra.mxu0 0.0
      %5668 = vmatprep.subr.mxu0 0.0
      %5669 = vmatpush1.msra.mxu0 0.0
      %5670 = vmatprep.subr.mxu0 0.0
      %5671 = vmatpush1.msra.mxu0 0.0
      %5672 = vmatprep.mubr.f32.mxu0 0.0
      %5673 = vmatmul.mubr.f32.gmra.mrb[0].mxu0 %v5606
      %v5674 = vpop.f32.mrb[0].mxu0
      %v5675 = vadd.f32 %v5603, %v5674
      %v5676 = vpop.f32.mrb[0].mxu0
      %5677 = vdwg.mxu0
      %vm5678 = vcmp.gt.f32.partialorder %v5675, 0.0
      %v5679 = vmul.f32 %v5675, 0.01
      %v5680 = vsel %vm5678, %v5675, %v5679
      %v5681 = vld [vmem:[%s19] sm:$0xff]
      %v5682 = vld [vmem:[%s19 + $0x8] sm:$0xff]
      %v5683 = vld [vmem:[%s19 + $0x10] sm:$0xff]
      %v5684 = vld [vmem:[%s19 + $0x18] sm:$0xff]
      %v5685 = vld [vmem:[%s20] sm:$0x1]
      %v5687 = vlaneseq
      %v5688 = vshrl.u32 %v5687, 7
      %v5689 = vsub.s32 0, %v5688
      %v5690 = vrot.slane %v5685, %v5689
      %v5693 = vsel %vm3366, %v5680, 0
      %5695 = vmatprep.subr.mxu0 0.0
      %5696 = vmatpush1.msra.mxu0 %v5681
      %5697 = vmatprep.subr.mxu0 0.0
      %5698 = vmatpush1.msra.mxu0 %v5682
      %5699 = vmatprep.subr.mxu0 0.0
      %5700 = vmatpush1.msra.mxu0 %v5683
      %5701 = vmatprep.subr.mxu0 0.0
      %5702 = vmatpush1.msra.mxu0 %v5684
      %5703 = vmatprep.subr.mxu0 0.0
      %5704 = vmatpush1.msra.mxu0 0.0
      %5705 = vmatprep.subr.mxu0 0.0
      %5706 = vmatpush1.msra.mxu0 0.0
      %5707 = vmatprep.subr.mxu0 0.0
      %5708 = vmatpush1.msra.mxu0 0.0
      %5709 = vmatprep.subr.mxu0 0.0
      %5710 = vmatpush1.msra.mxu0 0.0
      %5711 = vmatprep.subr.mxu0 0.0
      %5712 = vmatpush1.msra.mxu0 0.0
      %5713 = vmatprep.subr.mxu0 0.0
      %5714 = vmatpush1.msra.mxu0 0.0
      %5715 = vmatprep.subr.mxu0 0.0
      %5716 = vmatpush1.msra.mxu0 0.0
      %5717 = vmatprep.subr.mxu0 0.0
      %5718 = vmatpush1.msra.mxu0 0.0
      %5719 = vmatprep.subr.mxu0 0.0
      %5720 = vmatpush1.msra.mxu0 0.0
      %5721 = vmatprep.subr.mxu0 0.0
      %5722 = vmatpush1.msra.mxu0 0.0
      %5723 = vmatprep.subr.mxu0 0.0
      %5724 = vmatpush1.msra.mxu0 0.0
      %5725 = vmatprep.subr.mxu0 0.0
      %5726 = vmatpush1.msra.mxu0 0.0
      %5727 = vmatprep.subr.mxu0 0.0
      %5728 = vmatpush1.msra.mxu0 0.0
      %5729 = vmatprep.subr.mxu0 0.0
      %5730 = vmatpush1.msra.mxu0 0.0
      %5731 = vmatprep.subr.mxu0 0.0
      %5732 = vmatpush1.msra.mxu0 0.0
      %5733 = vmatprep.subr.mxu0 0.0
      %5734 = vmatpush1.msra.mxu0 0.0
      %5735 = vmatprep.subr.mxu0 0.0
      %5736 = vmatpush1.msra.mxu0 0.0
      %5737 = vmatprep.subr.mxu0 0.0
      %5738 = vmatpush1.msra.mxu0 0.0
      %5739 = vmatprep.subr.mxu0 0.0
      %5740 = vmatpush1.msra.mxu0 0.0
      %5741 = vmatprep.subr.mxu0 0.0
      %5742 = vmatpush1.msra.mxu0 0.0
      %5743 = vmatprep.subr.mxu0 0.0
      %5744 = vmatpush1.msra.mxu0 0.0
      %5745 = vmatprep.subr.mxu0 0.0
      %5746 = vmatpush1.msra.mxu0 0.0
      %5747 = vmatprep.subr.mxu0 0.0
      %5748 = vmatpush1.msra.mxu0 0.0
      %5749 = vmatprep.subr.mxu0 0.0
      %5750 = vmatpush1.msra.mxu0 0.0
      %5751 = vmatprep.subr.mxu0 0.0
      %5752 = vmatpush1.msra.mxu0 0.0
      %5753 = vmatprep.subr.mxu0 0.0
      %5754 = vmatpush1.msra.mxu0 0.0
      %5755 = vmatprep.subr.mxu0 0.0
      %5756 = vmatpush1.msra.mxu0 0.0
      %5757 = vmatprep.subr.mxu0 0.0
      %5758 = vmatpush1.msra.mxu0 0.0
      %5759 = vmatprep.mubr.f32.mxu0 0.0
      %5760 = vmatmul.mubr.f32.gmra.mrb[0].mxu0 %v5693
      %v5761 = vpop.f32.mrb[0].mxu0
      %v5762 = vadd.f32 %v5690, %v5761
      %v5763 = vpop.f32.mrb[0].mxu0
      %5764 = vdwg.mxu0
      %vm5765 = vcmask 39936
      %v5766 = vsel %vm5765, %v5762, -inf
      %5767 = vmax.xlane.f32.xlu0 %v5766
      %v5768 = vpop.xlane.xlu0 %5767
      %v5769 = vsub.f32 %v5762, %v5768
      %v5770 = vmul.f32 %v5769, 1.442695
      %v5771 = vpow.pop %v5770
      %v5772 = vsel %vm5765, %v5771, 0.0
      %5773 = vadd.xlane.f32.xlu0 %v5772
      %v5774 = vpop.xlane.xlu0 %5773
      %v5775 = vlog2.pop %v5774
      %v5776 = vmul.f32 %v5775, 0.6931472
      %v5777 = vsub.f32 %v5769, %v5776
      %5778 = vst.msk [vmem:[%s722] sm:$0xff] %vm5765, %v5777
      %p5779 = scmp.lt.s32.totalorder %s32, 1
      %s5780 = scalar_select %p5779, %s32, 1
      %s5781 = smul.addr %s5780, 8
      %s5782 = scalar_lea.vmem %s21, %s5781
      // Predicated region
      $region105: #{tpu_custom_call.1} parent=103 // pred_check
        %p5783 = pneg %p511
      $region106: #{tpu_custom_call.1} parent=103 // pred_check_branch
        %5785 = sbr.rel (%p5783) target = $region108
      $region107: #{tpu_custom_call.1} parent=103 // pred_region
        _
      $region108: #{tpu_custom_call.1} parent=103 // pred_fallthru
        _
    $region104: #{tpu_custom_call.1} parent=5 // pred_fallthru
      _
    %p5786 = scmp.le.s32.totalorder 2, %s27
    // Predicated region
    $region109: #{tpu_custom_call.1} parent=5 // pred_check
      %p5787 = pneg %p5786
    $region110: #{tpu_custom_call.1} parent=5 // pred_check_branch
      %5789 = sbr.rel (%p5787) target = $region112
    $region111: #{tpu_custom_call.1} parent=5 // pred_region
      %s5790 = ssub.s32 %s27, 2
      // Predicated region
      $region113: #{tpu_custom_call.1} parent=111 // pred_check
        %p5791 = pneg %p517
      $region114: #{tpu_custom_call.1} parent=111 // pred_check_branch
        %5793 = sbr.rel (%p5791) target = $region116
      $region115: #{tpu_custom_call.1} parent=111 // pred_region
        %p5794 = scmp.lt.s32.totalorder %s33, 1
        %s5795 = scalar_select %p5794, %s33, 1
        %s5796 = smul.addr %s5795, 8
        %s5797 = scalar_lea.vmem %s21, %s5796
      $region116: #{tpu_custom_call.1} parent=111 // pred_fallthru
        _
    $region112: #{tpu_custom_call.1} parent=5 // pred_fallthru
      _
  $region6: #{tpu_custom_call.1} parent=0 // loop_footer
    %s31 = sadd.s32 1, %s27
  $region7: #{tpu_custom_call.1} parent=0 // loop_footer_branch
    %26 = sbr.rel target = $region3
  $region8: #{tpu_custom_call.1} parent=0 // loop_exit
    _

</llo_original>
